<compile_context>
chip_gen: v7x
topology: tpu7x:2x2x1
jax: 0.10.0
libtpu: 0.0.40
codegen_flags: <defaults>
</compile_context>

<pallas_src>
import functools

import jax
import jax.numpy as jnp
from jax import lax
from jax.experimental import pallas as pl
from jax.experimental.pallas import tpu as pltpu

GN_GROUPS = 32
EPS = 1e-5


def _group_norm(v, a, a_t, gamma, beta, inv_cnt):
    """GroupNorm over one sample's (HW, C) slab, applied as a fused scale/shift.

    a   : (C, G) one-hot channel->group indicator (f32)
    a_t : (G, C) its transpose
    gamma/beta : (1, C)
    inv_cnt : 1 / (group_size * HW)
    """
    # NOTE: single-pass E[x^2]-E[x]^2 variance; fine at f32 for these magnitudes.
    stats = jnp.concatenate(
        [jnp.sum(v, axis=0, keepdims=True),
         jnp.sum(v * v, axis=0, keepdims=True)], axis=0)                  # (2, C)
    g = jnp.dot(stats, a, preferred_element_type=jnp.float32) * inv_cnt   # (2, G)
    g_mean = g[0:1, :]
    g_var = g[1:2, :] - g_mean * g_mean
    g_inv = lax.rsqrt(g_var + EPS)                                        # (1, G)
    cstat = jnp.dot(jnp.concatenate([g_mean, g_inv], axis=0), a_t,
                    preferred_element_type=jnp.float32)                   # (2, C)
    scale = cstat[1:2, :] * gamma                                         # (1, C)
    shift = beta - cstat[0:1, :] * scale                                  # (1, C)
    return v * scale + shift


def bottleneck_kernel(x_ref, xr_ref,
                      g1_ref, bt1_ref, w1_ref, b1_ref,
                      g2_ref, bt2_ref, w2_ref, b2_ref,
                      g3_ref, bt3_ref, w3_ref, b3_ref,
                      ain_ref, aint_ref, apl_ref, aplt_ref,
                      out_ref,
                      pad_ref,
                      *, width, halo):
    hw = x_ref.shape[1]
    cin = x_ref.shape[2]
    planes = w1_ref.shape[1]
    W = width
    off = halo                      # >= W, multiple of 8 -> aligned window slices
    G = GN_GROUPS
    bf16 = jnp.bfloat16

    # ---- bn1 -> relu -> conv1 (1x1) ----
    h = _group_norm(x_ref[0], ain_ref[...], aint_ref[...],
                    g1_ref[...], bt1_ref[...], 1.0 / ((cin // G) * hw))
    h = jnp.maximum(h, 0.0)
    h = jnp.dot(h.astype(bf16), w1_ref[...],
                preferred_element_type=jnp.float32) + b1_ref[...]

    # ---- bn2 -> relu ----
    h = _group_norm(h, apl_ref[...], aplt_ref[...],
                    g2_ref[...], bt2_ref[...], 1.0 / ((planes // G) * hw))
    h = jnp.maximum(h, 0.0)

    # ---- conv2 (3x3, stride 1, pad 1) ----
    # Lane-concat the three dx-shifted copies into one zero-haloed bf16 scratch:
    # lane block 0 = dx=-1 (kw=0), block 1 = dx=0 (kw=1), block 2 = dx=+1 (kw=2).
    # Each kh then needs a single K=3*planes dot over an aligned sublane window.
    pdt = pad_ref.dtype
    zh = jnp.zeros((off, 3 * planes), pdt)
    pad_ref[0:off, :] = zh                                   # top vertical halo
    pad_ref[off + hw:off + hw + off, :] = zh                 # bottom vertical halo

    col = lax.broadcasted_iota(jnp.int32, (hw, 1), 0) % W
    zrow = jnp.zeros((1, planes), jnp.float32)
    # build / cast / store one slab at a time (short live ranges)
    # dx = 0 (kw = 1)
    pad_ref[off:off + hw, planes:2 * planes] = h.astype(pdt)
    # dx = -1 (kw = 0): row r holds pixel r-1, zeroed where that wraps a row boundary
    pad_ref[off:off + hw, 0:planes] = jnp.concatenate(
        [zrow, jnp.where(col == W - 1, 0.0, h)[:hw - 1]], axis=0).astype(pdt)
    # dx = +1 (kw = 2): row r holds pixel r+1
    pad_ref[off:off + hw, 2 * planes:3 * planes] = jnp.concatenate(
        [jnp.where(col == 0, 0.0, h)[1:], zrow], axis=0).astype(pdt)

    acc = None
    for kh in range(3):
        row0 = off + (kh - 1) * W                # sublane aligned when W % 8 == 0
        win = pad_ref[row0:row0 + hw, :]         # (HW, 3*planes) bf16, aligned slice
        d = jnp.dot(win, w2_ref[kh], preferred_element_type=jnp.float32)
        acc = d if acc is None else acc + d
    h = acc + b2_ref[...]

    # ---- bn3 -> relu -> conv3 (1x1, computed transposed) + residual ----
    h = _group_norm(h, apl_ref[...], aplt_ref[...],
                    g3_ref[...], bt3_ref[...], 1.0 / ((planes // G) * hw))
    h = jnp.maximum(h, 0.0)
    # Transpose only the small (HW, planes) activation; the dot then emits a
    # lane-dense (cout, HW) result and the residual comes straight from the
    # (Cin, HW) view of x (no epilogue transpose).
    h_t = jnp.transpose(h).astype(bf16)                                   # (planes, HW)
    out = jnp.dot(w3_ref[...], h_t, preferred_element_type=jnp.float32)   # (cout, HW)
    out_ref[0] = out + b3_ref[...] + xr_ref[0]


def bottleneck_pallas(x_nchw, p):
    N, Cin, H, W = x_nchw.shape
    planes = p['w1'].shape[0]
    cout = p['w3'].shape[0]
    assert cout == Cin, "residual add (downsample=None) needs inplanes == 2*planes"
    assert Cin % GN_GROUPS == 0 and planes % GN_GROUPS == 0, "GroupNorm(32, C) needs C % 32 == 0"
    HW = H * W
    G = GN_GROUPS
    halo = max(8, ((W + 7) // 8) * 8)   # vertical halo rows, sublane aligned

    xf = x_nchw.astype(jnp.float32)
    # (N, HW, Cin) for the GN1/conv1 path (channels on lanes)
    x = jnp.transpose(xf, (0, 2, 3, 1)).reshape(N, HW, Cin)
    # (N, Cin, HW) residual view: a FREE reshape of NCHW, no XLA transpose
    x_chw = xf.reshape(N, Cin, HW)

    # channel -> group one-hot indicator matrices (f32, stats stay f32)
    a_in = (jnp.arange(Cin)[:, None] // (Cin // G) == jnp.arange(G)[None, :]).astype(jnp.float32)
    a_pl = (jnp.arange(planes)[:, None] // (planes // G) == jnp.arange(G)[None, :]).astype(jnp.float32)

    # weights pre-cast to bf16 (MXU operands); biases / GN affine stay f32
    w1 = p['w1'][:, :, 0, 0].T.astype(jnp.bfloat16)                      # (Cin, planes)
    # 3x3 weights: (out,in,kh,kw) -> (kh, kw, in, out) -> (3, 3*planes, planes)
    # so the kw taps are stacked along K to match the lane-concat activation slab.
    w2 = jnp.transpose(p['w2'], (2, 3, 1, 0)).reshape(3, 3 * planes, planes).astype(jnp.bfloat16)
    w3 = p['w3'][:, :, 0, 0].astype(jnp.bfloat16)                        # (cout, planes), NOT transposed
    row = lambda v: v.reshape(1, -1).astype(jnp.float32)

    inputs = (x, x_chw,
              row(p['g1']), row(p['bt1']), w1, row(p['b1']),
              row(p['g2']), row(p['bt2']), w2, row(p['b2']),
              row(p['g3']), row(p['bt3']), w3,
              p['b3'].reshape(-1, 1).astype(jnp.float32),                # (cout, 1)
              a_in, a_in.T, a_pl, a_pl.T)

    def _const_spec(arr):
        nd = arr.ndim
        return pl.BlockSpec(arr.shape, lambda n, _nd=nd: (0,) * _nd)

    in_specs = [pl.BlockSpec((1, HW, Cin), lambda n: (n, 0, 0)),
                pl.BlockSpec((1, Cin, HW), lambda n: (n, 0, 0))] + \
               [_const_spec(a) for a in inputs[2:]]
    # lane-dense output: (Cout, HW) per sample (last dim >= 128) == NCHW after reshape
    out_spec = pl.BlockSpec((1, cout, HW), lambda n: (n, 0, 0))

    out = pl.pallas_call(
        functools.partial(bottleneck_kernel, width=W, halo=halo),
        out_shape=jax.ShapeDtypeStruct((N, cout, HW), jnp.float32),
        grid_spec=pltpu.PrefetchScalarGridSpec(
            num_scalar_prefetch=0,
            grid=(N,),
            in_specs=in_specs,
            out_specs=out_spec,
            scratch_shapes=[pltpu.VMEM((HW + 2 * halo, 3 * planes), jnp.bfloat16)]),
        compiler_params=pltpu.CompilerParams(
            dimension_semantics=("parallel",),          # >=2 samples -> both TCs busy
            vmem_limit_bytes=32 * 1024 * 1024),
    )(*inputs)

    return out.reshape(N, cout, H, W)


def bottleneck_ref(x, p):
    """Pure-JAX NCHW reference mirroring the PyTorch module."""
    def gn(v, gamma, beta):
        N, C, H, W = v.shape
        vr = v.reshape(N, GN_GROUPS, -1)
        m = vr.mean(axis=-1, keepdims=True)
        var = ((vr - m) ** 2).mean(axis=-1, keepdims=True)
        vr = (vr - m) / jnp.sqrt(var + EPS)
        return vr.reshape(N, C, H, W) * gamma[None, :, None, None] + beta[None, :, None, None]

    def conv(v, w, b, pad):
        o = lax.conv_general_dilated(v, w, (1, 1), [(pad, pad), (pad, pad)],
                                     dimension_numbers=('NCHW', 'OIHW', 'NCHW'))
        return o + b[None, :, None, None]

    out = conv(jax.nn.relu(gn(x, p['g1'], p['bt1'])), p['w1'], p['b1'], 0)
    out = conv(jax.nn.relu(gn(out, p['g2'], p['bt2'])), p['w2'], p['b2'], 1)
    out = conv(jax.nn.relu(gn(out, p['g3'], p['bt3'])), p['w3'], p['b3'], 0)
    return out + x


def make_params(key, inplanes, planes):
    ks = jax.random.split(key, 12)
    rnd = lambda k, s, sc: jax.random.normal(k, s, jnp.float32) * sc
    return {
        'g1': 1.0 + 0.1 * rnd(ks[0], (inplanes,), 1.0),
        'bt1': 0.1 * rnd(ks[1], (inplanes,), 1.0),
        'w1': rnd(ks[2], (planes, inplanes, 1, 1), (1.0 / inplanes) ** 0.5),
        'b1': 0.1 * rnd(ks[3], (planes,), 1.0),
        'g2': 1.0 + 0.1 * rnd(ks[4], (planes,), 1.0),
        'bt2': 0.1 * rnd(ks[5], (planes,), 1.0),
        'w2': rnd(ks[6], (planes, planes, 3, 3), (1.0 / (9 * planes)) ** 0.5),
        'b2': 0.1 * rnd(ks[7], (planes,), 1.0),
        'g3': 1.0 + 0.1 * rnd(ks[8], (planes,), 1.0),
        'bt3': 0.1 * rnd(ks[9], (planes,), 1.0),
        'w3': rnd(ks[10], (2 * planes, planes, 1, 1), (1.0 / planes) ** 0.5),
        'b3': 0.1 * rnd(ks[11], (2 * planes,), 1.0),
    }


if __name__ == "__main__":
    key = jax.random.PRNGKey(0)
    kx, kp = jax.random.split(key)

    # GroupNorm(32, C) requires C % 32 == 0; residual needs inplanes == 2*planes.
    N, inplanes, planes, H, W = 2, 64, 32, 16, 16
    x = jax.random.normal(kx, (N, inplanes, H, W), jnp.float32)
    params = make_params(kp, inplanes, planes)

    out = jax.block_until_ready(jax.jit(bottleneck_pallas)(x, params))
    ref = jax.block_until_ready(bottleneck_ref(x, params))

    assert out.shape == (N, 2 * planes, H, W)
    max_err = float(jnp.max(jnp.abs(out - ref)))
    # bf16 MXU operands -> slightly looser than pure-f32, well within 5e-2.
    if max_err < 5e-2:
        print("KERNEL_OK")
    else:
        print(f"MAX_ABS_ERR={max_err}")
</pallas_src>

<mosaic_0001>
module attributes {stable_mosaic.version = 11 : i64} {
  func.func @bottleneck_kernel(%arg0: i32, %arg1: memref<1x256x64xf32, #tpu.memory_space<vmem>>, %arg2: memref<1x64x256xf32, #tpu.memory_space<vmem>>, %arg3: memref<1x64xf32, #tpu.memory_space<vmem>>, %arg4: memref<1x64xf32, #tpu.memory_space<vmem>>, %arg5: memref<64x32xbf16, #tpu.memory_space<vmem>>, %arg6: memref<1x32xf32, #tpu.memory_space<vmem>>, %arg7: memref<1x32xf32, #tpu.memory_space<vmem>>, %arg8: memref<1x32xf32, #tpu.memory_space<vmem>>, %arg9: memref<3x96x32xbf16, #tpu.memory_space<vmem>>, %arg10: memref<1x32xf32, #tpu.memory_space<vmem>>, %arg11: memref<1x32xf32, #tpu.memory_space<vmem>>, %arg12: memref<1x32xf32, #tpu.memory_space<vmem>>, %arg13: memref<64x32xbf16, #tpu.memory_space<vmem>>, %arg14: memref<64x1xf32, #tpu.memory_space<vmem>>, %arg15: memref<64x32xf32, #tpu.memory_space<vmem>>, %arg16: memref<32x64xf32, #tpu.memory_space<vmem>>, %arg17: memref<32x32xf32, #tpu.memory_space<vmem>>, %arg18: memref<32x32xf32, #tpu.memory_space<vmem>>, %arg19: memref<1x64x256xf32, #tpu.memory_space<vmem>>, %arg20: memref<288x96xbf16, #tpu.memory_space<vmem>>) attributes {dimension_semantics = [#tpu.dimension_semantics<parallel>], iteration_bounds = array<i64: 2>, scalar_prefetch = 0 : i64, scratch_operands = 1 : i64, tpu.core_type = #tpu.core_type<tc>, window_params = [{transform_indices = @transform_0, window_bounds = array<i64: 1, 256, 64>}, {transform_indices = @transform_1, window_bounds = array<i64: 1, 64, 256>}, {pipeline_mode = #tpu.pipeline_mode<synchronous>, transform_indices = @transform_2, window_bounds = array<i64: 1, 64>}, {pipeline_mode = #tpu.pipeline_mode<synchronous>, transform_indices = @transform_3, window_bounds = array<i64: 1, 64>}, {pipeline_mode = #tpu.pipeline_mode<synchronous>, transform_indices = @transform_4, window_bounds = array<i64: 64, 32>}, {pipeline_mode = #tpu.pipeline_mode<synchronous>, transform_indices = @transform_5, window_bounds = array<i64: 1, 32>}, {pipeline_mode = #tpu.pipeline_mode<synchronous>, transform_indices = @transform_6, window_bounds = array<i64: 1, 32>}, {pipeline_mode = #tpu.pipeline_mode<synchronous>, transform_indices = @transform_7, window_bounds = array<i64: 1, 32>}, {pipeline_mode = #tpu.pipeline_mode<synchronous>, transform_indices = @transform_8, window_bounds = array<i64: 3, 96, 32>}, {pipeline_mode = #tpu.pipeline_mode<synchronous>, transform_indices = @transform_9, window_bounds = array<i64: 1, 32>}, {pipeline_mode = #tpu.pipeline_mode<synchronous>, transform_indices = @transform_10, window_bounds = array<i64: 1, 32>}, {pipeline_mode = #tpu.pipeline_mode<synchronous>, transform_indices = @transform_11, window_bounds = array<i64: 1, 32>}, {pipeline_mode = #tpu.pipeline_mode<synchronous>, transform_indices = @transform_12, window_bounds = array<i64: 64, 32>}, {pipeline_mode = #tpu.pipeline_mode<synchronous>, transform_indices = @transform_13, window_bounds = array<i64: 64, 1>}, {pipeline_mode = #tpu.pipeline_mode<synchronous>, transform_indices = @transform_14, window_bounds = array<i64: 64, 32>}, {pipeline_mode = #tpu.pipeline_mode<synchronous>, transform_indices = @transform_15, window_bounds = array<i64: 32, 64>}, {pipeline_mode = #tpu.pipeline_mode<synchronous>, transform_indices = @transform_16, window_bounds = array<i64: 32, 32>}, {pipeline_mode = #tpu.pipeline_mode<synchronous>, transform_indices = @transform_17, window_bounds = array<i64: 32, 32>}, {transform_indices = @transform_18, window_bounds = array<i64: 1, 64, 256>}]} {
    %c0 = arith.constant 0 : index
    %c0_0 = arith.constant 0 : index
    %c0_1 = arith.constant 0 : index
    %0 = vector.load %arg1[%c0, %c0_0, %c0_1] : memref<1x256x64xf32, #tpu.memory_space<vmem>>, vector<1x256x64xf32>
    %1 = vector.shape_cast %0 : vector<1x256x64xf32> to vector<256x64xf32>
    %c0_2 = arith.constant 0 : index
    %c0_3 = arith.constant 0 : index
    %2 = vector.load %arg15[%c0_2, %c0_3] : memref<64x32xf32, #tpu.memory_space<vmem>>, vector<64x32xf32>
    %c0_4 = arith.constant 0 : index
    %c0_5 = arith.constant 0 : index
    %3 = vector.load %arg16[%c0_4, %c0_5] : memref<32x64xf32, #tpu.memory_space<vmem>>, vector<32x64xf32>
    %c0_6 = arith.constant 0 : index
    %c0_7 = arith.constant 0 : index
    %4 = vector.load %arg3[%c0_6, %c0_7] : memref<1x64xf32, #tpu.memory_space<vmem>>, vector<1x64xf32>
    %c0_8 = arith.constant 0 : index
    %c0_9 = arith.constant 0 : index
    %5 = vector.load %arg4[%c0_8, %c0_9] : memref<1x64xf32, #tpu.memory_space<vmem>>, vector<1x64xf32>
    %cst = arith.constant dense<0.000000e+00> : vector<64xf32>
    %6 = vector.multi_reduction <add>, %1, %cst [0] : vector<256x64xf32> to vector<64xf32>
    %7 = vector.shape_cast %6 : vector<64xf32> to vector<1x64xf32>
    %8 = arith.mulf %1, %1 : vector<256x64xf32>
    %cst_10 = arith.constant dense<0.000000e+00> : vector<64xf32>
    %9 = vector.multi_reduction <add>, %8, %cst_10 [0] : vector<256x64xf32> to vector<64xf32>
    %10 = vector.shape_cast %9 : vector<64xf32> to vector<1x64xf32>
    %11 = tpu.concatenate %7, %10 in 0 : vector<1x64xf32>, vector<1x64xf32> -> vector<2x64xf32>
    %cst_11 = arith.constant dense<0.000000e+00> : vector<2x32xf32>
    %12 = tpu.matmul %11, %2, %cst_11 {dimension_numbers = #tpu.dot_dimension_numbers<[1], [0], [0], [1], [0, 0, 1, 1], [], []>} : vector<2x64xf32>, vector<64x32xf32>, vector<2x32xf32> -> vector<2x32xf32>
    %cst_12 = arith.constant 0.001953125 : f32
    %13 = vector.broadcast %cst_12 : f32 to vector<2x32xf32>
    %14 = arith.mulf %12, %13 : vector<2x32xf32>
    %15 = vector.extract_strided_slice %14 {offsets = [0, 0], sizes = [1, 32], strides = [1, 1]} : vector<2x32xf32> to vector<1x32xf32>
    %16 = vector.extract_strided_slice %14 {offsets = [1, 0], sizes = [1, 32], strides = [1, 1]} : vector<2x32xf32> to vector<1x32xf32>
    %17 = arith.mulf %15, %15 : vector<1x32xf32>
    %18 = arith.subf %16, %17 : vector<1x32xf32>
    %cst_13 = arith.constant 9.99999974E-6 : f32
    %19 = vector.broadcast %cst_13 : f32 to vector<1x32xf32>
    %20 = arith.addf %18, %19 : vector<1x32xf32>
    %21 = math.rsqrt %20 : vector<1x32xf32>
    %22 = tpu.concatenate %15, %21 in 0 : vector<1x32xf32>, vector<1x32xf32> -> vector<2x32xf32>
    %cst_14 = arith.constant dense<0.000000e+00> : vector<2x64xf32>
    %23 = tpu.matmul %22, %3, %cst_14 {dimension_numbers = #tpu.dot_dimension_numbers<[1], [0], [0], [1], [0, 0, 1, 1], [], []>} : vector<2x32xf32>, vector<32x64xf32>, vector<2x64xf32> -> vector<2x64xf32>
    %24 = vector.extract_strided_slice %23 {offsets = [1, 0], sizes = [1, 64], strides = [1, 1]} : vector<2x64xf32> to vector<1x64xf32>
    %25 = arith.mulf %24, %4 : vector<1x64xf32>
    %26 = vector.extract_strided_slice %23 {offsets = [0, 0], sizes = [1, 64], strides = [1, 1]} : vector<2x64xf32> to vector<1x64xf32>
    %27 = arith.mulf %26, %25 : vector<1x64xf32>
    %28 = arith.subf %5, %27 : vector<1x64xf32>
    %29 = vector.broadcast %25 : vector<1x64xf32> to vector<256x64xf32>
    %30 = arith.mulf %1, %29 : vector<256x64xf32>
    %31 = vector.broadcast %28 : vector<1x64xf32> to vector<256x64xf32>
    %32 = arith.addf %30, %31 : vector<256x64xf32>
    %cst_15 = arith.constant 0.000000e+00 : f32
    %33 = vector.broadcast %cst_15 : f32 to vector<256x64xf32>
    %34 = arith.maximumf %32, %33 : vector<256x64xf32>
    %35 = arith.truncf %34 : vector<256x64xf32> to vector<256x64xbf16>
    %c0_16 = arith.constant 0 : index
    %c0_17 = arith.constant 0 : index
    %36 = vector.load %arg5[%c0_16, %c0_17] : memref<64x32xbf16, #tpu.memory_space<vmem>>, vector<64x32xbf16>
    %cst_18 = arith.constant dense<0.000000e+00> : vector<256x32xf32>
    %37 = tpu.matmul %35, %36, %cst_18 {dimension_numbers = #tpu.dot_dimension_numbers<[1], [0], [0], [1], [0, 0, 1, 1], [], []>} : vector<256x64xbf16>, vector<64x32xbf16>, vector<256x32xf32> -> vector<256x32xf32>
    %c0_19 = arith.constant 0 : index
    %c0_20 = arith.constant 0 : index
    %38 = vector.load %arg6[%c0_19, %c0_20] : memref<1x32xf32, #tpu.memory_space<vmem>>, vector<1x32xf32>
    %39 = vector.broadcast %38 : vector<1x32xf32> to vector<256x32xf32>
    %40 = arith.addf %37, %39 : vector<256x32xf32>
    %c0_21 = arith.constant 0 : index
    %c0_22 = arith.constant 0 : index
    %41 = vector.load %arg17[%c0_21, %c0_22] : memref<32x32xf32, #tpu.memory_space<vmem>>, vector<32x32xf32>
    %c0_23 = arith.constant 0 : index
    %c0_24 = arith.constant 0 : index
    %42 = vector.load %arg18[%c0_23, %c0_24] : memref<32x32xf32, #tpu.memory_space<vmem>>, vector<32x32xf32>
    %c0_25 = arith.constant 0 : index
    %c0_26 = arith.constant 0 : index
    %43 = vector.load %arg7[%c0_25, %c0_26] : memref<1x32xf32, #tpu.memory_space<vmem>>, vector<1x32xf32>
    %c0_27 = arith.constant 0 : index
    %c0_28 = arith.constant 0 : index
    %44 = vector.load %arg8[%c0_27, %c0_28] : memref<1x32xf32, #tpu.memory_space<vmem>>, vector<1x32xf32>
    %cst_29 = arith.constant dense<0.000000e+00> : vector<32xf32>
    %45 = vector.multi_reduction <add>, %40, %cst_29 [0] : vector<256x32xf32> to vector<32xf32>
    %46 = vector.shape_cast %45 : vector<32xf32> to vector<1x32xf32>
    %47 = arith.mulf %40, %40 : vector<256x32xf32>
    %cst_30 = arith.constant dense<0.000000e+00> : vector<32xf32>
    %48 = vector.multi_reduction <add>, %47, %cst_30 [0] : vector<256x32xf32> to vector<32xf32>
    %49 = vector.shape_cast %48 : vector<32xf32> to vector<1x32xf32>
    %50 = tpu.concatenate %46, %49 in 0 : vector<1x32xf32>, vector<1x32xf32> -> vector<2x32xf32>
    %cst_31 = arith.constant dense<0.000000e+00> : vector<2x32xf32>
    %51 = tpu.matmul %50, %41, %cst_31 {dimension_numbers = #tpu.dot_dimension_numbers<[1], [0], [0], [1], [0, 0, 1, 1], [], []>} : vector<2x32xf32>, vector<32x32xf32>, vector<2x32xf32> -> vector<2x32xf32>
    %cst_32 = arith.constant 3.906250e-03 : f32
    %52 = vector.broadcast %cst_32 : f32 to vector<2x32xf32>
    %53 = arith.mulf %51, %52 : vector<2x32xf32>
    %54 = vector.extract_strided_slice %53 {offsets = [0, 0], sizes = [1, 32], strides = [1, 1]} : vector<2x32xf32> to vector<1x32xf32>
    %55 = vector.extract_strided_slice %53 {offsets = [1, 0], sizes = [1, 32], strides = [1, 1]} : vector<2x32xf32> to vector<1x32xf32>
    %56 = arith.mulf %54, %54 : vector<1x32xf32>
    %57 = arith.subf %55, %56 : vector<1x32xf32>
    %cst_33 = arith.constant 9.99999974E-6 : f32
    %58 = vector.broadcast %cst_33 : f32 to vector<1x32xf32>
    %59 = arith.addf %57, %58 : vector<1x32xf32>
    %60 = math.rsqrt %59 : vector<1x32xf32>
    %61 = tpu.concatenate %54, %60 in 0 : vector<1x32xf32>, vector<1x32xf32> -> vector<2x32xf32>
    %cst_34 = arith.constant dense<0.000000e+00> : vector<2x32xf32>
    %62 = tpu.matmul %61, %42, %cst_34 {dimension_numbers = #tpu.dot_dimension_numbers<[1], [0], [0], [1], [0, 0, 1, 1], [], []>} : vector<2x32xf32>, vector<32x32xf32>, vector<2x32xf32> -> vector<2x32xf32>
    %63 = vector.extract_strided_slice %62 {offsets = [1, 0], sizes = [1, 32], strides = [1, 1]} : vector<2x32xf32> to vector<1x32xf32>
    %64 = arith.mulf %63, %43 : vector<1x32xf32>
    %65 = vector.extract_strided_slice %62 {offsets = [0, 0], sizes = [1, 32], strides = [1, 1]} : vector<2x32xf32> to vector<1x32xf32>
    %66 = arith.mulf %65, %64 : vector<1x32xf32>
    %67 = arith.subf %44, %66 : vector<1x32xf32>
    %68 = vector.broadcast %64 : vector<1x32xf32> to vector<256x32xf32>
    %69 = arith.mulf %40, %68 : vector<256x32xf32>
    %70 = vector.broadcast %67 : vector<1x32xf32> to vector<256x32xf32>
    %71 = arith.addf %69, %70 : vector<256x32xf32>
    %cst_35 = arith.constant 0.000000e+00 : f32
    %72 = vector.broadcast %cst_35 : f32 to vector<256x32xf32>
    %73 = arith.maximumf %71, %72 : vector<256x32xf32>
    %cst_36 = arith.constant 0.000000e+00 : bf16
    %74 = vector.broadcast %cst_36 : bf16 to vector<16x96xbf16>
    %c0_37 = arith.constant 0 : index
    %c0_38 = arith.constant 0 : index
    %75 = vector.load %arg20[%c0_37, %c0_38] : memref<288x96xbf16, #tpu.memory_space<vmem>>, vector<16x96xbf16>
    tpu.vector_store %arg20[%c0_37, %c0_38], %74 {strides = array<i32>} : memref<288x96xbf16, #tpu.memory_space<vmem>>, vector<16x96xbf16>,
    %c272 = arith.constant 272 : index
    %c0_39 = arith.constant 0 : index
    %76 = vector.load %arg20[%c272, %c0_39] : memref<288x96xbf16, #tpu.memory_space<vmem>>, vector<16x96xbf16>
    tpu.vector_store %arg20[%c272, %c0_39], %74 {strides = array<i32>} : memref<288x96xbf16, #tpu.memory_space<vmem>>, vector<16x96xbf16>,
    %77 = tpu.iota {dimensions = array<i32: 0>} : vector<256x1xi32>
    %c16_i32 = arith.constant 16 : i32
    %c0_i32 = arith.constant 0 : i32
    %78 = arith.cmpi eq, %c16_i32, %c0_i32 : i32
    %c1_i32 = arith.constant 1 : i32
    %79 = arith.select %78, %c1_i32, %c16_i32 : i32
    %80 = vector.broadcast %79 : i32 to vector<256x1xi32>
    %81 = arith.remsi %77, %80 : vector<256x1xi32>
    %c0_i32_40 = arith.constant 0 : i32
    %82 = vector.broadcast %c0_i32_40 : i32 to vector<256x1xi32>
    %83 = arith.cmpi ne, %81, %82 : vector<256x1xi32>
    %c0_i32_41 = arith.constant 0 : i32
    %84 = vector.broadcast %c0_i32_41 : i32 to vector<256x1xi32>
    %85 = arith.cmpi slt, %81, %84 : vector<256x1xi32>
    %c0_i32_42 = arith.constant 0 : i32
    %86 = arith.cmpi slt, %79, %c0_i32_42 : i32
    %87 = vector.broadcast %86 : i1 to vector<256x1xi1>
    %88 = vector.broadcast %87 : vector<256x1xi1> to vector<256x1xi1>
    %89 = arith.xori %85, %88 : vector<256x1xi1>
    %90 = arith.andi %89, %83 : vector<256x1xi1>
    %91 = vector.broadcast %79 : i32 to vector<256x1xi32>
    %92 = arith.addi %81, %91 : vector<256x1xi32>
    %93 = arith.select %90, %92, %81 : vector<256x1xi1>, vector<256x1xi32>
    %cst_43 = arith.constant 0.000000e+00 : f32
    %94 = vector.broadcast %cst_43 : f32 to vector<1x32xf32>
    %95 = arith.truncf %73 : vector<256x32xf32> to vector<256x32xbf16>
    %c16 = arith.constant 16 : index
    %c32 = arith.constant 32 : index
    %96 = vector.load %arg20[%c16, %c32] : memref<288x96xbf16, #tpu.memory_space<vmem>>, vector<256x32xbf16>
    tpu.vector_store %arg20[%c16, %c32], %95 {strides = array<i32>} : memref<288x96xbf16, #tpu.memory_space<vmem>>, vector<256x32xbf16>,
    %c15_i32 = arith.constant 15 : i32
    %97 = vector.broadcast %c15_i32 : i32 to vector<256x1xi32>
    %98 = arith.cmpi eq, %93, %97 : vector<256x1xi32>
    %cst_44 = arith.constant 0.000000e+00 : f32
    %99 = vector.shape_cast %98 : vector<256x1xi1> to vector<256x1xi1>
    %100 = vector.broadcast %99 : vector<256x1xi1> to vector<256x32xi1>
    %101 = vector.broadcast %cst_44 : f32 to vector<256x32xf32>
    %102 = arith.select %100, %101, %73 : vector<256x32xi1>, vector<256x32xf32>
    %103 = vector.extract_strided_slice %102 {offsets = [0, 0], sizes = [255, 32], strides = [1, 1]} : vector<256x32xf32> to vector<255x32xf32>
    %104 = tpu.concatenate %94, %103 in 0 : vector<1x32xf32>, vector<255x32xf32> -> vector<256x32xf32>
    %105 = arith.truncf %104 : vector<256x32xf32> to vector<256x32xbf16>
    %c16_45 = arith.constant 16 : index
    %c0_46 = arith.constant 0 : index
    %106 = vector.load %arg20[%c16_45, %c0_46] : memref<288x96xbf16, #tpu.memory_space<vmem>>, vector<256x32xbf16>
    tpu.vector_store %arg20[%c16_45, %c0_46], %105 {strides = array<i32>} : memref<288x96xbf16, #tpu.memory_space<vmem>>, vector<256x32xbf16>,
    %c0_i32_47 = arith.constant 0 : i32
    %107 = vector.broadcast %c0_i32_47 : i32 to vector<256x1xi32>
    %108 = arith.cmpi eq, %93, %107 : vector<256x1xi32>
    %cst_48 = arith.constant 0.000000e+00 : f32
    %109 = vector.shape_cast %108 : vector<256x1xi1> to vector<256x1xi1>
    %110 = vector.broadcast %109 : vector<256x1xi1> to vector<256x32xi1>
    %111 = vector.broadcast %cst_48 : f32 to vector<256x32xf32>
    %112 = arith.select %110, %111, %73 : vector<256x32xi1>, vector<256x32xf32>
    %113 = vector.extract_strided_slice %112 {offsets = [1, 0], sizes = [255, 32], strides = [1, 1]} : vector<256x32xf32> to vector<255x32xf32>
    %114 = tpu.concatenate %113, %94 in 0 : vector<255x32xf32>, vector<1x32xf32> -> vector<256x32xf32>
    %115 = arith.truncf %114 : vector<256x32xf32> to vector<256x32xbf16>
    %c16_49 = arith.constant 16 : index
    %c64 = arith.constant 64 : index
    %116 = vector.load %arg20[%c16_49, %c64] : memref<288x96xbf16, #tpu.memory_space<vmem>>, vector<256x32xbf16>
    tpu.vector_store %arg20[%c16_49, %c64], %115 {strides = array<i32>} : memref<288x96xbf16, #tpu.memory_space<vmem>>, vector<256x32xbf16>,
    %c0_50 = arith.constant 0 : index
    %c0_51 = arith.constant 0 : index
    %117 = vector.load %arg20[%c0_50, %c0_51] : memref<288x96xbf16, #tpu.memory_space<vmem>>, vector<256x96xbf16>
    %c0_52 = arith.constant 0 : index
    %c0_53 = arith.constant 0 : index
    %c0_54 = arith.constant 0 : index
    %118 = vector.load %arg9[%c0_52, %c0_53, %c0_54] : memref<3x96x32xbf16, #tpu.memory_space<vmem>>, vector<1x96x32xbf16>
    %119 = vector.shape_cast %118 : vector<1x96x32xbf16> to vector<96x32xbf16>
    %cst_55 = arith.constant dense<0.000000e+00> : vector<256x32xf32>
    %120 = tpu.matmul %117, %119, %cst_55 {dimension_numbers = #tpu.dot_dimension_numbers<[1], [0], [0], [1], [0, 0, 1, 1], [], []>} : vector<256x96xbf16>, vector<96x32xbf16>, vector<256x32xf32> -> vector<256x32xf32>
    %c16_56 = arith.constant 16 : index
    %c0_57 = arith.constant 0 : index
    %121 = vector.load %arg20[%c16_56, %c0_57] : memref<288x96xbf16, #tpu.memory_space<vmem>>, vector<256x96xbf16>
    %c1 = arith.constant 1 : index
    %c0_58 = arith.constant 0 : index
    %c0_59 = arith.constant 0 : index
    %122 = vector.load %arg9[%c1, %c0_58, %c0_59] : memref<3x96x32xbf16, #tpu.memory_space<vmem>>, vector<1x96x32xbf16>
    %123 = vector.shape_cast %122 : vector<1x96x32xbf16> to vector<96x32xbf16>
    %cst_60 = arith.constant dense<0.000000e+00> : vector<256x32xf32>
    %124 = tpu.matmul %121, %123, %cst_60 {dimension_numbers = #tpu.dot_dimension_numbers<[1], [0], [0], [1], [0, 0, 1, 1], [], []>} : vector<256x96xbf16>, vector<96x32xbf16>, vector<256x32xf32> -> vector<256x32xf32>
    %125 = arith.addf %120, %124 : vector<256x32xf32>
    %c32_61 = arith.constant 32 : index
    %c0_62 = arith.constant 0 : index
    %126 = vector.load %arg20[%c32_61, %c0_62] : memref<288x96xbf16, #tpu.memory_space<vmem>>, vector<256x96xbf16>
    %c2 = arith.constant 2 : index
    %c0_63 = arith.constant 0 : index
    %c0_64 = arith.constant 0 : index
    %127 = vector.load %arg9[%c2, %c0_63, %c0_64] : memref<3x96x32xbf16, #tpu.memory_space<vmem>>, vector<1x96x32xbf16>
    %128 = vector.shape_cast %127 : vector<1x96x32xbf16> to vector<96x32xbf16>
    %cst_65 = arith.constant dense<0.000000e+00> : vector<256x32xf32>
    %129 = tpu.matmul %126, %128, %cst_65 {dimension_numbers = #tpu.dot_dimension_numbers<[1], [0], [0], [1], [0, 0, 1, 1], [], []>} : vector<256x96xbf16>, vector<96x32xbf16>, vector<256x32xf32> -> vector<256x32xf32>
    %130 = arith.addf %125, %129 : vector<256x32xf32>
    %c0_66 = arith.constant 0 : index
    %c0_67 = arith.constant 0 : index
    %131 = vector.load %arg10[%c0_66, %c0_67] : memref<1x32xf32, #tpu.memory_space<vmem>>, vector<1x32xf32>
    %132 = vector.broadcast %131 : vector<1x32xf32> to vector<256x32xf32>
    %133 = arith.addf %130, %132 : vector<256x32xf32>
    %c0_68 = arith.constant 0 : index
    %c0_69 = arith.constant 0 : index
    %134 = vector.load %arg17[%c0_68, %c0_69] : memref<32x32xf32, #tpu.memory_space<vmem>>, vector<32x32xf32>
    %c0_70 = arith.constant 0 : index
    %c0_71 = arith.constant 0 : index
    %135 = vector.load %arg18[%c0_70, %c0_71] : memref<32x32xf32, #tpu.memory_space<vmem>>, vector<32x32xf32>
    %c0_72 = arith.constant 0 : index
    %c0_73 = arith.constant 0 : index
    %136 = vector.load %arg11[%c0_72, %c0_73] : memref<1x32xf32, #tpu.memory_space<vmem>>, vector<1x32xf32>
    %c0_74 = arith.constant 0 : index
    %c0_75 = arith.constant 0 : index
    %137 = vector.load %arg12[%c0_74, %c0_75] : memref<1x32xf32, #tpu.memory_space<vmem>>, vector<1x32xf32>
    %cst_76 = arith.constant dense<0.000000e+00> : vector<32xf32>
    %138 = vector.multi_reduction <add>, %133, %cst_76 [0] : vector<256x32xf32> to vector<32xf32>
    %139 = vector.shape_cast %138 : vector<32xf32> to vector<1x32xf32>
    %140 = arith.mulf %133, %133 : vector<256x32xf32>
    %cst_77 = arith.constant dense<0.000000e+00> : vector<32xf32>
    %141 = vector.multi_reduction <add>, %140, %cst_77 [0] : vector<256x32xf32> to vector<32xf32>
    %142 = vector.shape_cast %141 : vector<32xf32> to vector<1x32xf32>
    %143 = tpu.concatenate %139, %142 in 0 : vector<1x32xf32>, vector<1x32xf32> -> vector<2x32xf32>
    %cst_78 = arith.constant dense<0.000000e+00> : vector<2x32xf32>
    %144 = tpu.matmul %143, %134, %cst_78 {dimension_numbers = #tpu.dot_dimension_numbers<[1], [0], [0], [1], [0, 0, 1, 1], [], []>} : vector<2x32xf32>, vector<32x32xf32>, vector<2x32xf32> -> vector<2x32xf32>
    %cst_79 = arith.constant 3.906250e-03 : f32
    %145 = vector.broadcast %cst_79 : f32 to vector<2x32xf32>
    %146 = arith.mulf %144, %145 : vector<2x32xf32>
    %147 = vector.extract_strided_slice %146 {offsets = [0, 0], sizes = [1, 32], strides = [1, 1]} : vector<2x32xf32> to vector<1x32xf32>
    %148 = vector.extract_strided_slice %146 {offsets = [1, 0], sizes = [1, 32], strides = [1, 1]} : vector<2x32xf32> to vector<1x32xf32>
    %149 = arith.mulf %147, %147 : vector<1x32xf32>
    %150 = arith.subf %148, %149 : vector<1x32xf32>
    %cst_80 = arith.constant 9.99999974E-6 : f32
    %151 = vector.broadcast %cst_80 : f32 to vector<1x32xf32>
    %152 = arith.addf %150, %151 : vector<1x32xf32>
    %153 = math.rsqrt %152 : vector<1x32xf32>
    %154 = tpu.concatenate %147, %153 in 0 : vector<1x32xf32>, vector<1x32xf32> -> vector<2x32xf32>
    %cst_81 = arith.constant dense<0.000000e+00> : vector<2x32xf32>
    %155 = tpu.matmul %154, %135, %cst_81 {dimension_numbers = #tpu.dot_dimension_numbers<[1], [0], [0], [1], [0, 0, 1, 1], [], []>} : vector<2x32xf32>, vector<32x32xf32>, vector<2x32xf32> -> vector<2x32xf32>
    %156 = vector.extract_strided_slice %155 {offsets = [1, 0], sizes = [1, 32], strides = [1, 1]} : vector<2x32xf32> to vector<1x32xf32>
    %157 = arith.mulf %156, %136 : vector<1x32xf32>
    %158 = vector.extract_strided_slice %155 {offsets = [0, 0], sizes = [1, 32], strides = [1, 1]} : vector<2x32xf32> to vector<1x32xf32>
    %159 = arith.mulf %158, %157 : vector<1x32xf32>
    %160 = arith.subf %137, %159 : vector<1x32xf32>
    %161 = vector.broadcast %157 : vector<1x32xf32> to vector<256x32xf32>
    %162 = arith.mulf %133, %161 : vector<256x32xf32>
    %163 = vector.broadcast %160 : vector<1x32xf32> to vector<256x32xf32>
    %164 = arith.addf %162, %163 : vector<256x32xf32>
    %cst_82 = arith.constant 0.000000e+00 : f32
    %165 = vector.broadcast %cst_82 : f32 to vector<256x32xf32>
    %166 = arith.maximumf %164, %165 : vector<256x32xf32>
    %167 = tpu.transpose %166, [1, 0] : vector<256x32xf32> -> vector<32x256xf32>
    %168 = arith.truncf %167 : vector<32x256xf32> to vector<32x256xbf16>
    %c0_83 = arith.constant 0 : index
    %c0_84 = arith.constant 0 : index
    %169 = vector.load %arg13[%c0_83, %c0_84] : memref<64x32xbf16, #tpu.memory_space<vmem>>, vector<64x32xbf16>
    %cst_85 = arith.constant dense<0.000000e+00> : vector<64x256xf32>
    %170 = tpu.matmul %169, %168, %cst_85 {dimension_numbers = #tpu.dot_dimension_numbers<[1], [0], [0], [1], [0, 0, 1, 1], [], []>} : vector<64x32xbf16>, vector<32x256xbf16>, vector<64x256xf32> -> vector<64x256xf32>
    %c0_86 = arith.constant 0 : index
    %c0_87 = arith.constant 0 : index
    %171 = vector.load %arg14[%c0_86, %c0_87] : memref<64x1xf32, #tpu.memory_space<vmem>>, vector<64x1xf32>
    %172 = vector.broadcast %171 : vector<64x1xf32> to vector<64x256xf32>
    %173 = arith.addf %170, %172 : vector<64x256xf32>
    %c0_88 = arith.constant 0 : index
    %c0_89 = arith.constant 0 : index
    %c0_90 = arith.constant 0 : index
    %174 = vector.load %arg2[%c0_88, %c0_89, %c0_90] : memref<1x64x256xf32, #tpu.memory_space<vmem>>, vector<1x64x256xf32>
    %175 = vector.shape_cast %174 : vector<1x64x256xf32> to vector<64x256xf32>
    %176 = arith.addf %173, %175 : vector<64x256xf32>
    %c0_91 = arith.constant 0 : index
    %c0_92 = arith.constant 0 : index
    %c0_93 = arith.constant 0 : index
    %177 = vector.load %arg19[%c0_91, %c0_92, %c0_93] : memref<1x64x256xf32, #tpu.memory_space<vmem>>, vector<1x64x256xf32>
    %178 = vector.shape_cast %177 : vector<1x64x256xf32> to vector<64x256xf32>
    %179 = vector.shape_cast %176 : vector<64x256xf32> to vector<1x64x256xf32>
    tpu.vector_store %arg19[%c0_91, %c0_92, %c0_93], %179 {strides = array<i32>} : memref<1x64x256xf32, #tpu.memory_space<vmem>>, vector<1x64x256xf32>,
    return
  }
  func.func @transform_0(%arg0: i32) -> (i32, i32, i32) {
    %c0_i32 = arith.constant 0 : i32
    %c0_i32_0 = arith.constant 0 : i32
    %c0_i32_1 = arith.constant 0 : i32
    return %arg0, %c0_i32, %c0_i32_0 : i32, i32, i32
  }
  func.func @transform_1(%arg0: i32) -> (i32, i32, i32) {
    %c0_i32 = arith.constant 0 : i32
    %c0_i32_0 = arith.constant 0 : i32
    %c0_i32_1 = arith.constant 0 : i32
    return %arg0, %c0_i32, %c0_i32_0 : i32, i32, i32
  }
  func.func @transform_2(%arg0: i32) -> (i32, i32) {
    %c0_i32 = arith.constant 0 : i32
    %c0_i32_0 = arith.constant 0 : i32
    %c0_i32_1 = arith.constant 0 : i32
    return %c0_i32, %c0_i32_0 : i32, i32
  }
  func.func @transform_3(%arg0: i32) -> (i32, i32) {
    %c0_i32 = arith.constant 0 : i32
    %c0_i32_0 = arith.constant 0 : i32
    %c0_i32_1 = arith.constant 0 : i32
    return %c0_i32, %c0_i32_0 : i32, i32
  }
  func.func @transform_4(%arg0: i32) -> (i32, i32) {
    %c0_i32 = arith.constant 0 : i32
    %c0_i32_0 = arith.constant 0 : i32
    %c0_i32_1 = arith.constant 0 : i32
    return %c0_i32, %c0_i32_0 : i32, i32
  }
  func.func @transform_5(%arg0: i32) -> (i32, i32) {
    %c0_i32 = arith.constant 0 : i32
    %c0_i32_0 = arith.constant 0 : i32
    %c0_i32_1 = arith.constant 0 : i32
    return %c0_i32, %c0_i32_0 : i32, i32
  }
  func.func @transform_6(%arg0: i32) -> (i32, i32) {
    %c0_i32 = arith.constant 0 : i32
    %c0_i32_0 = arith.constant 0 : i32
    %c0_i32_1 = arith.constant 0 : i32
    return %c0_i32, %c0_i32_0 : i32, i32
  }
  func.func @transform_7(%arg0: i32) -> (i32, i32) {
    %c0_i32 = arith.constant 0 : i32
    %c0_i32_0 = arith.constant 0 : i32
    %c0_i32_1 = arith.constant 0 : i32
    return %c0_i32, %c0_i32_0 : i32, i32
  }
  func.func @transform_8(%arg0: i32) -> (i32, i32, i32) {
    %c0_i32 = arith.constant 0 : i32
    %c0_i32_0 = arith.constant 0 : i32
    %c0_i32_1 = arith.constant 0 : i32
    %c0_i32_2 = arith.constant 0 : i32
    return %c0_i32, %c0_i32_0, %c0_i32_1 : i32, i32, i32
  }
  func.func @transform_9(%arg0: i32) -> (i32, i32) {
    %c0_i32 = arith.constant 0 : i32
    %c0_i32_0 = arith.constant 0 : i32
    %c0_i32_1 = arith.constant 0 : i32
    return %c0_i32, %c0_i32_0 : i32, i32
  }
  func.func @transform_10(%arg0: i32) -> (i32, i32) {
    %c0_i32 = arith.constant 0 : i32
    %c0_i32_0 = arith.constant 0 : i32
    %c0_i32_1 = arith.constant 0 : i32
    return %c0_i32, %c0_i32_0 : i32, i32
  }
  func.func @transform_11(%arg0: i32) -> (i32, i32) {
    %c0_i32 = arith.constant 0 : i32
    %c0_i32_0 = arith.constant 0 : i32
    %c0_i32_1 = arith.constant 0 : i32
    return %c0_i32, %c0_i32_0 : i32, i32
  }
  func.func @transform_12(%arg0: i32) -> (i32, i32) {
    %c0_i32 = arith.constant 0 : i32
    %c0_i32_0 = arith.constant 0 : i32
    %c0_i32_1 = arith.constant 0 : i32
    return %c0_i32, %c0_i32_0 : i32, i32
  }
  func.func @transform_13(%arg0: i32) -> (i32, i32) {
    %c0_i32 = arith.constant 0 : i32
    %c0_i32_0 = arith.constant 0 : i32
    %c0_i32_1 = arith.constant 0 : i32
    return %c0_i32, %c0_i32_0 : i32, i32
  }
  func.func @transform_14(%arg0: i32) -> (i32, i32) {
    %c0_i32 = arith.constant 0 : i32
    %c0_i32_0 = arith.constant 0 : i32
    %c0_i32_1 = arith.constant 0 : i32
    return %c0_i32, %c0_i32_0 : i32, i32
  }
  func.func @transform_15(%arg0: i32) -> (i32, i32) {
    %c0_i32 = arith.constant 0 : i32
    %c0_i32_0 = arith.constant 0 : i32
    %c0_i32_1 = arith.constant 0 : i32
    return %c0_i32, %c0_i32_0 : i32, i32
  }
  func.func @transform_16(%arg0: i32) -> (i32, i32) {
    %c0_i32 = arith.constant 0 : i32
    %c0_i32_0 = arith.constant 0 : i32
    %c0_i32_1 = arith.constant 0 : i32
    return %c0_i32, %c0_i32_0 : i32, i32
  }
  func.func @transform_17(%arg0: i32) -> (i32, i32) {
    %c0_i32 = arith.constant 0 : i32
    %c0_i32_0 = arith.constant 0 : i32
    %c0_i32_1 = arith.constant 0 : i32
    return %c0_i32, %c0_i32_0 : i32, i32
  }
  func.func @transform_18(%arg0: i32) -> (i32, i32, i32) {
    %c0_i32 = arith.constant 0 : i32
    %c0_i32_0 = arith.constant 0 : i32
    %c0_i32_1 = arith.constant 0 : i32
    return %arg0, %c0_i32, %c0_i32_0 : i32, i32, i32
  }
}

</mosaic_0001>

<llo_original>
// kernel: bottleneck_pallas.1
$region0: #{bottleneck_pallas.1}
  #allocation0 [shape = 'u32[]', space=smem, size = 0x4, offset = 0x4, fixed_abs, tag = 'smem constant byte address 0x4 - core index']
  #allocation1 [shape = 'u32[144,128]{1,0:T(1,128)}', space=vmem, size = 0x12000, scoped, tag = 'internal scratch']
  #allocation2 [shape = 'bf16[288,96]{1,0:T(16,128)(2,1)}', space=vmem, size = 0x12000, scoped, tag = 'scratch operand']
  %s0 = inlined_call_operand.vmem [shape: f32[2,256,64], index: 0, kind: input, shape index: {}]
  %s1 = inlined_call_operand.vmem [shape: f32[2,64,256], index: 1, kind: input, shape index: {}]
  %s2 = inlined_call_operand.vmem [shape: f32[1,64], index: 2, kind: input, shape index: {}]
  %s3 = inlined_call_operand.vmem [shape: f32[1,64], index: 3, kind: input, shape index: {}]
  %s4 = inlined_call_operand.vmem [shape: bf16[64,32], index: 4, kind: input, shape index: {}]
  %s5 = inlined_call_operand.vmem [shape: f32[1,32], index: 5, kind: input, shape index: {}]
  %s6 = inlined_call_operand.vmem [shape: f32[1,32], index: 6, kind: input, shape index: {}]
  %s7 = inlined_call_operand.vmem [shape: f32[1,32], index: 7, kind: input, shape index: {}]
  %s8 = inlined_call_operand.vmem [shape: bf16[3,96,32], index: 8, kind: input, shape index: {}]
  %s9 = inlined_call_operand.vmem [shape: f32[1,32], index: 9, kind: input, shape index: {}]
  %s10 = inlined_call_operand.vmem [shape: f32[1,32], index: 10, kind: input, shape index: {}]
  %s11 = inlined_call_operand.vmem [shape: f32[1,32], index: 11, kind: input, shape index: {}]
  %s12 = inlined_call_operand.vmem [shape: bf16[64,32], index: 12, kind: input, shape index: {}]
  %s13 = inlined_call_operand.vmem [shape: f32[64,1], index: 13, kind: input, shape index: {}]
  %s14 = inlined_call_operand.vmem [shape: f32[64,32], index: 14, kind: input, shape index: {}]
  %s15 = inlined_call_operand.vmem [shape: f32[32,64], index: 15, kind: input, shape index: {}]
  %s16 = inlined_call_operand.vmem [shape: f32[32,32], index: 16, kind: input, shape index: {}]
  %s17 = inlined_call_operand.vmem [shape: f32[32,32], index: 17, kind: input, shape index: {}]
  %s18 = inlined_call_operand.vmem [shape: f32[2,64,256], index: 18, kind: output, shape index: {}]
  %s19 = sld [smem:[#allocation0]]
  $region105: #{bottleneck_pallas.1} parent=0
    _
  %s21 = ssub.s32 1, %s19
  %s22 = scalar_select 0, %s21, %s19
  loop: start=0, step=1, limit=4
  $region2: #{bottleneck_pallas.1} parent=0 // loop_pre_header
    _
  $region3: #{bottleneck_pallas.1} parent=0 // loop_header
    %s24 = sphi 0, %s28
    %p25 = scmp.ge.s32.totalorder %s24, 4
    %s34 = sphi 0, %s36
    %s37 = sphi 0, %s34
    %s38 = sphi 0, %s37
    %s54 = sphi 0, %s38
    %s60 = sphi 0, %s62
    %s63 = sphi 0, %s60
    %s64 = sphi 0, %s63
    %s80 = sphi 0, %s64
    %s84 = sphi 0, %s84
    %s86 = sphi 0, %s84
    %s87 = sphi 0, %s86
    %s101 = sphi 0, %s87
    %s105 = sphi 0, %s105
    %s107 = sphi 0, %s105
    %s108 = sphi 0, %s107
    %s122 = sphi 0, %s108
    %s126 = sphi 0, %s126
    %s128 = sphi 0, %s126
    %s129 = sphi 0, %s128
    %s143 = sphi 0, %s129
    %s147 = sphi 0, %s147
    %s149 = sphi 0, %s147
    %s150 = sphi 0, %s149
    %s164 = sphi 0, %s150
    %s168 = sphi 0, %s168
    %s170 = sphi 0, %s168
    %s171 = sphi 0, %s170
    %s185 = sphi 0, %s171
    %s189 = sphi 0, %s189
    %s191 = sphi 0, %s189
    %s192 = sphi 0, %s191
    %s206 = sphi 0, %s192
    %s210 = sphi 0, %s210
    %s212 = sphi 0, %s210
    %s213 = sphi 0, %s212
    %s227 = sphi 0, %s213
    %s231 = sphi 0, %s231
    %s233 = sphi 0, %s231
    %s234 = sphi 0, %s233
    %s248 = sphi 0, %s234
    %s252 = sphi 0, %s252
    %s254 = sphi 0, %s252
    %s255 = sphi 0, %s254
    %s269 = sphi 0, %s255
    %s273 = sphi 0, %s273
    %s275 = sphi 0, %s273
    %s276 = sphi 0, %s275
    %s290 = sphi 0, %s276
    %s294 = sphi 0, %s294
    %s296 = sphi 0, %s294
    %s297 = sphi 0, %s296
    %s311 = sphi 0, %s297
    %s315 = sphi 0, %s315
    %s317 = sphi 0, %s315
    %s318 = sphi 0, %s317
    %s332 = sphi 0, %s318
    %s336 = sphi 0, %s336
    %s338 = sphi 0, %s336
    %s339 = sphi 0, %s338
    %s353 = sphi 0, %s339
    %s357 = sphi 0, %s357
    %s359 = sphi 0, %s357
    %s360 = sphi 0, %s359
    %s374 = sphi 0, %s360
    %s378 = sphi 0, %s378
    %s380 = sphi 0, %s378
    %s381 = sphi 0, %s380
    %s395 = sphi 0, %s381
    %s399 = sphi 0, %s399
    %s401 = sphi 0, %s399
    %s402 = sphi 0, %s401
    %s416 = sphi 0, %s402
    %s422 = sphi 0, %s424
    %s425 = sphi 0, %s422
    %s426 = sphi 0, %s425
    %s442 = sphi 0, %s426
  $region4: #{bottleneck_pallas.1} parent=0 // loop_header_branch
    %27 = sbr.rel (%p25) target = $region8
  $region5: #{bottleneck_pallas.1} parent=0 // loop_body
    %s29 = ssub.s32 %s24, 1
    %s30 = ssub.s32 %s24, 2
    %s31 = sadd.s32 %s24, 1
    %s32 = ssub.s32 %s24, %s31
    %p33 = scmp.eq.s32.totalorder %s32, 0
    %s35 = sadd.s32 %s34, 1
    %s36 = scalar_select %p33, %s34, %s35
    %p39 = pneg %p33
    %p40 = scmp.eq.s32.totalorder %s24, 1
    %p41 = por %p39, %p40
    %p42 = scmp.ne.s32.totalorder %s34, %s37
    %p43 = scmp.eq.s32.totalorder %s24, 0
    %p44 = por %p42, %p43
    %p45 = scmp.ne.s32.totalorder %s34, %s37
    %p46 = scmp.eq.s32.totalorder %s29, 1
    %p47 = por %p45, %p46
    %p48 = scmp.ne.s32.totalorder %s37, %s38
    %p49 = scmp.eq.s32.totalorder %s29, 0
    %p50 = por %p48, %p49
    %p51 = scmp.ne.s32.totalorder %s37, %s38
    %p52 = scmp.eq.s32.totalorder %s30, 1
    %p53 = por %p51, %p52
    %p55 = scmp.ne.s32.totalorder %s38, %s54
    %p56 = scmp.eq.s32.totalorder %s30, 0
    %p57 = por %p55, %p56
    %s58 = ssub.s32 %s24, %s31
    %p59 = scmp.eq.s32.totalorder %s58, 0
    %s61 = sadd.s32 %s60, 1
    %s62 = scalar_select %p59, %s60, %s61
    %p65 = pneg %p59
    %p66 = scmp.eq.s32.totalorder %s24, 1
    %p67 = por %p65, %p66
    %p68 = scmp.ne.s32.totalorder %s60, %s63
    %p69 = scmp.eq.s32.totalorder %s24, 0
    %p70 = por %p68, %p69
    %p71 = scmp.ne.s32.totalorder %s60, %s63
    %p72 = scmp.eq.s32.totalorder %s29, 1
    %p73 = por %p71, %p72
    %p74 = scmp.ne.s32.totalorder %s63, %s64
    %p75 = scmp.eq.s32.totalorder %s29, 0
    %p76 = por %p74, %p75
    %p77 = scmp.ne.s32.totalorder %s63, %s64
    %p78 = scmp.eq.s32.totalorder %s30, 1
    %p79 = por %p77, %p78
    %p81 = scmp.ne.s32.totalorder %s64, %s80
    %p82 = scmp.eq.s32.totalorder %s30, 0
    %p83 = por %p81, %p82
    %s85 = sadd.s32 %s84, 1
    %p88 = scmp.eq.s32.totalorder %s24, 1
    %p89 = scmp.ne.s32.totalorder %s84, %s86
    %p90 = scmp.eq.s32.totalorder %s24, 0
    %p91 = por %p89, %p90
    %p92 = scmp.ne.s32.totalorder %s84, %s86
    %p93 = scmp.eq.s32.totalorder %s29, 1
    %p94 = por %p92, %p93
    %p95 = scmp.ne.s32.totalorder %s86, %s87
    %p96 = scmp.eq.s32.totalorder %s29, 0
    %p97 = por %p95, %p96
    %p98 = scmp.ne.s32.totalorder %s86, %s87
    %p99 = scmp.eq.s32.totalorder %s30, 1
    %p100 = por %p98, %p99
    %p102 = scmp.ne.s32.totalorder %s87, %s101
    %p103 = scmp.eq.s32.totalorder %s30, 0
    %p104 = por %p102, %p103
    %s106 = sadd.s32 %s105, 1
    %p109 = scmp.eq.s32.totalorder %s24, 1
    %p110 = scmp.ne.s32.totalorder %s105, %s107
    %p111 = scmp.eq.s32.totalorder %s24, 0
    %p112 = por %p110, %p111
    %p113 = scmp.ne.s32.totalorder %s105, %s107
    %p114 = scmp.eq.s32.totalorder %s29, 1
    %p115 = por %p113, %p114
    %p116 = scmp.ne.s32.totalorder %s107, %s108
    %p117 = scmp.eq.s32.totalorder %s29, 0
    %p118 = por %p116, %p117
    %p119 = scmp.ne.s32.totalorder %s107, %s108
    %p120 = scmp.eq.s32.totalorder %s30, 1
    %p121 = por %p119, %p120
    %p123 = scmp.ne.s32.totalorder %s108, %s122
    %p124 = scmp.eq.s32.totalorder %s30, 0
    %p125 = por %p123, %p124
    %s127 = sadd.s32 %s126, 1
    %p130 = scmp.eq.s32.totalorder %s24, 1
    %p131 = scmp.ne.s32.totalorder %s126, %s128
    %p132 = scmp.eq.s32.totalorder %s24, 0
    %p133 = por %p131, %p132
    %p134 = scmp.ne.s32.totalorder %s126, %s128
    %p135 = scmp.eq.s32.totalorder %s29, 1
    %p136 = por %p134, %p135
    %p137 = scmp.ne.s32.totalorder %s128, %s129
    %p138 = scmp.eq.s32.totalorder %s29, 0
    %p139 = por %p137, %p138
    %p140 = scmp.ne.s32.totalorder %s128, %s129
    %p141 = scmp.eq.s32.totalorder %s30, 1
    %p142 = por %p140, %p141
    %p144 = scmp.ne.s32.totalorder %s129, %s143
    %p145 = scmp.eq.s32.totalorder %s30, 0
    %p146 = por %p144, %p145
    %s148 = sadd.s32 %s147, 1
    %p151 = scmp.eq.s32.totalorder %s24, 1
    %p152 = scmp.ne.s32.totalorder %s147, %s149
    %p153 = scmp.eq.s32.totalorder %s24, 0
    %p154 = por %p152, %p153
    %p155 = scmp.ne.s32.totalorder %s147, %s149
    %p156 = scmp.eq.s32.totalorder %s29, 1
    %p157 = por %p155, %p156
    %p158 = scmp.ne.s32.totalorder %s149, %s150
    %p159 = scmp.eq.s32.totalorder %s29, 0
    %p160 = por %p158, %p159
    %p161 = scmp.ne.s32.totalorder %s149, %s150
    %p162 = scmp.eq.s32.totalorder %s30, 1
    %p163 = por %p161, %p162
    %p165 = scmp.ne.s32.totalorder %s150, %s164
    %p166 = scmp.eq.s32.totalorder %s30, 0
    %p167 = por %p165, %p166
    %s169 = sadd.s32 %s168, 1
    %p172 = scmp.eq.s32.totalorder %s24, 1
    %p173 = scmp.ne.s32.totalorder %s168, %s170
    %p174 = scmp.eq.s32.totalorder %s24, 0
    %p175 = por %p173, %p174
    %p176 = scmp.ne.s32.totalorder %s168, %s170
    %p177 = scmp.eq.s32.totalorder %s29, 1
    %p178 = por %p176, %p177
    %p179 = scmp.ne.s32.totalorder %s170, %s171
    %p180 = scmp.eq.s32.totalorder %s29, 0
    %p181 = por %p179, %p180
    %p182 = scmp.ne.s32.totalorder %s170, %s171
    %p183 = scmp.eq.s32.totalorder %s30, 1
    %p184 = por %p182, %p183
    %p186 = scmp.ne.s32.totalorder %s171, %s185
    %p187 = scmp.eq.s32.totalorder %s30, 0
    %p188 = por %p186, %p187
    %s190 = sadd.s32 %s189, 1
    %p193 = scmp.eq.s32.totalorder %s24, 1
    %p194 = scmp.ne.s32.totalorder %s189, %s191
    %p195 = scmp.eq.s32.totalorder %s24, 0
    %p196 = por %p194, %p195
    %p197 = scmp.ne.s32.totalorder %s189, %s191
    %p198 = scmp.eq.s32.totalorder %s29, 1
    %p199 = por %p197, %p198
    %p200 = scmp.ne.s32.totalorder %s191, %s192
    %p201 = scmp.eq.s32.totalorder %s29, 0
    %p202 = por %p200, %p201
    %p203 = scmp.ne.s32.totalorder %s191, %s192
    %p204 = scmp.eq.s32.totalorder %s30, 1
    %p205 = por %p203, %p204
    %p207 = scmp.ne.s32.totalorder %s192, %s206
    %p208 = scmp.eq.s32.totalorder %s30, 0
    %p209 = por %p207, %p208
    %s211 = sadd.s32 %s210, 1
    %p214 = scmp.eq.s32.totalorder %s24, 1
    %p215 = scmp.ne.s32.totalorder %s210, %s212
    %p216 = scmp.eq.s32.totalorder %s24, 0
    %p217 = por %p215, %p216
    %p218 = scmp.ne.s32.totalorder %s210, %s212
    %p219 = scmp.eq.s32.totalorder %s29, 1
    %p220 = por %p218, %p219
    %p221 = scmp.ne.s32.totalorder %s212, %s213
    %p222 = scmp.eq.s32.totalorder %s29, 0
    %p223 = por %p221, %p222
    %p224 = scmp.ne.s32.totalorder %s212, %s213
    %p225 = scmp.eq.s32.totalorder %s30, 1
    %p226 = por %p224, %p225
    %p228 = scmp.ne.s32.totalorder %s213, %s227
    %p229 = scmp.eq.s32.totalorder %s30, 0
    %p230 = por %p228, %p229
    %s232 = sadd.s32 %s231, 1
    %p235 = scmp.eq.s32.totalorder %s24, 1
    %p236 = scmp.ne.s32.totalorder %s231, %s233
    %p237 = scmp.eq.s32.totalorder %s24, 0
    %p238 = por %p236, %p237
    %p239 = scmp.ne.s32.totalorder %s231, %s233
    %p240 = scmp.eq.s32.totalorder %s29, 1
    %p241 = por %p239, %p240
    %p242 = scmp.ne.s32.totalorder %s233, %s234
    %p243 = scmp.eq.s32.totalorder %s29, 0
    %p244 = por %p242, %p243
    %p245 = scmp.ne.s32.totalorder %s233, %s234
    %p246 = scmp.eq.s32.totalorder %s30, 1
    %p247 = por %p245, %p246
    %p249 = scmp.ne.s32.totalorder %s234, %s248
    %p250 = scmp.eq.s32.totalorder %s30, 0
    %p251 = por %p249, %p250
    %s253 = sadd.s32 %s252, 1
    %p256 = scmp.eq.s32.totalorder %s24, 1
    %p257 = scmp.ne.s32.totalorder %s252, %s254
    %p258 = scmp.eq.s32.totalorder %s24, 0
    %p259 = por %p257, %p258
    %p260 = scmp.ne.s32.totalorder %s252, %s254
    %p261 = scmp.eq.s32.totalorder %s29, 1
    %p262 = por %p260, %p261
    %p263 = scmp.ne.s32.totalorder %s254, %s255
    %p264 = scmp.eq.s32.totalorder %s29, 0
    %p265 = por %p263, %p264
    %p266 = scmp.ne.s32.totalorder %s254, %s255
    %p267 = scmp.eq.s32.totalorder %s30, 1
    %p268 = por %p266, %p267
    %p270 = scmp.ne.s32.totalorder %s255, %s269
    %p271 = scmp.eq.s32.totalorder %s30, 0
    %p272 = por %p270, %p271
    %s274 = sadd.s32 %s273, 1
    %p277 = scmp.eq.s32.totalorder %s24, 1
    %p278 = scmp.ne.s32.totalorder %s273, %s275
    %p279 = scmp.eq.s32.totalorder %s24, 0
    %p280 = por %p278, %p279
    %p281 = scmp.ne.s32.totalorder %s273, %s275
    %p282 = scmp.eq.s32.totalorder %s29, 1
    %p283 = por %p281, %p282
    %p284 = scmp.ne.s32.totalorder %s275, %s276
    %p285 = scmp.eq.s32.totalorder %s29, 0
    %p286 = por %p284, %p285
    %p287 = scmp.ne.s32.totalorder %s275, %s276
    %p288 = scmp.eq.s32.totalorder %s30, 1
    %p289 = por %p287, %p288
    %p291 = scmp.ne.s32.totalorder %s276, %s290
    %p292 = scmp.eq.s32.totalorder %s30, 0
    %p293 = por %p291, %p292
    %s295 = sadd.s32 %s294, 1
    %p298 = scmp.eq.s32.totalorder %s24, 1
    %p299 = scmp.ne.s32.totalorder %s294, %s296
    %p300 = scmp.eq.s32.totalorder %s24, 0
    %p301 = por %p299, %p300
    %p302 = scmp.ne.s32.totalorder %s294, %s296
    %p303 = scmp.eq.s32.totalorder %s29, 1
    %p304 = por %p302, %p303
    %p305 = scmp.ne.s32.totalorder %s296, %s297
    %p306 = scmp.eq.s32.totalorder %s29, 0
    %p307 = por %p305, %p306
    %p308 = scmp.ne.s32.totalorder %s296, %s297
    %p309 = scmp.eq.s32.totalorder %s30, 1
    %p310 = por %p308, %p309
    %p312 = scmp.ne.s32.totalorder %s297, %s311
    %p313 = scmp.eq.s32.totalorder %s30, 0
    %p314 = por %p312, %p313
    %s316 = sadd.s32 %s315, 1
    %p319 = scmp.eq.s32.totalorder %s24, 1
    %p320 = scmp.ne.s32.totalorder %s315, %s317
    %p321 = scmp.eq.s32.totalorder %s24, 0
    %p322 = por %p320, %p321
    %p323 = scmp.ne.s32.totalorder %s315, %s317
    %p324 = scmp.eq.s32.totalorder %s29, 1
    %p325 = por %p323, %p324
    %p326 = scmp.ne.s32.totalorder %s317, %s318
    %p327 = scmp.eq.s32.totalorder %s29, 0
    %p328 = por %p326, %p327
    %p329 = scmp.ne.s32.totalorder %s317, %s318
    %p330 = scmp.eq.s32.totalorder %s30, 1
    %p331 = por %p329, %p330
    %p333 = scmp.ne.s32.totalorder %s318, %s332
    %p334 = scmp.eq.s32.totalorder %s30, 0
    %p335 = por %p333, %p334
    %s337 = sadd.s32 %s336, 1
    %p340 = scmp.eq.s32.totalorder %s24, 1
    %p341 = scmp.ne.s32.totalorder %s336, %s338
    %p342 = scmp.eq.s32.totalorder %s24, 0
    %p343 = por %p341, %p342
    %p344 = scmp.ne.s32.totalorder %s336, %s338
    %p345 = scmp.eq.s32.totalorder %s29, 1
    %p346 = por %p344, %p345
    %p347 = scmp.ne.s32.totalorder %s338, %s339
    %p348 = scmp.eq.s32.totalorder %s29, 0
    %p349 = por %p347, %p348
    %p350 = scmp.ne.s32.totalorder %s338, %s339
    %p351 = scmp.eq.s32.totalorder %s30, 1
    %p352 = por %p350, %p351
    %p354 = scmp.ne.s32.totalorder %s339, %s353
    %p355 = scmp.eq.s32.totalorder %s30, 0
    %p356 = por %p354, %p355
    %s358 = sadd.s32 %s357, 1
    %p361 = scmp.eq.s32.totalorder %s24, 1
    %p362 = scmp.ne.s32.totalorder %s357, %s359
    %p363 = scmp.eq.s32.totalorder %s24, 0
    %p364 = por %p362, %p363
    %p365 = scmp.ne.s32.totalorder %s357, %s359
    %p366 = scmp.eq.s32.totalorder %s29, 1
    %p367 = por %p365, %p366
    %p368 = scmp.ne.s32.totalorder %s359, %s360
    %p369 = scmp.eq.s32.totalorder %s29, 0
    %p370 = por %p368, %p369
    %p371 = scmp.ne.s32.totalorder %s359, %s360
    %p372 = scmp.eq.s32.totalorder %s30, 1
    %p373 = por %p371, %p372
    %p375 = scmp.ne.s32.totalorder %s360, %s374
    %p376 = scmp.eq.s32.totalorder %s30, 0
    %p377 = por %p375, %p376
    %s379 = sadd.s32 %s378, 1
    %p382 = scmp.eq.s32.totalorder %s24, 1
    %p383 = scmp.ne.s32.totalorder %s378, %s380
    %p384 = scmp.eq.s32.totalorder %s24, 0
    %p385 = por %p383, %p384
    %p386 = scmp.ne.s32.totalorder %s378, %s380
    %p387 = scmp.eq.s32.totalorder %s29, 1
    %p388 = por %p386, %p387
    %p389 = scmp.ne.s32.totalorder %s380, %s381
    %p390 = scmp.eq.s32.totalorder %s29, 0
    %p391 = por %p389, %p390
    %p392 = scmp.ne.s32.totalorder %s380, %s381
    %p393 = scmp.eq.s32.totalorder %s30, 1
    %p394 = por %p392, %p393
    %p396 = scmp.ne.s32.totalorder %s381, %s395
    %p397 = scmp.eq.s32.totalorder %s30, 0
    %p398 = por %p396, %p397
    %s400 = sadd.s32 %s399, 1
    %p403 = scmp.eq.s32.totalorder %s24, 1
    %p404 = scmp.ne.s32.totalorder %s399, %s401
    %p405 = scmp.eq.s32.totalorder %s24, 0
    %p406 = por %p404, %p405
    %p407 = scmp.ne.s32.totalorder %s399, %s401
    %p408 = scmp.eq.s32.totalorder %s29, 1
    %p409 = por %p407, %p408
    %p410 = scmp.ne.s32.totalorder %s401, %s402
    %p411 = scmp.eq.s32.totalorder %s29, 0
    %p412 = por %p410, %p411
    %p413 = scmp.ne.s32.totalorder %s401, %s402
    %p414 = scmp.eq.s32.totalorder %s30, 1
    %p415 = por %p413, %p414
    %p417 = scmp.ne.s32.totalorder %s402, %s416
    %p418 = scmp.eq.s32.totalorder %s30, 0
    %p419 = por %p417, %p418
    %s420 = ssub.s32 %s24, %s31
    %p421 = scmp.eq.s32.totalorder %s420, 0
    %s423 = sadd.s32 %s422, 1
    %s424 = scalar_select %p421, %s422, %s423
    %p427 = pneg %p421
    %p428 = scmp.eq.s32.totalorder %s24, 1
    %p429 = por %p427, %p428
    %p430 = scmp.ne.s32.totalorder %s422, %s425
    %p431 = scmp.eq.s32.totalorder %s24, 0
    %p432 = por %p430, %p431
    %p433 = scmp.ne.s32.totalorder %s422, %s425
    %p434 = scmp.eq.s32.totalorder %s29, 1
    %p435 = por %p433, %p434
    %p436 = scmp.ne.s32.totalorder %s425, %s426
    %p437 = scmp.eq.s32.totalorder %s29, 0
    %p438 = por %p436, %p437
    %p439 = scmp.ne.s32.totalorder %s425, %s426
    %p440 = scmp.eq.s32.totalorder %s30, 1
    %p441 = por %p439, %p440
    %p443 = scmp.ne.s32.totalorder %s426, %s442
    %p444 = scmp.eq.s32.totalorder %s30, 0
    %p445 = por %p443, %p444
    %p446 = scmp.le.s32.totalorder 1, %s24
    %p447 = scmp.lt.s32.totalorder %s24, 3
    %p448 = pnand %p446, %p447
    %p449 = pneg %p448
    // Predicated region
    $region9: #{bottleneck_pallas.1} parent=5 // pred_check
      _
    $region10: #{bottleneck_pallas.1} parent=5 // pred_check_branch
      %451 = sbr.rel (%p448) target = $region12
    $region11: #{bottleneck_pallas.1} parent=5 // pred_region
      %s452 = ssub.s32 %s24, 1
      // Predicated region
      $region13: #{bottleneck_pallas.1} parent=11 // pred_check
        %p453 = pneg %p97
      $region14: #{bottleneck_pallas.1} parent=11 // pred_check_branch
        %455 = sbr.rel (%p453) target = $region16
      $region15: #{bottleneck_pallas.1} parent=11 // pred_region
        _
      $region16: #{bottleneck_pallas.1} parent=11 // pred_fallthru
        _
      // Predicated region
      $region17: #{bottleneck_pallas.1} parent=11 // pred_check
        %p456 = pneg %p118
      $region18: #{bottleneck_pallas.1} parent=11 // pred_check_branch
        %458 = sbr.rel (%p456) target = $region20
      $region19: #{bottleneck_pallas.1} parent=11 // pred_region
        _
      $region20: #{bottleneck_pallas.1} parent=11 // pred_fallthru
        _
      // Predicated region
      $region21: #{bottleneck_pallas.1} parent=11 // pred_check
        %p459 = pneg %p139
      $region22: #{bottleneck_pallas.1} parent=11 // pred_check_branch
        %461 = sbr.rel (%p459) target = $region24
      $region23: #{bottleneck_pallas.1} parent=11 // pred_region
        _
      $region24: #{bottleneck_pallas.1} parent=11 // pred_fallthru
        _
      // Predicated region
      $region25: #{bottleneck_pallas.1} parent=11 // pred_check
        %p462 = pneg %p160
      $region26: #{bottleneck_pallas.1} parent=11 // pred_check_branch
        %464 = sbr.rel (%p462) target = $region28
      $region27: #{bottleneck_pallas.1} parent=11 // pred_region
        _
      $region28: #{bottleneck_pallas.1} parent=11 // pred_fallthru
        _
      // Predicated region
      $region29: #{bottleneck_pallas.1} parent=11 // pred_check
        %p465 = pneg %p181
      $region30: #{bottleneck_pallas.1} parent=11 // pred_check_branch
        %467 = sbr.rel (%p465) target = $region32
      $region31: #{bottleneck_pallas.1} parent=11 // pred_region
        _
      $region32: #{bottleneck_pallas.1} parent=11 // pred_fallthru
        _
      // Predicated region
      $region33: #{bottleneck_pallas.1} parent=11 // pred_check
        %p468 = pneg %p202
      $region34: #{bottleneck_pallas.1} parent=11 // pred_check_branch
        %470 = sbr.rel (%p468) target = $region36
      $region35: #{bottleneck_pallas.1} parent=11 // pred_region
        _
      $region36: #{bottleneck_pallas.1} parent=11 // pred_fallthru
        _
      // Predicated region
      $region37: #{bottleneck_pallas.1} parent=11 // pred_check
        %p471 = pneg %p223
      $region38: #{bottleneck_pallas.1} parent=11 // pred_check_branch
        %473 = sbr.rel (%p471) target = $region40
      $region39: #{bottleneck_pallas.1} parent=11 // pred_region
        _
      $region40: #{bottleneck_pallas.1} parent=11 // pred_fallthru
        _
      // Predicated region
      $region41: #{bottleneck_pallas.1} parent=11 // pred_check
        %p474 = pneg %p244
      $region42: #{bottleneck_pallas.1} parent=11 // pred_check_branch
        %476 = sbr.rel (%p474) target = $region44
      $region43: #{bottleneck_pallas.1} parent=11 // pred_region
        _
      $region44: #{bottleneck_pallas.1} parent=11 // pred_fallthru
        _
      // Predicated region
      $region45: #{bottleneck_pallas.1} parent=11 // pred_check
        %p477 = pneg %p265
      $region46: #{bottleneck_pallas.1} parent=11 // pred_check_branch
        %479 = sbr.rel (%p477) target = $region48
      $region47: #{bottleneck_pallas.1} parent=11 // pred_region
        _
      $region48: #{bottleneck_pallas.1} parent=11 // pred_fallthru
        _
      // Predicated region
      $region49: #{bottleneck_pallas.1} parent=11 // pred_check
        %p480 = pneg %p286
      $region50: #{bottleneck_pallas.1} parent=11 // pred_check_branch
        %482 = sbr.rel (%p480) target = $region52
      $region51: #{bottleneck_pallas.1} parent=11 // pred_region
        _
      $region52: #{bottleneck_pallas.1} parent=11 // pred_fallthru
        _
      // Predicated region
      $region53: #{bottleneck_pallas.1} parent=11 // pred_check
        %p483 = pneg %p307
      $region54: #{bottleneck_pallas.1} parent=11 // pred_check_branch
        %485 = sbr.rel (%p483) target = $region56
      $region55: #{bottleneck_pallas.1} parent=11 // pred_region
        _
      $region56: #{bottleneck_pallas.1} parent=11 // pred_fallthru
        _
      // Predicated region
      $region57: #{bottleneck_pallas.1} parent=11 // pred_check
        %p486 = pneg %p328
      $region58: #{bottleneck_pallas.1} parent=11 // pred_check_branch
        %488 = sbr.rel (%p486) target = $region60
      $region59: #{bottleneck_pallas.1} parent=11 // pred_region
        _
      $region60: #{bottleneck_pallas.1} parent=11 // pred_fallthru
        _
      // Predicated region
      $region61: #{bottleneck_pallas.1} parent=11 // pred_check
        %p489 = pneg %p349
      $region62: #{bottleneck_pallas.1} parent=11 // pred_check_branch
        %491 = sbr.rel (%p489) target = $region64
      $region63: #{bottleneck_pallas.1} parent=11 // pred_region
        _
      $region64: #{bottleneck_pallas.1} parent=11 // pred_fallthru
        _
      // Predicated region
      $region65: #{bottleneck_pallas.1} parent=11 // pred_check
        %p492 = pneg %p370
      $region66: #{bottleneck_pallas.1} parent=11 // pred_check_branch
        %494 = sbr.rel (%p492) target = $region68
      $region67: #{bottleneck_pallas.1} parent=11 // pred_region
        _
      $region68: #{bottleneck_pallas.1} parent=11 // pred_fallthru
        _
      // Predicated region
      $region69: #{bottleneck_pallas.1} parent=11 // pred_check
        %p495 = pneg %p391
      $region70: #{bottleneck_pallas.1} parent=11 // pred_check_branch
        %497 = sbr.rel (%p495) target = $region72
      $region71: #{bottleneck_pallas.1} parent=11 // pred_region
        _
      $region72: #{bottleneck_pallas.1} parent=11 // pred_fallthru
        _
      // Predicated region
      $region73: #{bottleneck_pallas.1} parent=11 // pred_check
        %p498 = pneg %p412
      $region74: #{bottleneck_pallas.1} parent=11 // pred_check_branch
        %500 = sbr.rel (%p498) target = $region76
      $region75: #{bottleneck_pallas.1} parent=11 // pred_region
        _
      $region76: #{bottleneck_pallas.1} parent=11 // pred_fallthru
        _
    $region12: #{bottleneck_pallas.1} parent=5 // pred_fallthru
      _
    %p501 = scmp.lt.s32.totalorder %s24, 2
    // Predicated region
    $region77: #{bottleneck_pallas.1} parent=5 // pred_check
      %p502 = pneg %p501
    $region78: #{bottleneck_pallas.1} parent=5 // pred_check_branch
      %504 = sbr.rel (%p502) target = $region80
    $region79: #{bottleneck_pallas.1} parent=5 // pred_region
      // Predicated region
      $region81: #{bottleneck_pallas.1} parent=79 // pred_check
        %p505 = pneg %p44
      $region82: #{bottleneck_pallas.1} parent=79 // pred_check_branch
        %507 = sbr.rel (%p505) target = $region84
      $region83: #{bottleneck_pallas.1} parent=79 // pred_region
        %p508 = scmp.lt.s32.totalorder %s24, 1
        %s509 = scalar_select %p508, %s24, 1
        %s510 = smul.addr %s509, 32
        %s511 = smul.addr %s510, 8
        %s512 = scalar_lea.vmem %s0, %s511
      $region84: #{bottleneck_pallas.1} parent=79 // pred_fallthru
        _
      // Predicated region
      $region85: #{bottleneck_pallas.1} parent=79 // pred_check
        %p513 = pneg %p70
      $region86: #{bottleneck_pallas.1} parent=79 // pred_check_branch
        %515 = sbr.rel (%p513) target = $region88
      $region87: #{bottleneck_pallas.1} parent=79 // pred_region
        %p516 = scmp.lt.s32.totalorder %s24, 1
        %s517 = scalar_select %p516, %s24, 1
        %s518 = smul.addr %s517, 16
        %s519 = smul.addr %s518, 8
        %s520 = scalar_lea.vmem %s1, %s519
      $region88: #{bottleneck_pallas.1} parent=79 // pred_fallthru
        _
    $region80: #{bottleneck_pallas.1} parent=5 // pred_fallthru
      _
    %p521 = scmp.le.s32.totalorder 1, %s24
    %p522 = scmp.lt.s32.totalorder %s24, 3
    %p523 = pnand %p521, %p522
    %p524 = pneg %p523
    // Predicated region
    $region89: #{bottleneck_pallas.1} parent=5 // pred_check
      _
    $region90: #{bottleneck_pallas.1} parent=5 // pred_check_branch
      %526 = sbr.rel (%p523) target = $region92
    $region91: #{bottleneck_pallas.1} parent=5 // pred_region
      %s527 = ssub.s32 %s24, 1
      %p528 = scmp.lt.s32.totalorder %s29, 1
      %s529 = scalar_select %p528, %s29, 1
      %s530 = smul.addr %s529, 32
      %s531 = smul.addr %s530, 8
      %s532 = scalar_lea.vmem %s0, %s531
      %p533 = pneg %p50
      %p534 = pneg %p47
      %p535 = scmp.lt.s32.totalorder %s29, 1
      %s536 = scalar_select %p535, %s29, 1
      %s537 = smul.addr %s536, 16
      %s538 = smul.addr %s537, 8
      %s539 = scalar_lea.vmem %s1, %s538
      %p540 = pneg %p76
      %p541 = pneg %p73
      %p542 = pneg %p97
      %p543 = pneg %p94
      %p544 = pneg %p118
      %p545 = pneg %p115
      %p546 = pneg %p139
      %p547 = pneg %p136
      %p548 = pneg %p160
      %p549 = pneg %p157
      %p550 = pneg %p181
      %p551 = pneg %p178
      %p552 = pneg %p202
      %p553 = pneg %p199
      %p554 = pneg %p223
      %p555 = pneg %p220
      %p556 = pneg %p244
      %p557 = pneg %p241
      %p558 = pneg %p265
      %p559 = pneg %p262
      %p560 = pneg %p286
      %p561 = pneg %p283
      %p562 = pneg %p307
      %p563 = pneg %p304
      %p564 = pneg %p328
      %p565 = pneg %p325
      %p566 = pneg %p349
      %p567 = pneg %p346
      %p568 = pneg %p370
      %p569 = pneg %p367
      %p570 = pneg %p391
      %p571 = pneg %p388
      %p572 = pneg %p412
      %p573 = pneg %p409
      %p574 = pneg %p438
      %p575 = pneg %p435
      %p576 = scmp.lt.s32.totalorder %s29, 1
      %s577 = scalar_select %p576, %s29, 1
      %s578 = smul.addr %s577, 16
      %s579 = smul.addr %s578, 8
      %s580 = scalar_lea.vmem %s18, %s579
      %p581 = scmp.lt.s32.totalorder %s29, 1
      %s582 = scalar_select %p581, %s29, 1
      %s583 = smul.addr %s582, 32
      %s584 = smul.addr %s583, 8
      %s585 = scalar_lea.vmem %s0, %s584
      %p586 = scmp.lt.s32.totalorder %s29, 1
      %s587 = scalar_select %p586, %s29, 1
      %s588 = smul.addr %s587, 16
      %s589 = smul.addr %s588, 8
      %s590 = scalar_lea.vmem %s1, %s589
      %p591 = scmp.lt.s32.totalorder %s29, 1
      %s592 = scalar_select %p591, %s29, 1
      %s593 = smul.addr %s592, 16
      %s594 = smul.addr %s593, 8
      %s595 = scalar_lea.vmem %s18, %s594
      %v597 = vld [vmem:[%s585] sm:$0xff]
      %v598 = vld [vmem:[%s585 + $0x8] sm:$0xff]
      %v599 = vld [vmem:[%s585 + $0x10] sm:$0xff]
      %v600 = vld [vmem:[%s585 + $0x18] sm:$0xff]
      %v601 = vld [vmem:[%s585 + $0x20] sm:$0xff]
      %v602 = vld [vmem:[%s585 + $0x28] sm:$0xff]
      %v603 = vld [vmem:[%s585 + $0x30] sm:$0xff]
      %v604 = vld [vmem:[%s585 + $0x38] sm:$0xff]
      %v605 = vld [vmem:[%s585 + $0x40] sm:$0xff]
      %v606 = vld [vmem:[%s585 + $0x48] sm:$0xff]
      %v607 = vld [vmem:[%s585 + $0x50] sm:$0xff]
      %v608 = vld [vmem:[%s585 + $0x58] sm:$0xff]
      %v609 = vld [vmem:[%s585 + $0x60] sm:$0xff]
      %v610 = vld [vmem:[%s585 + $0x68] sm:$0xff]
      %v611 = vld [vmem:[%s585 + $0x70] sm:$0xff]
      %v612 = vld [vmem:[%s585 + $0x78] sm:$0xff]
      %v613 = vld [vmem:[%s585 + $0x80] sm:$0xff]
      %v614 = vld [vmem:[%s585 + $0x88] sm:$0xff]
      %v615 = vld [vmem:[%s585 + $0x90] sm:$0xff]
      %v616 = vld [vmem:[%s585 + $0x98] sm:$0xff]
      %v617 = vld [vmem:[%s585 + $0xa0] sm:$0xff]
      %v618 = vld [vmem:[%s585 + $0xa8] sm:$0xff]
      %v619 = vld [vmem:[%s585 + $0xb0] sm:$0xff]
      %v620 = vld [vmem:[%s585 + $0xb8] sm:$0xff]
      %v621 = vld [vmem:[%s585 + $0xc0] sm:$0xff]
      %v622 = vld [vmem:[%s585 + $0xc8] sm:$0xff]
      %v623 = vld [vmem:[%s585 + $0xd0] sm:$0xff]
      %v624 = vld [vmem:[%s585 + $0xd8] sm:$0xff]
      %v625 = vld [vmem:[%s585 + $0xe0] sm:$0xff]
      %v626 = vld [vmem:[%s585 + $0xe8] sm:$0xff]
      %v627 = vld [vmem:[%s585 + $0xf0] sm:$0xff]
      %v628 = vld [vmem:[%s585 + $0xf8] sm:$0xff]
      %v629 = vld [vmem:[%s14] sm:$0xff]
      %v630 = vld [vmem:[%s14 + $0x8] sm:$0xff]
      %v631 = vld [vmem:[%s14 + $0x10] sm:$0xff]
      %v632 = vld [vmem:[%s14 + $0x18] sm:$0xff]
      %v633 = vld [vmem:[%s14 + $0x20] sm:$0xff]
      %v634 = vld [vmem:[%s14 + $0x28] sm:$0xff]
      %v635 = vld [vmem:[%s14 + $0x30] sm:$0xff]
      %v636 = vld [vmem:[%s14 + $0x38] sm:$0xff]
      %v637 = vld [vmem:[%s15] sm:$0xff]
      %v638 = vld [vmem:[%s15 + $0x8] sm:$0xff]
      %v639 = vld [vmem:[%s15 + $0x10] sm:$0xff]
      %v640 = vld [vmem:[%s15 + $0x18] sm:$0xff]
      %v641 = vld [vmem:[%s2] sm:$0x1]
      %v642 = vld [vmem:[%s3] sm:$0x1]
      %vm643 = vcmask 523264
      %v644 = vsel %vm643, %v597, 0.0
      %v645 = vsel %vm643, %v598, 0.0
      %v646 = vadd.f32 %v644, %v645
      %v647 = vsel %vm643, %v599, 0.0
      %v648 = vadd.f32 %v646, %v647
      %v649 = vsel %vm643, %v600, 0.0
      %v650 = vadd.f32 %v648, %v649
      %v651 = vsel %vm643, %v601, 0.0
      %v652 = vadd.f32 %v650, %v651
      %v653 = vsel %vm643, %v602, 0.0
      %v654 = vadd.f32 %v652, %v653
      %v655 = vsel %vm643, %v603, 0.0
      %v656 = vadd.f32 %v654, %v655
      %v657 = vsel %vm643, %v604, 0.0
      %v658 = vadd.f32 %v656, %v657
      %v659 = vsel %vm643, %v605, 0.0
      %v660 = vadd.f32 %v658, %v659
      %v661 = vsel %vm643, %v606, 0.0
      %v662 = vadd.f32 %v660, %v661
      %v663 = vsel %vm643, %v607, 0.0
      %v664 = vadd.f32 %v662, %v663
      %v665 = vsel %vm643, %v608, 0.0
      %v666 = vadd.f32 %v664, %v665
      %v667 = vsel %vm643, %v609, 0.0
      %v668 = vadd.f32 %v666, %v667
      %v669 = vsel %vm643, %v610, 0.0
      %v670 = vadd.f32 %v668, %v669
      %v671 = vsel %vm643, %v611, 0.0
      %v672 = vadd.f32 %v670, %v671
      %v673 = vsel %vm643, %v612, 0.0
      %v674 = vadd.f32 %v672, %v673
      %v675 = vsel %vm643, %v613, 0.0
      %v676 = vadd.f32 %v674, %v675
      %v677 = vsel %vm643, %v614, 0.0
      %v678 = vadd.f32 %v676, %v677
      %v679 = vsel %vm643, %v615, 0.0
      %v680 = vadd.f32 %v678, %v679
      %v681 = vsel %vm643, %v616, 0.0
      %v682 = vadd.f32 %v680, %v681
      %v683 = vsel %vm643, %v617, 0.0
      %v684 = vadd.f32 %v682, %v683
      %v685 = vsel %vm643, %v618, 0.0
      %v686 = vadd.f32 %v684, %v685
      %v687 = vsel %vm643, %v619, 0.0
      %v688 = vadd.f32 %v686, %v687
      %v689 = vsel %vm643, %v620, 0.0
      %v690 = vadd.f32 %v688, %v689
      %v691 = vsel %vm643, %v621, 0.0
      %v692 = vadd.f32 %v690, %v691
      %v693 = vsel %vm643, %v622, 0.0
      %v694 = vadd.f32 %v692, %v693
      %v695 = vsel %vm643, %v623, 0.0
      %v696 = vadd.f32 %v694, %v695
      %v697 = vsel %vm643, %v624, 0.0
      %v698 = vadd.f32 %v696, %v697
      %v699 = vsel %vm643, %v625, 0.0
      %v700 = vadd.f32 %v698, %v699
      %v701 = vsel %vm643, %v626, 0.0
      %v702 = vadd.f32 %v700, %v701
      %v703 = vsel %vm643, %v627, 0.0
      %v704 = vadd.f32 %v702, %v703
      %v705 = vsel %vm643, %v628, 0.0
      %v706 = vadd.f32 %v704, %v705
      %v707 = vrot.slane %v706, 4
      %v708 = vadd.f32 %v706, %v707
      %v709 = vrot.slane %v708, 2
      %v710 = vadd.f32 %v708, %v709
      %v711 = vrot.slane %v710, 1
      %v712 = vadd.f32 %v710, %v711
      %v713 = vmul.f32 %v597, %v597
      %v714 = vmul.f32 %v598, %v598
      %v715 = vmul.f32 %v599, %v599
      %v716 = vmul.f32 %v600, %v600
      %v717 = vmul.f32 %v601, %v601
      %v718 = vmul.f32 %v602, %v602
      %v719 = vmul.f32 %v603, %v603
      %v720 = vmul.f32 %v604, %v604
      %v721 = vmul.f32 %v605, %v605
      %v722 = vmul.f32 %v606, %v606
      %v723 = vmul.f32 %v607, %v607
      %v724 = vmul.f32 %v608, %v608
      %v725 = vmul.f32 %v609, %v609
      %v726 = vmul.f32 %v610, %v610
      %v727 = vmul.f32 %v611, %v611
      %v728 = vmul.f32 %v612, %v612
      %v729 = vmul.f32 %v613, %v613
      %v730 = vmul.f32 %v614, %v614
      %v731 = vmul.f32 %v615, %v615
      %v732 = vmul.f32 %v616, %v616
      %v733 = vmul.f32 %v617, %v617
      %v734 = vmul.f32 %v618, %v618
      %v735 = vmul.f32 %v619, %v619
      %v736 = vmul.f32 %v620, %v620
      %v737 = vmul.f32 %v621, %v621
      %v738 = vmul.f32 %v622, %v622
      %v739 = vmul.f32 %v623, %v623
      %v740 = vmul.f32 %v624, %v624
      %v741 = vmul.f32 %v625, %v625
      %v742 = vmul.f32 %v626, %v626
      %v743 = vmul.f32 %v627, %v627
      %v744 = vmul.f32 %v628, %v628
      %v745 = vsel %vm643, %v713, 0.0
      %v746 = vsel %vm643, %v714, 0.0
      %v747 = vadd.f32 %v745, %v746
      %v748 = vsel %vm643, %v715, 0.0
      %v749 = vadd.f32 %v747, %v748
      %v750 = vsel %vm643, %v716, 0.0
      %v751 = vadd.f32 %v749, %v750
      %v752 = vsel %vm643, %v717, 0.0
      %v753 = vadd.f32 %v751, %v752
      %v754 = vsel %vm643, %v718, 0.0
      %v755 = vadd.f32 %v753, %v754
      %v756 = vsel %vm643, %v719, 0.0
      %v757 = vadd.f32 %v755, %v756
      %v758 = vsel %vm643, %v720, 0.0
      %v759 = vadd.f32 %v757, %v758
      %v760 = vsel %vm643, %v721, 0.0
      %v761 = vadd.f32 %v759, %v760
      %v762 = vsel %vm643, %v722, 0.0
      %v763 = vadd.f32 %v761, %v762
      %v764 = vsel %vm643, %v723, 0.0
      %v765 = vadd.f32 %v763, %v764
      %v766 = vsel %vm643, %v724, 0.0
      %v767 = vadd.f32 %v765, %v766
      %v768 = vsel %vm643, %v725, 0.0
      %v769 = vadd.f32 %v767, %v768
      %v770 = vsel %vm643, %v726, 0.0
      %v771 = vadd.f32 %v769, %v770
      %v772 = vsel %vm643, %v727, 0.0
      %v773 = vadd.f32 %v771, %v772
      %v774 = vsel %vm643, %v728, 0.0
      %v775 = vadd.f32 %v773, %v774
      %v776 = vsel %vm643, %v729, 0.0
      %v777 = vadd.f32 %v775, %v776
      %v778 = vsel %vm643, %v730, 0.0
      %v779 = vadd.f32 %v777, %v778
      %v780 = vsel %vm643, %v731, 0.0
      %v781 = vadd.f32 %v779, %v780
      %v782 = vsel %vm643, %v732, 0.0
      %v783 = vadd.f32 %v781, %v782
      %v784 = vsel %vm643, %v733, 0.0
      %v785 = vadd.f32 %v783, %v784
      %v786 = vsel %vm643, %v734, 0.0
      %v787 = vadd.f32 %v785, %v786
      %v788 = vsel %vm643, %v735, 0.0
      %v789 = vadd.f32 %v787, %v788
      %v790 = vsel %vm643, %v736, 0.0
      %v791 = vadd.f32 %v789, %v790
      %v792 = vsel %vm643, %v737, 0.0
      %v793 = vadd.f32 %v791, %v792
      %v794 = vsel %vm643, %v738, 0.0
      %v795 = vadd.f32 %v793, %v794
      %v796 = vsel %vm643, %v739, 0.0
      %v797 = vadd.f32 %v795, %v796
      %v798 = vsel %vm643, %v740, 0.0
      %v799 = vadd.f32 %v797, %v798
      %v800 = vsel %vm643, %v741, 0.0
      %v801 = vadd.f32 %v799, %v800
      %v802 = vsel %vm643, %v742, 0.0
      %v803 = vadd.f32 %v801, %v802
      %v804 = vsel %vm643, %v743, 0.0
      %v805 = vadd.f32 %v803, %v804
      %v806 = vsel %vm643, %v744, 0.0
      %v807 = vadd.f32 %v805, %v806
      %v808 = vrot.slane %v807, 4
      %v809 = vadd.f32 %v807, %v808
      %v810 = vrot.slane %v809, 2
      %v811 = vadd.f32 %v809, %v810
      %v812 = vrot.slane %v811, 1
      %v813 = vadd.f32 %v811, %v812
      %vm814 = vcmask 1040384
      %v815 = vsel %vm814, %v712, %v813
      %v817 = vsel %vm643, %v815, 0
      %819 = vmatprep.subr.mxu0 0.0
      %820 = vmatpush1.msra.mxu0 %v629
      %821 = vmatprep.subr.mxu0 0.0
      %822 = vmatpush1.msra.mxu0 %v630
      %823 = vmatprep.subr.mxu0 0.0
      %824 = vmatpush1.msra.mxu0 %v631
      %825 = vmatprep.subr.mxu0 0.0
      %826 = vmatpush1.msra.mxu0 %v632
      %827 = vmatprep.subr.mxu0 0.0
      %828 = vmatpush1.msra.mxu0 %v633
      %829 = vmatprep.subr.mxu0 0.0
      %830 = vmatpush1.msra.mxu0 %v634
      %831 = vmatprep.subr.mxu0 0.0
      %832 = vmatpush1.msra.mxu0 %v635
      %833 = vmatprep.subr.mxu0 0.0
      %834 = vmatpush1.msra.mxu0 %v636
      %835 = vmatprep.subr.mxu0 0.0
      %836 = vmatpush1.msra.mxu0 0.0
      %837 = vmatprep.subr.mxu0 0.0
      %838 = vmatpush1.msra.mxu0 0.0
      %839 = vmatprep.subr.mxu0 0.0
      %840 = vmatpush1.msra.mxu0 0.0
      %841 = vmatprep.subr.mxu0 0.0
      %842 = vmatpush1.msra.mxu0 0.0
      %843 = vmatprep.subr.mxu0 0.0
      %844 = vmatpush1.msra.mxu0 0.0
      %845 = vmatprep.subr.mxu0 0.0
      %846 = vmatpush1.msra.mxu0 0.0
      %847 = vmatprep.subr.mxu0 0.0
      %848 = vmatpush1.msra.mxu0 0.0
      %849 = vmatprep.subr.mxu0 0.0
      %850 = vmatpush1.msra.mxu0 0.0
      %851 = vmatprep.subr.mxu0 0.0
      %852 = vmatpush1.msra.mxu0 0.0
      %853 = vmatprep.subr.mxu0 0.0
      %854 = vmatpush1.msra.mxu0 0.0
      %855 = vmatprep.subr.mxu0 0.0
      %856 = vmatpush1.msra.mxu0 0.0
      %857 = vmatprep.subr.mxu0 0.0
      %858 = vmatpush1.msra.mxu0 0.0
      %859 = vmatprep.subr.mxu0 0.0
      %860 = vmatpush1.msra.mxu0 0.0
      %861 = vmatprep.subr.mxu0 0.0
      %862 = vmatpush1.msra.mxu0 0.0
      %863 = vmatprep.subr.mxu0 0.0
      %864 = vmatpush1.msra.mxu0 0.0
      %865 = vmatprep.subr.mxu0 0.0
      %866 = vmatpush1.msra.mxu0 0.0
      %867 = vmatprep.subr.mxu0 0.0
      %868 = vmatpush1.msra.mxu0 0.0
      %869 = vmatprep.subr.mxu0 0.0
      %870 = vmatpush1.msra.mxu0 0.0
      %871 = vmatprep.subr.mxu0 0.0
      %872 = vmatpush1.msra.mxu0 0.0
      %873 = vmatprep.subr.mxu0 0.0
      %874 = vmatpush1.msra.mxu0 0.0
      %875 = vmatprep.subr.mxu0 0.0
      %876 = vmatpush1.msra.mxu0 0.0
      %877 = vmatprep.subr.mxu0 0.0
      %878 = vmatpush1.msra.mxu0 0.0
      %879 = vmatprep.subr.mxu0 0.0
      %880 = vmatpush1.msra.mxu0 0.0
      %881 = vmatprep.subr.mxu0 0.0
      %882 = vmatpush1.msra.mxu0 0.0
      %883 = vmatprep.mubr.f32.mxu0 0.0
      %884 = vmatmul.mubr.f32.gmra.mrb[0].mxu0 %v817
      %v885 = vpop.f32.mrb[0].mxu0
      %v886 = vadd.f32 0.0, %v885
      %v887 = vpop.f32.mrb[0].mxu0
      %888 = vdwg.mxu0
      %v889 = vmul.f32 %v886, 0.001953125
      %v890 = vmul.f32 %v889, %v889
      %v892 = vrot.slane %v890, 7
      %v894 = vsub.f32 %v889, %v892
      %v895 = vadd.f32 %v894, 1e-05
      %v896 = vrsqrt.pop %v895
      %v897 = vsel %vm814, %v889, %v896
      %vm898 = vcmask 261120
      %v900 = vsel %vm898, %v897, 0
      %902 = vmatprep.subr.mxu0 0.0
      %903 = vmatpush1.msra.mxu0 %v637
      %904 = vmatprep.subr.mxu0 0.0
      %905 = vmatpush1.msra.mxu0 %v638
      %906 = vmatprep.subr.mxu0 0.0
      %907 = vmatpush1.msra.mxu0 %v639
      %908 = vmatprep.subr.mxu0 0.0
      %909 = vmatpush1.msra.mxu0 %v640
      %910 = vmatprep.subr.mxu0 0.0
      %911 = vmatpush1.msra.mxu0 0.0
      %912 = vmatprep.subr.mxu0 0.0
      %913 = vmatpush1.msra.mxu0 0.0
      %914 = vmatprep.subr.mxu0 0.0
      %915 = vmatpush1.msra.mxu0 0.0
      %916 = vmatprep.subr.mxu0 0.0
      %917 = vmatpush1.msra.mxu0 0.0
      %918 = vmatprep.subr.mxu0 0.0
      %919 = vmatpush1.msra.mxu0 0.0
      %920 = vmatprep.subr.mxu0 0.0
      %921 = vmatpush1.msra.mxu0 0.0
      %922 = vmatprep.subr.mxu0 0.0
      %923 = vmatpush1.msra.mxu0 0.0
      %924 = vmatprep.subr.mxu0 0.0
      %925 = vmatpush1.msra.mxu0 0.0
      %926 = vmatprep.subr.mxu0 0.0
      %927 = vmatpush1.msra.mxu0 0.0
      %928 = vmatprep.subr.mxu0 0.0
      %929 = vmatpush1.msra.mxu0 0.0
      %930 = vmatprep.subr.mxu0 0.0
      %931 = vmatpush1.msra.mxu0 0.0
      %932 = vmatprep.subr.mxu0 0.0
      %933 = vmatpush1.msra.mxu0 0.0
      %934 = vmatprep.subr.mxu0 0.0
      %935 = vmatpush1.msra.mxu0 0.0
      %936 = vmatprep.subr.mxu0 0.0
      %937 = vmatpush1.msra.mxu0 0.0
      %938 = vmatprep.subr.mxu0 0.0
      %939 = vmatpush1.msra.mxu0 0.0
      %940 = vmatprep.subr.mxu0 0.0
      %941 = vmatpush1.msra.mxu0 0.0
      %942 = vmatprep.subr.mxu0 0.0
      %943 = vmatpush1.msra.mxu0 0.0
      %944 = vmatprep.subr.mxu0 0.0
      %945 = vmatpush1.msra.mxu0 0.0
      %946 = vmatprep.subr.mxu0 0.0
      %947 = vmatpush1.msra.mxu0 0.0
      %948 = vmatprep.subr.mxu0 0.0
      %949 = vmatpush1.msra.mxu0 0.0
      %950 = vmatprep.subr.mxu0 0.0
      %951 = vmatpush1.msra.mxu0 0.0
      %952 = vmatprep.subr.mxu0 0.0
      %953 = vmatpush1.msra.mxu0 0.0
      %954 = vmatprep.subr.mxu0 0.0
      %955 = vmatpush1.msra.mxu0 0.0
      %956 = vmatprep.subr.mxu0 0.0
      %957 = vmatpush1.msra.mxu0 0.0
      %958 = vmatprep.subr.mxu0 0.0
      %959 = vmatpush1.msra.mxu0 0.0
      %960 = vmatprep.subr.mxu0 0.0
      %961 = vmatpush1.msra.mxu0 0.0
      %962 = vmatprep.subr.mxu0 0.0
      %963 = vmatpush1.msra.mxu0 0.0
      %964 = vmatprep.subr.mxu0 0.0
      %965 = vmatpush1.msra.mxu0 0.0
      %966 = vmatprep.mubr.f32.mxu0 0.0
      %967 = vmatmul.mubr.f32.gmra.mrb[0].mxu0 %v900
      %v968 = vpop.f32.mrb[0].mxu0
      %v969 = vadd.f32 0.0, %v968
      %v970 = vpop.f32.mrb[0].mxu0
      %971 = vdwg.mxu0
      %v973 = vlaneseq
      %v974 = vshrl.u32 %v973, 7
      %v975 = vsub.s32 0, %v974
      %v976 = vrot.slane %v641, %v975
      %v978 = vmul.f32 %v969, %v976
      %v980 = vrot.slane %v978, 1
      %v982 = vmul.f32 %v969, %v980
      %v983 = vsub.f32 %v642, %v982
      %v984 = vlaneseq
      %v985 = vshrl.u32 %v984, 7
      %v986 = vsub.s32 1, %v985
      %v987 = vrot.slane %v978, %v986
      %v988 = vmul.f32 %v597, %v987
      %v989 = vmul.f32 %v598, %v987
      %v990 = vmul.f32 %v599, %v987
      %v991 = vmul.f32 %v600, %v987
      %v992 = vmul.f32 %v601, %v987
      %v993 = vmul.f32 %v602, %v987
      %v994 = vmul.f32 %v603, %v987
      %v995 = vmul.f32 %v604, %v987
      %v996 = vmul.f32 %v605, %v987
      %v997 = vmul.f32 %v606, %v987
      %v998 = vmul.f32 %v607, %v987
      %v999 = vmul.f32 %v608, %v987
      %v1000 = vmul.f32 %v609, %v987
      %v1001 = vmul.f32 %v610, %v987
      %v1002 = vmul.f32 %v611, %v987
      %v1003 = vmul.f32 %v612, %v987
      %v1004 = vmul.f32 %v613, %v987
      %v1005 = vmul.f32 %v614, %v987
      %v1006 = vmul.f32 %v615, %v987
      %v1007 = vmul.f32 %v616, %v987
      %v1008 = vmul.f32 %v617, %v987
      %v1009 = vmul.f32 %v618, %v987
      %v1010 = vmul.f32 %v619, %v987
      %v1011 = vmul.f32 %v620, %v987
      %v1012 = vmul.f32 %v621, %v987
      %v1013 = vmul.f32 %v622, %v987
      %v1014 = vmul.f32 %v623, %v987
      %v1015 = vmul.f32 %v624, %v987
      %v1016 = vmul.f32 %v625, %v987
      %v1017 = vmul.f32 %v626, %v987
      %v1018 = vmul.f32 %v627, %v987
      %v1019 = vmul.f32 %v628, %v987
      %v1021 = vlaneseq
      %v1022 = vshrl.u32 %v1021, 7
      %v1023 = vsub.s32 0, %v1022
      %v1024 = vrot.slane %v983, %v1023
      %v1026 = vadd.f32 %v988, %v1024
      %v1027 = vadd.f32 %v989, %v1024
      %v1028 = vadd.f32 %v990, %v1024
      %v1029 = vadd.f32 %v991, %v1024
      %v1030 = vadd.f32 %v992, %v1024
      %v1031 = vadd.f32 %v993, %v1024
      %v1032 = vadd.f32 %v994, %v1024
      %v1033 = vadd.f32 %v995, %v1024
      %v1034 = vadd.f32 %v996, %v1024
      %v1035 = vadd.f32 %v997, %v1024
      %v1036 = vadd.f32 %v998, %v1024
      %v1037 = vadd.f32 %v999, %v1024
      %v1038 = vadd.f32 %v1000, %v1024
      %v1039 = vadd.f32 %v1001, %v1024
      %v1040 = vadd.f32 %v1002, %v1024
      %v1041 = vadd.f32 %v1003, %v1024
      %v1042 = vadd.f32 %v1004, %v1024
      %v1043 = vadd.f32 %v1005, %v1024
      %v1044 = vadd.f32 %v1006, %v1024
      %v1045 = vadd.f32 %v1007, %v1024
      %v1046 = vadd.f32 %v1008, %v1024
      %v1047 = vadd.f32 %v1009, %v1024
      %v1048 = vadd.f32 %v1010, %v1024
      %v1049 = vadd.f32 %v1011, %v1024
      %v1050 = vadd.f32 %v1012, %v1024
      %v1051 = vadd.f32 %v1013, %v1024
      %v1052 = vadd.f32 %v1014, %v1024
      %v1053 = vadd.f32 %v1015, %v1024
      %v1054 = vadd.f32 %v1016, %v1024
      %v1055 = vadd.f32 %v1017, %v1024
      %v1056 = vadd.f32 %v1018, %v1024
      %v1057 = vadd.f32 %v1019, %v1024
      %v1058 = vmax.f32 %v1026, 0.0
      %v1059 = vmax.f32 %v1027, 0.0
      %v1060 = vmax.f32 %v1028, 0.0
      %v1061 = vmax.f32 %v1029, 0.0
      %v1062 = vmax.f32 %v1030, 0.0
      %v1063 = vmax.f32 %v1031, 0.0
      %v1064 = vmax.f32 %v1032, 0.0
      %v1065 = vmax.f32 %v1033, 0.0
      %v1066 = vmax.f32 %v1034, 0.0
      %v1067 = vmax.f32 %v1035, 0.0
      %v1068 = vmax.f32 %v1036, 0.0
      %v1069 = vmax.f32 %v1037, 0.0
      %v1070 = vmax.f32 %v1038, 0.0
      %v1071 = vmax.f32 %v1039, 0.0
      %v1072 = vmax.f32 %v1040, 0.0
      %v1073 = vmax.f32 %v1041, 0.0
      %v1074 = vmax.f32 %v1042, 0.0
      %v1075 = vmax.f32 %v1043, 0.0
      %v1076 = vmax.f32 %v1044, 0.0
      %v1077 = vmax.f32 %v1045, 0.0
      %v1078 = vmax.f32 %v1046, 0.0
      %v1079 = vmax.f32 %v1047, 0.0
      %v1080 = vmax.f32 %v1048, 0.0
      %v1081 = vmax.f32 %v1049, 0.0
      %v1082 = vmax.f32 %v1050, 0.0
      %v1083 = vmax.f32 %v1051, 0.0
      %v1084 = vmax.f32 %v1052, 0.0
      %v1085 = vmax.f32 %v1053, 0.0
      %v1086 = vmax.f32 %v1054, 0.0
      %v1087 = vmax.f32 %v1055, 0.0
      %v1088 = vmax.f32 %v1056, 0.0
      %v1089 = vmax.f32 %v1057, 0.0
      %v1090 = vpack.c.bf16 %v1059, %v1058
      %v1091 = vpack.c.bf16 %v1061, %v1060
      %v1092 = vpack.c.bf16 %v1063, %v1062
      %v1093 = vpack.c.bf16 %v1065, %v1064
      %v1094 = vpack.c.bf16 %v1067, %v1066
      %v1095 = vpack.c.bf16 %v1069, %v1068
      %v1096 = vpack.c.bf16 %v1071, %v1070
      %v1097 = vpack.c.bf16 %v1073, %v1072
      %v1098 = vpack.c.bf16 %v1075, %v1074
      %v1099 = vpack.c.bf16 %v1077, %v1076
      %v1100 = vpack.c.bf16 %v1079, %v1078
      %v1101 = vpack.c.bf16 %v1081, %v1080
      %v1102 = vpack.c.bf16 %v1083, %v1082
      %v1103 = vpack.c.bf16 %v1085, %v1084
      %v1104 = vpack.c.bf16 %v1087, %v1086
      %v1105 = vpack.c.bf16 %v1089, %v1088
      %v1106 = vld [vmem:[%s4] sm:$0xf]
      %v1107 = vld [vmem:[%s4 + $0x4] sm:$0xf]
      %v1108 = vld [vmem:[%s4 + $0x8] sm:$0xf]
      %v1109 = vld [vmem:[%s4 + $0xc] sm:$0xf]
      %v1110 = vld [vmem:[%s4 + $0x10] sm:$0xf]
      %v1111 = vld [vmem:[%s4 + $0x14] sm:$0xf]
      %v1112 = vld [vmem:[%s4 + $0x18] sm:$0xf]
      %v1113 = vld [vmem:[%s4 + $0x1c] sm:$0xf]
      %v1114 = vld [vmem:[%s5] sm:$0x1]
      %v1116 = vlaneseq
      %v1117 = vshrl.u32 %v1116, 7
      %v1118 = vsub.s32 0, %v1117
      %v1119 = vrot.slane %v1114, %v1118
      %v1129 = vunpack.c.l.b16 %v1106
      %v1130 = vunpack.c.l.b16 %v1107
      %v1131 = vunpack.c.l.b16 %v1108
      %v1132 = vunpack.c.l.b16 %v1109
      %v1133 = vunpack.c.l.b16 %v1110
      %v1134 = vunpack.c.l.b16 %v1111
      %v1135 = vunpack.c.l.b16 %v1112
      %v1136 = vunpack.c.l.b16 %v1113
      %v1137 = vpack.c.b16 %v1130, %v1129
      %v1138 = vpack.c.b16 %v1132, %v1131
      %v1139 = vpack.c.b16 %v1134, %v1133
      %v1140 = vpack.c.b16 %v1136, %v1135
      %v1146 = vsel %vm643, %v1090, 0
      %v1149 = vsel %vm643, %v1091, 0
      %v1152 = vsel %vm643, %v1092, 0
      %v1155 = vsel %vm643, %v1093, 0
      %v1158 = vsel %vm643, %v1094, 0
      %v1161 = vsel %vm643, %v1095, 0
      %v1164 = vsel %vm643, %v1096, 0
      %v1167 = vsel %vm643, %v1097, 0
      %v1170 = vsel %vm643, %v1098, 0
      %v1173 = vsel %vm643, %v1099, 0
      %v1176 = vsel %vm643, %v1100, 0
      %v1179 = vsel %vm643, %v1101, 0
      %v1182 = vsel %vm643, %v1102, 0
      %v1185 = vsel %vm643, %v1103, 0
      %v1188 = vsel %vm643, %v1104, 0
      %v1191 = vsel %vm643, %v1105, 0
      %1193 = vmatprep.subr.bf16.mxu0 0
      %1194 = vmatpush1.bf16.msra.mxu0 %v1137
      %1195 = vmatprep.subr.bf16.mxu0 0
      %1196 = vmatpush1.bf16.msra.mxu0 %v1138
      %1197 = vmatprep.subr.bf16.mxu0 0
      %1198 = vmatpush1.bf16.msra.mxu0 %v1139
      %1199 = vmatprep.subr.bf16.mxu0 0
      %1200 = vmatpush1.bf16.msra.mxu0 %v1140
      %1201 = vmatprep.subr.bf16.mxu0 0
      %1202 = vmatpush1.bf16.msra.mxu0 0
      %1203 = vmatprep.subr.bf16.mxu0 0
      %1204 = vmatpush1.bf16.msra.mxu0 0
      %1205 = vmatprep.subr.bf16.mxu0 0
      %1206 = vmatpush1.bf16.msra.mxu0 0
      %1207 = vmatprep.subr.bf16.mxu0 0
      %1208 = vmatpush1.bf16.msra.mxu0 0
      %1209 = vmatprep.subr.bf16.mxu0 0
      %1210 = vmatpush1.bf16.msra.mxu0 0
      %1211 = vmatprep.subr.bf16.mxu0 0
      %1212 = vmatpush1.bf16.msra.mxu0 0
      %1213 = vmatprep.subr.bf16.mxu0 0
      %1214 = vmatpush1.bf16.msra.mxu0 0
      %1215 = vmatprep.subr.bf16.mxu0 0
      %1216 = vmatpush1.bf16.msra.mxu0 0
      %1217 = vmatprep.subr.bf16.mxu0 0
      %1218 = vmatpush1.bf16.msra.mxu0 0
      %1219 = vmatprep.subr.bf16.mxu0 0
      %1220 = vmatpush1.bf16.msra.mxu0 0
      %1221 = vmatprep.subr.bf16.mxu0 0
      %1222 = vmatpush1.bf16.msra.mxu0 0
      %1223 = vmatprep.subr.bf16.mxu0 0
      %1224 = vmatpush1.bf16.msra.mxu0 0
      %1225 = vmatprep.mubr.bf16.mxu0 0
      %1226 = vmatmul.mubr.bf16.gmra.mrb[0].mxu0 %v1146
      %v1227 = vpop.f32.mrb[0].mxu0
      %v1228 = vadd.f32 %v1119, %v1227
      %v1229 = vpop.f32.mrb[0].mxu0
      %v1230 = vpop.f32.mrb[0].mxu0
      %v1231 = vadd.f32 %v1119, %v1230
      %v1232 = vpop.f32.mrb[0].mxu0
      %1233 = vmatprep.mubr.bf16.mxu0 0
      %1234 = vmatmul.mubr.bf16.gmra.mrb[0].mxu0 %v1149
      %v1235 = vpop.f32.mrb[0].mxu0
      %v1236 = vadd.f32 %v1119, %v1235
      %v1237 = vpop.f32.mrb[0].mxu0
      %v1238 = vpop.f32.mrb[0].mxu0
      %v1239 = vadd.f32 %v1119, %v1238
      %v1240 = vpop.f32.mrb[0].mxu0
      %1241 = vmatprep.mubr.bf16.mxu0 0
      %1242 = vmatmul.mubr.bf16.gmra.mrb[0].mxu0 %v1152
      %v1243 = vpop.f32.mrb[0].mxu0
      %v1244 = vadd.f32 %v1119, %v1243
      %v1245 = vpop.f32.mrb[0].mxu0
      %v1246 = vpop.f32.mrb[0].mxu0
      %v1247 = vadd.f32 %v1119, %v1246
      %v1248 = vpop.f32.mrb[0].mxu0
      %1249 = vmatprep.mubr.bf16.mxu0 0
      %1250 = vmatmul.mubr.bf16.gmra.mrb[0].mxu0 %v1155
      %v1251 = vpop.f32.mrb[0].mxu0
      %v1252 = vadd.f32 %v1119, %v1251
      %v1253 = vpop.f32.mrb[0].mxu0
      %v1254 = vpop.f32.mrb[0].mxu0
      %v1255 = vadd.f32 %v1119, %v1254
      %v1256 = vpop.f32.mrb[0].mxu0
      %1257 = vmatprep.mubr.bf16.mxu0 0
      %1258 = vmatmul.mubr.bf16.gmra.mrb[0].mxu0 %v1158
      %v1259 = vpop.f32.mrb[0].mxu0
      %v1260 = vadd.f32 %v1119, %v1259
      %v1261 = vpop.f32.mrb[0].mxu0
      %v1262 = vpop.f32.mrb[0].mxu0
      %v1263 = vadd.f32 %v1119, %v1262
      %v1264 = vpop.f32.mrb[0].mxu0
      %1265 = vmatprep.mubr.bf16.mxu0 0
      %1266 = vmatmul.mubr.bf16.gmra.mrb[0].mxu0 %v1161
      %v1267 = vpop.f32.mrb[0].mxu0
      %v1268 = vadd.f32 %v1119, %v1267
      %v1269 = vpop.f32.mrb[0].mxu0
      %v1270 = vpop.f32.mrb[0].mxu0
      %v1271 = vadd.f32 %v1119, %v1270
      %v1272 = vpop.f32.mrb[0].mxu0
      %1273 = vmatprep.mubr.bf16.mxu0 0
      %1274 = vmatmul.mubr.bf16.gmra.mrb[0].mxu0 %v1164
      %v1275 = vpop.f32.mrb[0].mxu0
      %v1276 = vadd.f32 %v1119, %v1275
      %v1277 = vpop.f32.mrb[0].mxu0
      %v1278 = vpop.f32.mrb[0].mxu0
      %v1279 = vadd.f32 %v1119, %v1278
      %v1280 = vpop.f32.mrb[0].mxu0
      %1281 = vmatprep.mubr.bf16.mxu0 0
      %1282 = vmatmul.mubr.bf16.gmra.mrb[0].mxu0 %v1167
      %v1283 = vpop.f32.mrb[0].mxu0
      %v1284 = vadd.f32 %v1119, %v1283
      %v1285 = vpop.f32.mrb[0].mxu0
      %v1286 = vpop.f32.mrb[0].mxu0
      %v1287 = vadd.f32 %v1119, %v1286
      %v1288 = vpop.f32.mrb[0].mxu0
      %1289 = vmatprep.mubr.bf16.mxu0 0
      %1290 = vmatmul.mubr.bf16.gmra.mrb[0].mxu0 %v1170
      %v1291 = vpop.f32.mrb[0].mxu0
      %v1292 = vadd.f32 %v1119, %v1291
      %v1293 = vpop.f32.mrb[0].mxu0
      %v1294 = vpop.f32.mrb[0].mxu0
      %v1295 = vadd.f32 %v1119, %v1294
      %v1296 = vpop.f32.mrb[0].mxu0
      %1297 = vmatprep.mubr.bf16.mxu0 0
      %1298 = vmatmul.mubr.bf16.gmra.mrb[0].mxu0 %v1173
      %v1299 = vpop.f32.mrb[0].mxu0
      %v1300 = vadd.f32 %v1119, %v1299
      %v1301 = vpop.f32.mrb[0].mxu0
      %v1302 = vpop.f32.mrb[0].mxu0
      %v1303 = vadd.f32 %v1119, %v1302
      %v1304 = vpop.f32.mrb[0].mxu0
      %1305 = vmatprep.mubr.bf16.mxu0 0
      %1306 = vmatmul.mubr.bf16.gmra.mrb[0].mxu0 %v1176
      %v1307 = vpop.f32.mrb[0].mxu0
      %v1308 = vadd.f32 %v1119, %v1307
      %v1309 = vpop.f32.mrb[0].mxu0
      %v1310 = vpop.f32.mrb[0].mxu0
      %v1311 = vadd.f32 %v1119, %v1310
      %v1312 = vpop.f32.mrb[0].mxu0
      %1313 = vmatprep.mubr.bf16.mxu0 0
      %1314 = vmatmul.mubr.bf16.gmra.mrb[0].mxu0 %v1179
      %v1315 = vpop.f32.mrb[0].mxu0
      %v1316 = vadd.f32 %v1119, %v1315
      %v1317 = vpop.f32.mrb[0].mxu0
      %v1318 = vpop.f32.mrb[0].mxu0
      %v1319 = vadd.f32 %v1119, %v1318
      %v1320 = vpop.f32.mrb[0].mxu0
      %1321 = vmatprep.mubr.bf16.mxu0 0
      %1322 = vmatmul.mubr.bf16.gmra.mrb[0].mxu0 %v1182
      %v1323 = vpop.f32.mrb[0].mxu0
      %v1324 = vadd.f32 %v1119, %v1323
      %v1325 = vpop.f32.mrb[0].mxu0
      %v1326 = vpop.f32.mrb[0].mxu0
      %v1327 = vadd.f32 %v1119, %v1326
      %v1328 = vpop.f32.mrb[0].mxu0
      %1329 = vmatprep.mubr.bf16.mxu0 0
      %1330 = vmatmul.mubr.bf16.gmra.mrb[0].mxu0 %v1185
      %v1331 = vpop.f32.mrb[0].mxu0
      %v1332 = vadd.f32 %v1119, %v1331
      %v1333 = vpop.f32.mrb[0].mxu0
      %v1334 = vpop.f32.mrb[0].mxu0
      %v1335 = vadd.f32 %v1119, %v1334
      %v1336 = vpop.f32.mrb[0].mxu0
      %1337 = vmatprep.mubr.bf16.mxu0 0
      %1338 = vmatmul.mubr.bf16.gmra.mrb[0].mxu0 %v1188
      %v1339 = vpop.f32.mrb[0].mxu0
      %v1340 = vadd.f32 %v1119, %v1339
      %v1341 = vpop.f32.mrb[0].mxu0
      %v1342 = vpop.f32.mrb[0].mxu0
      %v1343 = vadd.f32 %v1119, %v1342
      %v1344 = vpop.f32.mrb[0].mxu0
      %1345 = vmatprep.mubr.bf16.mxu0 0
      %1346 = vmatmul.mubr.bf16.gmra.mrb[0].mxu0 %v1191
      %v1347 = vpop.f32.mrb[0].mxu0
      %v1348 = vadd.f32 %v1119, %v1347
      %v1349 = vpop.f32.mrb[0].mxu0
      %v1350 = vpop.f32.mrb[0].mxu0
      %v1351 = vadd.f32 %v1119, %v1350
      %v1352 = vpop.f32.mrb[0].mxu0
      %1353 = vdwg.mxu0
      %v1354 = vld [vmem:[%s16] sm:$0xff]
      %v1355 = vld [vmem:[%s16 + $0x8] sm:$0xff]
      %v1356 = vld [vmem:[%s16 + $0x10] sm:$0xff]
      %v1357 = vld [vmem:[%s16 + $0x18] sm:$0xff]
      %v1358 = vld [vmem:[%s17] sm:$0xff]
      %v1359 = vld [vmem:[%s17 + $0x8] sm:$0xff]
      %v1360 = vld [vmem:[%s17 + $0x10] sm:$0xff]
      %v1361 = vld [vmem:[%s17 + $0x18] sm:$0xff]
      %v1362 = vld [vmem:[%s6] sm:$0x1]
      %v1363 = vld [vmem:[%s7] sm:$0x1]
      %v1364 = vsel %vm898, %v1228, 0.0
      %v1365 = vsel %vm898, %v1231, 0.0
      %v1366 = vadd.f32 %v1364, %v1365
      %v1367 = vsel %vm898, %v1236, 0.0
      %v1368 = vadd.f32 %v1366, %v1367
      %v1369 = vsel %vm898, %v1239, 0.0
      %v1370 = vadd.f32 %v1368, %v1369
      %v1371 = vsel %vm898, %v1244, 0.0
      %v1372 = vadd.f32 %v1370, %v1371
      %v1373 = vsel %vm898, %v1247, 0.0
      %v1374 = vadd.f32 %v1372, %v1373
      %v1375 = vsel %vm898, %v1252, 0.0
      %v1376 = vadd.f32 %v1374, %v1375
      %v1377 = vsel %vm898, %v1255, 0.0
      %v1378 = vadd.f32 %v1376, %v1377
      %v1379 = vsel %vm898, %v1260, 0.0
      %v1380 = vadd.f32 %v1378, %v1379
      %v1381 = vsel %vm898, %v1263, 0.0
      %v1382 = vadd.f32 %v1380, %v1381
      %v1383 = vsel %vm898, %v1268, 0.0
      %v1384 = vadd.f32 %v1382, %v1383
      %v1385 = vsel %vm898, %v1271, 0.0
      %v1386 = vadd.f32 %v1384, %v1385
      %v1387 = vsel %vm898, %v1276, 0.0
      %v1388 = vadd.f32 %v1386, %v1387
      %v1389 = vsel %vm898, %v1279, 0.0
      %v1390 = vadd.f32 %v1388, %v1389
      %v1391 = vsel %vm898, %v1284, 0.0
      %v1392 = vadd.f32 %v1390, %v1391
      %v1393 = vsel %vm898, %v1287, 0.0
      %v1394 = vadd.f32 %v1392, %v1393
      %v1395 = vsel %vm898, %v1292, 0.0
      %v1396 = vadd.f32 %v1394, %v1395
      %v1397 = vsel %vm898, %v1295, 0.0
      %v1398 = vadd.f32 %v1396, %v1397
      %v1399 = vsel %vm898, %v1300, 0.0
      %v1400 = vadd.f32 %v1398, %v1399
      %v1401 = vsel %vm898, %v1303, 0.0
      %v1402 = vadd.f32 %v1400, %v1401
      %v1403 = vsel %vm898, %v1308, 0.0
      %v1404 = vadd.f32 %v1402, %v1403
      %v1405 = vsel %vm898, %v1311, 0.0
      %v1406 = vadd.f32 %v1404, %v1405
      %v1407 = vsel %vm898, %v1316, 0.0
      %v1408 = vadd.f32 %v1406, %v1407
      %v1409 = vsel %vm898, %v1319, 0.0
      %v1410 = vadd.f32 %v1408, %v1409
      %v1411 = vsel %vm898, %v1324, 0.0
      %v1412 = vadd.f32 %v1410, %v1411
      %v1413 = vsel %vm898, %v1327, 0.0
      %v1414 = vadd.f32 %v1412, %v1413
      %v1415 = vsel %vm898, %v1332, 0.0
      %v1416 = vadd.f32 %v1414, %v1415
      %v1417 = vsel %vm898, %v1335, 0.0
      %v1418 = vadd.f32 %v1416, %v1417
      %v1419 = vsel %vm898, %v1340, 0.0
      %v1420 = vadd.f32 %v1418, %v1419
      %v1421 = vsel %vm898, %v1343, 0.0
      %v1422 = vadd.f32 %v1420, %v1421
      %v1423 = vsel %vm898, %v1348, 0.0
      %v1424 = vadd.f32 %v1422, %v1423
      %v1425 = vsel %vm898, %v1351, 0.0
      %v1426 = vadd.f32 %v1424, %v1425
      %v1427 = vrot.slane %v1426, 4
      %v1428 = vadd.f32 %v1426, %v1427
      %v1429 = vrot.slane %v1428, 2
      %v1430 = vadd.f32 %v1428, %v1429
      %v1431 = vrot.slane %v1430, 1
      %v1432 = vadd.f32 %v1430, %v1431
      %v1433 = vmul.f32 %v1228, %v1228
      %v1434 = vmul.f32 %v1231, %v1231
      %v1435 = vmul.f32 %v1236, %v1236
      %v1436 = vmul.f32 %v1239, %v1239
      %v1437 = vmul.f32 %v1244, %v1244
      %v1438 = vmul.f32 %v1247, %v1247
      %v1439 = vmul.f32 %v1252, %v1252
      %v1440 = vmul.f32 %v1255, %v1255
      %v1441 = vmul.f32 %v1260, %v1260
      %v1442 = vmul.f32 %v1263, %v1263
      %v1443 = vmul.f32 %v1268, %v1268
      %v1444 = vmul.f32 %v1271, %v1271
      %v1445 = vmul.f32 %v1276, %v1276
      %v1446 = vmul.f32 %v1279, %v1279
      %v1447 = vmul.f32 %v1284, %v1284
      %v1448 = vmul.f32 %v1287, %v1287
      %v1449 = vmul.f32 %v1292, %v1292
      %v1450 = vmul.f32 %v1295, %v1295
      %v1451 = vmul.f32 %v1300, %v1300
      %v1452 = vmul.f32 %v1303, %v1303
      %v1453 = vmul.f32 %v1308, %v1308
      %v1454 = vmul.f32 %v1311, %v1311
      %v1455 = vmul.f32 %v1316, %v1316
      %v1456 = vmul.f32 %v1319, %v1319
      %v1457 = vmul.f32 %v1324, %v1324
      %v1458 = vmul.f32 %v1327, %v1327
      %v1459 = vmul.f32 %v1332, %v1332
      %v1460 = vmul.f32 %v1335, %v1335
      %v1461 = vmul.f32 %v1340, %v1340
      %v1462 = vmul.f32 %v1343, %v1343
      %v1463 = vmul.f32 %v1348, %v1348
      %v1464 = vmul.f32 %v1351, %v1351
      %v1465 = vsel %vm898, %v1433, 0.0
      %v1466 = vsel %vm898, %v1434, 0.0
      %v1467 = vadd.f32 %v1465, %v1466
      %v1468 = vsel %vm898, %v1435, 0.0
      %v1469 = vadd.f32 %v1467, %v1468
      %v1470 = vsel %vm898, %v1436, 0.0
      %v1471 = vadd.f32 %v1469, %v1470
      %v1472 = vsel %vm898, %v1437, 0.0
      %v1473 = vadd.f32 %v1471, %v1472
      %v1474 = vsel %vm898, %v1438, 0.0
      %v1475 = vadd.f32 %v1473, %v1474
      %v1476 = vsel %vm898, %v1439, 0.0
      %v1477 = vadd.f32 %v1475, %v1476
      %v1478 = vsel %vm898, %v1440, 0.0
      %v1479 = vadd.f32 %v1477, %v1478
      %v1480 = vsel %vm898, %v1441, 0.0
      %v1481 = vadd.f32 %v1479, %v1480
      %v1482 = vsel %vm898, %v1442, 0.0
      %v1483 = vadd.f32 %v1481, %v1482
      %v1484 = vsel %vm898, %v1443, 0.0
      %v1485 = vadd.f32 %v1483, %v1484
      %v1486 = vsel %vm898, %v1444, 0.0
      %v1487 = vadd.f32 %v1485, %v1486
      %v1488 = vsel %vm898, %v1445, 0.0
      %v1489 = vadd.f32 %v1487, %v1488
      %v1490 = vsel %vm898, %v1446, 0.0
      %v1491 = vadd.f32 %v1489, %v1490
      %v1492 = vsel %vm898, %v1447, 0.0
      %v1493 = vadd.f32 %v1491, %v1492
      %v1494 = vsel %vm898, %v1448, 0.0
      %v1495 = vadd.f32 %v1493, %v1494
      %v1496 = vsel %vm898, %v1449, 0.0
      %v1497 = vadd.f32 %v1495, %v1496
      %v1498 = vsel %vm898, %v1450, 0.0
      %v1499 = vadd.f32 %v1497, %v1498
      %v1500 = vsel %vm898, %v1451, 0.0
      %v1501 = vadd.f32 %v1499, %v1500
      %v1502 = vsel %vm898, %v1452, 0.0
      %v1503 = vadd.f32 %v1501, %v1502
      %v1504 = vsel %vm898, %v1453, 0.0
      %v1505 = vadd.f32 %v1503, %v1504
      %v1506 = vsel %vm898, %v1454, 0.0
      %v1507 = vadd.f32 %v1505, %v1506
      %v1508 = vsel %vm898, %v1455, 0.0
      %v1509 = vadd.f32 %v1507, %v1508
      %v1510 = vsel %vm898, %v1456, 0.0
      %v1511 = vadd.f32 %v1509, %v1510
      %v1512 = vsel %vm898, %v1457, 0.0
      %v1513 = vadd.f32 %v1511, %v1512
      %v1514 = vsel %vm898, %v1458, 0.0
      %v1515 = vadd.f32 %v1513, %v1514
      %v1516 = vsel %vm898, %v1459, 0.0
      %v1517 = vadd.f32 %v1515, %v1516
      %v1518 = vsel %vm898, %v1460, 0.0
      %v1519 = vadd.f32 %v1517, %v1518
      %v1520 = vsel %vm898, %v1461, 0.0
      %v1521 = vadd.f32 %v1519, %v1520
      %v1522 = vsel %vm898, %v1462, 0.0
      %v1523 = vadd.f32 %v1521, %v1522
      %v1524 = vsel %vm898, %v1463, 0.0
      %v1525 = vadd.f32 %v1523, %v1524
      %v1526 = vsel %vm898, %v1464, 0.0
      %v1527 = vadd.f32 %v1525, %v1526
      %v1528 = vrot.slane %v1527, 4
      %v1529 = vadd.f32 %v1527, %v1528
      %v1530 = vrot.slane %v1529, 2
      %v1531 = vadd.f32 %v1529, %v1530
      %v1532 = vrot.slane %v1531, 1
      %v1533 = vadd.f32 %v1531, %v1532
      %v1534 = vsel %vm814, %v1432, %v1533
      %v1536 = vsel %vm898, %v1534, 0
      %1538 = vmatprep.subr.mxu0 0.0
      %1539 = vmatpush1.msra.mxu0 %v1354
      %1540 = vmatprep.subr.mxu0 0.0
      %1541 = vmatpush1.msra.mxu0 %v1355
      %1542 = vmatprep.subr.mxu0 0.0
      %1543 = vmatpush1.msra.mxu0 %v1356
      %1544 = vmatprep.subr.mxu0 0.0
      %1545 = vmatpush1.msra.mxu0 %v1357
      %1546 = vmatprep.subr.mxu0 0.0
      %1547 = vmatpush1.msra.mxu0 0.0
      %1548 = vmatprep.subr.mxu0 0.0
      %1549 = vmatpush1.msra.mxu0 0.0
      %1550 = vmatprep.subr.mxu0 0.0
      %1551 = vmatpush1.msra.mxu0 0.0
      %1552 = vmatprep.subr.mxu0 0.0
      %1553 = vmatpush1.msra.mxu0 0.0
      %1554 = vmatprep.subr.mxu0 0.0
      %1555 = vmatpush1.msra.mxu0 0.0
      %1556 = vmatprep.subr.mxu0 0.0
      %1557 = vmatpush1.msra.mxu0 0.0
      %1558 = vmatprep.subr.mxu0 0.0
      %1559 = vmatpush1.msra.mxu0 0.0
      %1560 = vmatprep.subr.mxu0 0.0
      %1561 = vmatpush1.msra.mxu0 0.0
      %1562 = vmatprep.subr.mxu0 0.0
      %1563 = vmatpush1.msra.mxu0 0.0
      %1564 = vmatprep.subr.mxu0 0.0
      %1565 = vmatpush1.msra.mxu0 0.0
      %1566 = vmatprep.subr.mxu0 0.0
      %1567 = vmatpush1.msra.mxu0 0.0
      %1568 = vmatprep.subr.mxu0 0.0
      %1569 = vmatpush1.msra.mxu0 0.0
      %1570 = vmatprep.subr.mxu0 0.0
      %1571 = vmatpush1.msra.mxu0 0.0
      %1572 = vmatprep.subr.mxu0 0.0
      %1573 = vmatpush1.msra.mxu0 0.0
      %1574 = vmatprep.subr.mxu0 0.0
      %1575 = vmatpush1.msra.mxu0 0.0
      %1576 = vmatprep.subr.mxu0 0.0
      %1577 = vmatpush1.msra.mxu0 0.0
      %1578 = vmatprep.subr.mxu0 0.0
      %1579 = vmatpush1.msra.mxu0 0.0
      %1580 = vmatprep.subr.mxu0 0.0
      %1581 = vmatpush1.msra.mxu0 0.0
      %1582 = vmatprep.subr.mxu0 0.0
      %1583 = vmatpush1.msra.mxu0 0.0
      %1584 = vmatprep.subr.mxu0 0.0
      %1585 = vmatpush1.msra.mxu0 0.0
      %1586 = vmatprep.subr.mxu0 0.0
      %1587 = vmatpush1.msra.mxu0 0.0
      %1588 = vmatprep.subr.mxu0 0.0
      %1589 = vmatpush1.msra.mxu0 0.0
      %1590 = vmatprep.subr.mxu0 0.0
      %1591 = vmatpush1.msra.mxu0 0.0
      %1592 = vmatprep.subr.mxu0 0.0
      %1593 = vmatpush1.msra.mxu0 0.0
      %1594 = vmatprep.subr.mxu0 0.0
      %1595 = vmatpush1.msra.mxu0 0.0
      %1596 = vmatprep.subr.mxu0 0.0
      %1597 = vmatpush1.msra.mxu0 0.0
      %1598 = vmatprep.subr.mxu0 0.0
      %1599 = vmatpush1.msra.mxu0 0.0
      %1600 = vmatprep.subr.mxu0 0.0
      %1601 = vmatpush1.msra.mxu0 0.0
      %1602 = vmatprep.mubr.f32.mxu0 0.0
      %1603 = vmatmul.mubr.f32.gmra.mrb[0].mxu0 %v1536
      %v1604 = vpop.f32.mrb[0].mxu0
      %v1605 = vadd.f32 0.0, %v1604
      %v1606 = vpop.f32.mrb[0].mxu0
      %1607 = vdwg.mxu0
      %v1608 = vmul.f32 %v1605, 0.00390625
      %v1609 = vmul.f32 %v1608, %v1608
      %v1611 = vrot.slane %v1609, 7
      %v1613 = vsub.f32 %v1608, %v1611
      %v1614 = vadd.f32 %v1613, 1e-05
      %v1615 = vrsqrt.pop %v1614
      %v1616 = vsel %vm814, %v1608, %v1615
      %v1618 = vsel %vm898, %v1616, 0
      %1620 = vmatprep.subr.mxu0 0.0
      %1621 = vmatpush1.msra.mxu0 %v1358
      %1622 = vmatprep.subr.mxu0 0.0
      %1623 = vmatpush1.msra.mxu0 %v1359
      %1624 = vmatprep.subr.mxu0 0.0
      %1625 = vmatpush1.msra.mxu0 %v1360
      %1626 = vmatprep.subr.mxu0 0.0
      %1627 = vmatpush1.msra.mxu0 %v1361
      %1628 = vmatprep.subr.mxu0 0.0
      %1629 = vmatpush1.msra.mxu0 0.0
      %1630 = vmatprep.subr.mxu0 0.0
      %1631 = vmatpush1.msra.mxu0 0.0
      %1632 = vmatprep.subr.mxu0 0.0
      %1633 = vmatpush1.msra.mxu0 0.0
      %1634 = vmatprep.subr.mxu0 0.0
      %1635 = vmatpush1.msra.mxu0 0.0
      %1636 = vmatprep.subr.mxu0 0.0
      %1637 = vmatpush1.msra.mxu0 0.0
      %1638 = vmatprep.subr.mxu0 0.0
      %1639 = vmatpush1.msra.mxu0 0.0
      %1640 = vmatprep.subr.mxu0 0.0
      %1641 = vmatpush1.msra.mxu0 0.0
      %1642 = vmatprep.subr.mxu0 0.0
      %1643 = vmatpush1.msra.mxu0 0.0
      %1644 = vmatprep.subr.mxu0 0.0
      %1645 = vmatpush1.msra.mxu0 0.0
      %1646 = vmatprep.subr.mxu0 0.0
      %1647 = vmatpush1.msra.mxu0 0.0
      %1648 = vmatprep.subr.mxu0 0.0
      %1649 = vmatpush1.msra.mxu0 0.0
      %1650 = vmatprep.subr.mxu0 0.0
      %1651 = vmatpush1.msra.mxu0 0.0
      %1652 = vmatprep.subr.mxu0 0.0
      %1653 = vmatpush1.msra.mxu0 0.0
      %1654 = vmatprep.subr.mxu0 0.0
      %1655 = vmatpush1.msra.mxu0 0.0
      %1656 = vmatprep.subr.mxu0 0.0
      %1657 = vmatpush1.msra.mxu0 0.0
      %1658 = vmatprep.subr.mxu0 0.0
      %1659 = vmatpush1.msra.mxu0 0.0
      %1660 = vmatprep.subr.mxu0 0.0
      %1661 = vmatpush1.msra.mxu0 0.0
      %1662 = vmatprep.subr.mxu0 0.0
      %1663 = vmatpush1.msra.mxu0 0.0
      %1664 = vmatprep.subr.mxu0 0.0
      %1665 = vmatpush1.msra.mxu0 0.0
      %1666 = vmatprep.subr.mxu0 0.0
      %1667 = vmatpush1.msra.mxu0 0.0
      %1668 = vmatprep.subr.mxu0 0.0
      %1669 = vmatpush1.msra.mxu0 0.0
      %1670 = vmatprep.subr.mxu0 0.0
      %1671 = vmatpush1.msra.mxu0 0.0
      %1672 = vmatprep.subr.mxu0 0.0
      %1673 = vmatpush1.msra.mxu0 0.0
      %1674 = vmatprep.subr.mxu0 0.0
      %1675 = vmatpush1.msra.mxu0 0.0
      %1676 = vmatprep.subr.mxu0 0.0
      %1677 = vmatpush1.msra.mxu0 0.0
      %1678 = vmatprep.subr.mxu0 0.0
      %1679 = vmatpush1.msra.mxu0 0.0
      %1680 = vmatprep.subr.mxu0 0.0
      %1681 = vmatpush1.msra.mxu0 0.0
      %1682 = vmatprep.subr.mxu0 0.0
      %1683 = vmatpush1.msra.mxu0 0.0
      %1684 = vmatprep.mubr.f32.mxu0 0.0
      %1685 = vmatmul.mubr.f32.gmra.mrb[0].mxu0 %v1618
      %v1686 = vpop.f32.mrb[0].mxu0
      %v1687 = vadd.f32 0.0, %v1686
      %v1688 = vpop.f32.mrb[0].mxu0
      %1689 = vdwg.mxu0
      %v1691 = vlaneseq
      %v1692 = vshrl.u32 %v1691, 7
      %v1693 = vsub.s32 0, %v1692
      %v1694 = vrot.slane %v1362, %v1693
      %v1696 = vmul.f32 %v1687, %v1694
      %v1698 = vrot.slane %v1696, 1
      %v1700 = vmul.f32 %v1687, %v1698
      %v1701 = vsub.f32 %v1363, %v1700
      %v1702 = vlaneseq
      %v1703 = vshrl.u32 %v1702, 7
      %v1704 = vsub.s32 1, %v1703
      %v1705 = vrot.slane %v1696, %v1704
      %v1706 = vmul.f32 %v1228, %v1705
      %v1707 = vmul.f32 %v1231, %v1705
      %v1708 = vmul.f32 %v1236, %v1705
      %v1709 = vmul.f32 %v1239, %v1705
      %v1710 = vmul.f32 %v1244, %v1705
      %v1711 = vmul.f32 %v1247, %v1705
      %v1712 = vmul.f32 %v1252, %v1705
      %v1713 = vmul.f32 %v1255, %v1705
      %v1714 = vmul.f32 %v1260, %v1705
      %v1715 = vmul.f32 %v1263, %v1705
      %v1716 = vmul.f32 %v1268, %v1705
      %v1717 = vmul.f32 %v1271, %v1705
      %v1718 = vmul.f32 %v1276, %v1705
      %v1719 = vmul.f32 %v1279, %v1705
      %v1720 = vmul.f32 %v1284, %v1705
      %v1721 = vmul.f32 %v1287, %v1705
      %v1722 = vmul.f32 %v1292, %v1705
      %v1723 = vmul.f32 %v1295, %v1705
      %v1724 = vmul.f32 %v1300, %v1705
      %v1725 = vmul.f32 %v1303, %v1705
      %v1726 = vmul.f32 %v1308, %v1705
      %v1727 = vmul.f32 %v1311, %v1705
      %v1728 = vmul.f32 %v1316, %v1705
      %v1729 = vmul.f32 %v1319, %v1705
      %v1730 = vmul.f32 %v1324, %v1705
      %v1731 = vmul.f32 %v1327, %v1705
      %v1732 = vmul.f32 %v1332, %v1705
      %v1733 = vmul.f32 %v1335, %v1705
      %v1734 = vmul.f32 %v1340, %v1705
      %v1735 = vmul.f32 %v1343, %v1705
      %v1736 = vmul.f32 %v1348, %v1705
      %v1737 = vmul.f32 %v1351, %v1705
      %v1739 = vlaneseq
      %v1740 = vshrl.u32 %v1739, 7
      %v1741 = vsub.s32 0, %v1740
      %v1742 = vrot.slane %v1701, %v1741
      %v1744 = vadd.f32 %v1706, %v1742
      %v1745 = vadd.f32 %v1707, %v1742
      %v1746 = vadd.f32 %v1708, %v1742
      %v1747 = vadd.f32 %v1709, %v1742
      %v1748 = vadd.f32 %v1710, %v1742
      %v1749 = vadd.f32 %v1711, %v1742
      %v1750 = vadd.f32 %v1712, %v1742
      %v1751 = vadd.f32 %v1713, %v1742
      %v1752 = vadd.f32 %v1714, %v1742
      %v1753 = vadd.f32 %v1715, %v1742
      %v1754 = vadd.f32 %v1716, %v1742
      %v1755 = vadd.f32 %v1717, %v1742
      %v1756 = vadd.f32 %v1718, %v1742
      %v1757 = vadd.f32 %v1719, %v1742
      %v1758 = vadd.f32 %v1720, %v1742
      %v1759 = vadd.f32 %v1721, %v1742
      %v1760 = vadd.f32 %v1722, %v1742
      %v1761 = vadd.f32 %v1723, %v1742
      %v1762 = vadd.f32 %v1724, %v1742
      %v1763 = vadd.f32 %v1725, %v1742
      %v1764 = vadd.f32 %v1726, %v1742
      %v1765 = vadd.f32 %v1727, %v1742
      %v1766 = vadd.f32 %v1728, %v1742
      %v1767 = vadd.f32 %v1729, %v1742
      %v1768 = vadd.f32 %v1730, %v1742
      %v1769 = vadd.f32 %v1731, %v1742
      %v1770 = vadd.f32 %v1732, %v1742
      %v1771 = vadd.f32 %v1733, %v1742
      %v1772 = vadd.f32 %v1734, %v1742
      %v1773 = vadd.f32 %v1735, %v1742
      %v1774 = vadd.f32 %v1736, %v1742
      %v1775 = vadd.f32 %v1737, %v1742
      %v1776 = vmax.f32 %v1744, 0.0
      %v1777 = vmax.f32 %v1745, 0.0
      %v1778 = vmax.f32 %v1746, 0.0
      %v1779 = vmax.f32 %v1747, 0.0
      %v1780 = vmax.f32 %v1748, 0.0
      %v1781 = vmax.f32 %v1749, 0.0
      %v1782 = vmax.f32 %v1750, 0.0
      %v1783 = vmax.f32 %v1751, 0.0
      %v1784 = vmax.f32 %v1752, 0.0
      %v1785 = vmax.f32 %v1753, 0.0
      %v1786 = vmax.f32 %v1754, 0.0
      %v1787 = vmax.f32 %v1755, 0.0
      %v1788 = vmax.f32 %v1756, 0.0
      %v1789 = vmax.f32 %v1757, 0.0
      %v1790 = vmax.f32 %v1758, 0.0
      %v1791 = vmax.f32 %v1759, 0.0
      %v1792 = vmax.f32 %v1760, 0.0
      %v1793 = vmax.f32 %v1761, 0.0
      %v1794 = vmax.f32 %v1762, 0.0
      %v1795 = vmax.f32 %v1763, 0.0
      %v1796 = vmax.f32 %v1764, 0.0
      %v1797 = vmax.f32 %v1765, 0.0
      %v1798 = vmax.f32 %v1766, 0.0
      %v1799 = vmax.f32 %v1767, 0.0
      %v1800 = vmax.f32 %v1768, 0.0
      %v1801 = vmax.f32 %v1769, 0.0
      %v1802 = vmax.f32 %v1770, 0.0
      %v1803 = vmax.f32 %v1771, 0.0
      %v1804 = vmax.f32 %v1772, 0.0
      %v1805 = vmax.f32 %v1773, 0.0
      %v1806 = vmax.f32 %v1774, 0.0
      %v1807 = vmax.f32 %v1775, 0.0
      %vm1808 = vcmask 785408
      %1809 = vst.msk [vmem:[#allocation2] sm:$0xff] %vm1808, 0
      %1810 = vst.msk [vmem:[#allocation2 + $0x88] sm:$0xff] %vm1808, 0
      %v1811 = vlaneseq
      %v1812 = vshrl.u32 %v1811, 7
      %v1813 = vadd.s32 %v1812, 8
      %v1814 = vadd.s32 %v1812, 16
      %v1815 = vadd.s32 %v1812, 24
      %v1816 = vadd.s32 %v1812, 32
      %v1817 = vadd.s32 %v1812, 40
      %v1818 = vadd.s32 %v1812, 48
      %v1819 = vadd.s32 %v1812, 56
      %v1820 = vadd.s32 %v1812, 64
      %v1821 = vadd.s32 %v1812, 72
      %v1822 = vadd.s32 %v1812, 80
      %v1823 = vadd.s32 %v1812, 88
      %v1824 = vadd.s32 %v1812, 96
      %v1825 = vadd.s32 %v1812, 104
      %v1826 = vadd.s32 %v1812, 112
      %v1827 = vadd.s32 %v1812, 120
      %v1828 = vadd.s32 %v1812, 128
      %v1829 = vadd.s32 %v1812, 136
      %v1830 = vadd.s32 %v1812, 144
      %v1831 = vadd.s32 %v1812, 152
      %v1832 = vadd.s32 %v1812, 160
      %v1833 = vadd.s32 %v1812, 168
      %v1834 = vadd.s32 %v1812, 176
      %v1835 = vadd.s32 %v1812, 184
      %v1836 = vadd.s32 %v1812, 192
      %v1837 = vadd.s32 %v1812, 200
      %v1838 = vadd.s32 %v1812, 208
      %v1839 = vadd.s32 %v1812, 216
      %v1840 = vadd.s32 %v1812, 224
      %v1841 = vadd.s32 %v1812, 232
      %v1842 = vadd.s32 %v1812, 240
      %v1843 = vadd.s32 %v1812, 248
      %vm1844 = vcmp.lt.s32.totalorder %v1812, 0
      %v1845 = vsub.s32 0, %v1812
      %v1846 = vsel %vm1844, %v1845, %v1812
      %v1847 = vshrl.u32 %v1846, 4
      %v1848 = vand.u32 %v1846, 15
      %v1849 = vsub.s32 0, %v1848
      %v1850 = vsel %vm1844, %v1849, %v1848
      %vm1851 = vcmp.lt.s32.totalorder %v1813, 0
      %v1852 = vsub.s32 0, %v1813
      %v1853 = vsel %vm1851, %v1852, %v1813
      %v1854 = vshrl.u32 %v1853, 4
      %v1855 = vand.u32 %v1853, 15
      %v1856 = vsub.s32 0, %v1855
      %v1857 = vsel %vm1851, %v1856, %v1855
      %vm1858 = vcmp.lt.s32.totalorder %v1814, 0
      %v1859 = vsub.s32 0, %v1814
      %v1860 = vsel %vm1858, %v1859, %v1814
      %v1861 = vshrl.u32 %v1860, 4
      %v1862 = vand.u32 %v1860, 15
      %v1863 = vsub.s32 0, %v1862
      %v1864 = vsel %vm1858, %v1863, %v1862
      %vm1865 = vcmp.lt.s32.totalorder %v1815, 0
      %v1866 = vsub.s32 0, %v1815
      %v1867 = vsel %vm1865, %v1866, %v1815
      %v1868 = vshrl.u32 %v1867, 4
      %v1869 = vand.u32 %v1867, 15
      %v1870 = vsub.s32 0, %v1869
      %v1871 = vsel %vm1865, %v1870, %v1869
      %vm1872 = vcmp.lt.s32.totalorder %v1816, 0
      %v1873 = vsub.s32 0, %v1816
      %v1874 = vsel %vm1872, %v1873, %v1816
      %v1875 = vshrl.u32 %v1874, 4
      %v1876 = vand.u32 %v1874, 15
      %v1877 = vsub.s32 0, %v1876
      %v1878 = vsel %vm1872, %v1877, %v1876
      %vm1879 = vcmp.lt.s32.totalorder %v1817, 0
      %v1880 = vsub.s32 0, %v1817
      %v1881 = vsel %vm1879, %v1880, %v1817
      %v1882 = vshrl.u32 %v1881, 4
      %v1883 = vand.u32 %v1881, 15
      %v1884 = vsub.s32 0, %v1883
      %v1885 = vsel %vm1879, %v1884, %v1883
      %vm1886 = vcmp.lt.s32.totalorder %v1818, 0
      %v1887 = vsub.s32 0, %v1818
      %v1888 = vsel %vm1886, %v1887, %v1818
      %v1889 = vshrl.u32 %v1888, 4
      %v1890 = vand.u32 %v1888, 15
      %v1891 = vsub.s32 0, %v1890
      %v1892 = vsel %vm1886, %v1891, %v1890
      %vm1893 = vcmp.lt.s32.totalorder %v1819, 0
      %v1894 = vsub.s32 0, %v1819
      %v1895 = vsel %vm1893, %v1894, %v1819
      %v1896 = vshrl.u32 %v1895, 4
      %v1897 = vand.u32 %v1895, 15
      %v1898 = vsub.s32 0, %v1897
      %v1899 = vsel %vm1893, %v1898, %v1897
      %vm1900 = vcmp.lt.s32.totalorder %v1820, 0
      %v1901 = vsub.s32 0, %v1820
      %v1902 = vsel %vm1900, %v1901, %v1820
      %v1903 = vshrl.u32 %v1902, 4
      %v1904 = vand.u32 %v1902, 15
      %v1905 = vsub.s32 0, %v1904
      %v1906 = vsel %vm1900, %v1905, %v1904
      %vm1907 = vcmp.lt.s32.totalorder %v1821, 0
      %v1908 = vsub.s32 0, %v1821
      %v1909 = vsel %vm1907, %v1908, %v1821
      %v1910 = vshrl.u32 %v1909, 4
      %v1911 = vand.u32 %v1909, 15
      %v1912 = vsub.s32 0, %v1911
      %v1913 = vsel %vm1907, %v1912, %v1911
      %vm1914 = vcmp.lt.s32.totalorder %v1822, 0
      %v1915 = vsub.s32 0, %v1822
      %v1916 = vsel %vm1914, %v1915, %v1822
      %v1917 = vshrl.u32 %v1916, 4
      %v1918 = vand.u32 %v1916, 15
      %v1919 = vsub.s32 0, %v1918
      %v1920 = vsel %vm1914, %v1919, %v1918
      %vm1921 = vcmp.lt.s32.totalorder %v1823, 0
      %v1922 = vsub.s32 0, %v1823
      %v1923 = vsel %vm1921, %v1922, %v1823
      %v1924 = vshrl.u32 %v1923, 4
      %v1925 = vand.u32 %v1923, 15
      %v1926 = vsub.s32 0, %v1925
      %v1927 = vsel %vm1921, %v1926, %v1925
      %vm1928 = vcmp.lt.s32.totalorder %v1824, 0
      %v1929 = vsub.s32 0, %v1824
      %v1930 = vsel %vm1928, %v1929, %v1824
      %v1931 = vshrl.u32 %v1930, 4
      %v1932 = vand.u32 %v1930, 15
      %v1933 = vsub.s32 0, %v1932
      %v1934 = vsel %vm1928, %v1933, %v1932
      %vm1935 = vcmp.lt.s32.totalorder %v1825, 0
      %v1936 = vsub.s32 0, %v1825
      %v1937 = vsel %vm1935, %v1936, %v1825
      %v1938 = vshrl.u32 %v1937, 4
      %v1939 = vand.u32 %v1937, 15
      %v1940 = vsub.s32 0, %v1939
      %v1941 = vsel %vm1935, %v1940, %v1939
      %vm1942 = vcmp.lt.s32.totalorder %v1826, 0
      %v1943 = vsub.s32 0, %v1826
      %v1944 = vsel %vm1942, %v1943, %v1826
      %v1945 = vshrl.u32 %v1944, 4
      %v1946 = vand.u32 %v1944, 15
      %v1947 = vsub.s32 0, %v1946
      %v1948 = vsel %vm1942, %v1947, %v1946
      %vm1949 = vcmp.lt.s32.totalorder %v1827, 0
      %v1950 = vsub.s32 0, %v1827
      %v1951 = vsel %vm1949, %v1950, %v1827
      %v1952 = vshrl.u32 %v1951, 4
      %v1953 = vand.u32 %v1951, 15
      %v1954 = vsub.s32 0, %v1953
      %v1955 = vsel %vm1949, %v1954, %v1953
      %vm1956 = vcmp.lt.s32.totalorder %v1828, 0
      %v1957 = vsub.s32 0, %v1828
      %v1958 = vsel %vm1956, %v1957, %v1828
      %v1959 = vshrl.u32 %v1958, 4
      %v1960 = vand.u32 %v1958, 15
      %v1961 = vsub.s32 0, %v1960
      %v1962 = vsel %vm1956, %v1961, %v1960
      %vm1963 = vcmp.lt.s32.totalorder %v1829, 0
      %v1964 = vsub.s32 0, %v1829
      %v1965 = vsel %vm1963, %v1964, %v1829
      %v1966 = vshrl.u32 %v1965, 4
      %v1967 = vand.u32 %v1965, 15
      %v1968 = vsub.s32 0, %v1967
      %v1969 = vsel %vm1963, %v1968, %v1967
      %vm1970 = vcmp.lt.s32.totalorder %v1830, 0
      %v1971 = vsub.s32 0, %v1830
      %v1972 = vsel %vm1970, %v1971, %v1830
      %v1973 = vshrl.u32 %v1972, 4
      %v1974 = vand.u32 %v1972, 15
      %v1975 = vsub.s32 0, %v1974
      %v1976 = vsel %vm1970, %v1975, %v1974
      %vm1977 = vcmp.lt.s32.totalorder %v1831, 0
      %v1978 = vsub.s32 0, %v1831
      %v1979 = vsel %vm1977, %v1978, %v1831
      %v1980 = vshrl.u32 %v1979, 4
      %v1981 = vand.u32 %v1979, 15
      %v1982 = vsub.s32 0, %v1981
      %v1983 = vsel %vm1977, %v1982, %v1981
      %vm1984 = vcmp.lt.s32.totalorder %v1832, 0
      %v1985 = vsub.s32 0, %v1832
      %v1986 = vsel %vm1984, %v1985, %v1832
      %v1987 = vshrl.u32 %v1986, 4
      %v1988 = vand.u32 %v1986, 15
      %v1989 = vsub.s32 0, %v1988
      %v1990 = vsel %vm1984, %v1989, %v1988
      %vm1991 = vcmp.lt.s32.totalorder %v1833, 0
      %v1992 = vsub.s32 0, %v1833
      %v1993 = vsel %vm1991, %v1992, %v1833
      %v1994 = vshrl.u32 %v1993, 4
      %v1995 = vand.u32 %v1993, 15
      %v1996 = vsub.s32 0, %v1995
      %v1997 = vsel %vm1991, %v1996, %v1995
      %vm1998 = vcmp.lt.s32.totalorder %v1834, 0
      %v1999 = vsub.s32 0, %v1834
      %v2000 = vsel %vm1998, %v1999, %v1834
      %v2001 = vshrl.u32 %v2000, 4
      %v2002 = vand.u32 %v2000, 15
      %v2003 = vsub.s32 0, %v2002
      %v2004 = vsel %vm1998, %v2003, %v2002
      %vm2005 = vcmp.lt.s32.totalorder %v1835, 0
      %v2006 = vsub.s32 0, %v1835
      %v2007 = vsel %vm2005, %v2006, %v1835
      %v2008 = vshrl.u32 %v2007, 4
      %v2009 = vand.u32 %v2007, 15
      %v2010 = vsub.s32 0, %v2009
      %v2011 = vsel %vm2005, %v2010, %v2009
      %vm2012 = vcmp.lt.s32.totalorder %v1836, 0
      %v2013 = vsub.s32 0, %v1836
      %v2014 = vsel %vm2012, %v2013, %v1836
      %v2015 = vshrl.u32 %v2014, 4
      %v2016 = vand.u32 %v2014, 15
      %v2017 = vsub.s32 0, %v2016
      %v2018 = vsel %vm2012, %v2017, %v2016
      %vm2019 = vcmp.lt.s32.totalorder %v1837, 0
      %v2020 = vsub.s32 0, %v1837
      %v2021 = vsel %vm2019, %v2020, %v1837
      %v2022 = vshrl.u32 %v2021, 4
      %v2023 = vand.u32 %v2021, 15
      %v2024 = vsub.s32 0, %v2023
      %v2025 = vsel %vm2019, %v2024, %v2023
      %vm2026 = vcmp.lt.s32.totalorder %v1838, 0
      %v2027 = vsub.s32 0, %v1838
      %v2028 = vsel %vm2026, %v2027, %v1838
      %v2029 = vshrl.u32 %v2028, 4
      %v2030 = vand.u32 %v2028, 15
      %v2031 = vsub.s32 0, %v2030
      %v2032 = vsel %vm2026, %v2031, %v2030
      %vm2033 = vcmp.lt.s32.totalorder %v1839, 0
      %v2034 = vsub.s32 0, %v1839
      %v2035 = vsel %vm2033, %v2034, %v1839
      %v2036 = vshrl.u32 %v2035, 4
      %v2037 = vand.u32 %v2035, 15
      %v2038 = vsub.s32 0, %v2037
      %v2039 = vsel %vm2033, %v2038, %v2037
      %vm2040 = vcmp.lt.s32.totalorder %v1840, 0
      %v2041 = vsub.s32 0, %v1840
      %v2042 = vsel %vm2040, %v2041, %v1840
      %v2043 = vshrl.u32 %v2042, 4
      %v2044 = vand.u32 %v2042, 15
      %v2045 = vsub.s32 0, %v2044
      %v2046 = vsel %vm2040, %v2045, %v2044
      %vm2047 = vcmp.lt.s32.totalorder %v1841, 0
      %v2048 = vsub.s32 0, %v1841
      %v2049 = vsel %vm2047, %v2048, %v1841
      %v2050 = vshrl.u32 %v2049, 4
      %v2051 = vand.u32 %v2049, 15
      %v2052 = vsub.s32 0, %v2051
      %v2053 = vsel %vm2047, %v2052, %v2051
      %vm2054 = vcmp.lt.s32.totalorder %v1842, 0
      %v2055 = vsub.s32 0, %v1842
      %v2056 = vsel %vm2054, %v2055, %v1842
      %v2057 = vshrl.u32 %v2056, 4
      %v2058 = vand.u32 %v2056, 15
      %v2059 = vsub.s32 0, %v2058
      %v2060 = vsel %vm2054, %v2059, %v2058
      %vm2061 = vcmp.lt.s32.totalorder %v1843, 0
      %v2062 = vsub.s32 0, %v1843
      %v2063 = vsel %vm2061, %v2062, %v1843
      %v2064 = vshrl.u32 %v2063, 4
      %v2065 = vand.u32 %v2063, 15
      %v2066 = vsub.s32 0, %v2065
      %v2067 = vsel %vm2061, %v2066, %v2065
      %vm2068 = vcmp.ne.s32.totalorder %v1850, 0
      %vm2069 = vcmp.ne.s32.totalorder %v1857, 0
      %vm2070 = vcmp.ne.s32.totalorder %v1864, 0
      %vm2071 = vcmp.ne.s32.totalorder %v1871, 0
      %vm2072 = vcmp.ne.s32.totalorder %v1878, 0
      %vm2073 = vcmp.ne.s32.totalorder %v1885, 0
      %vm2074 = vcmp.ne.s32.totalorder %v1892, 0
      %vm2075 = vcmp.ne.s32.totalorder %v1899, 0
      %vm2076 = vcmp.ne.s32.totalorder %v1906, 0
      %vm2077 = vcmp.ne.s32.totalorder %v1913, 0
      %vm2078 = vcmp.ne.s32.totalorder %v1920, 0
      %vm2079 = vcmp.ne.s32.totalorder %v1927, 0
      %vm2080 = vcmp.ne.s32.totalorder %v1934, 0
      %vm2081 = vcmp.ne.s32.totalorder %v1941, 0
      %vm2082 = vcmp.ne.s32.totalorder %v1948, 0
      %vm2083 = vcmp.ne.s32.totalorder %v1955, 0
      %vm2084 = vcmp.ne.s32.totalorder %v1962, 0
      %vm2085 = vcmp.ne.s32.totalorder %v1969, 0
      %vm2086 = vcmp.ne.s32.totalorder %v1976, 0
      %vm2087 = vcmp.ne.s32.totalorder %v1983, 0
      %vm2088 = vcmp.ne.s32.totalorder %v1990, 0
      %vm2089 = vcmp.ne.s32.totalorder %v1997, 0
      %vm2090 = vcmp.ne.s32.totalorder %v2004, 0
      %vm2091 = vcmp.ne.s32.totalorder %v2011, 0
      %vm2092 = vcmp.ne.s32.totalorder %v2018, 0
      %vm2093 = vcmp.ne.s32.totalorder %v2025, 0
      %vm2094 = vcmp.ne.s32.totalorder %v2032, 0
      %vm2095 = vcmp.ne.s32.totalorder %v2039, 0
      %vm2096 = vcmp.ne.s32.totalorder %v2046, 0
      %vm2097 = vcmp.ne.s32.totalorder %v2053, 0
      %vm2098 = vcmp.ne.s32.totalorder %v2060, 0
      %vm2099 = vcmp.ne.s32.totalorder %v2067, 0
      %vm2100 = vcmp.lt.s32.totalorder %v1850, 0
      %vm2101 = vcmp.lt.s32.totalorder %v1857, 0
      %vm2102 = vcmp.lt.s32.totalorder %v1864, 0
      %vm2103 = vcmp.lt.s32.totalorder %v1871, 0
      %vm2104 = vcmp.lt.s32.totalorder %v1878, 0
      %vm2105 = vcmp.lt.s32.totalorder %v1885, 0
      %vm2106 = vcmp.lt.s32.totalorder %v1892, 0
      %vm2107 = vcmp.lt.s32.totalorder %v1899, 0
      %vm2108 = vcmp.lt.s32.totalorder %v1906, 0
      %vm2109 = vcmp.lt.s32.totalorder %v1913, 0
      %vm2110 = vcmp.lt.s32.totalorder %v1920, 0
      %vm2111 = vcmp.lt.s32.totalorder %v1927, 0
      %vm2112 = vcmp.lt.s32.totalorder %v1934, 0
      %vm2113 = vcmp.lt.s32.totalorder %v1941, 0
      %vm2114 = vcmp.lt.s32.totalorder %v1948, 0
      %vm2115 = vcmp.lt.s32.totalorder %v1955, 0
      %vm2116 = vcmp.lt.s32.totalorder %v1962, 0
      %vm2117 = vcmp.lt.s32.totalorder %v1969, 0
      %vm2118 = vcmp.lt.s32.totalorder %v1976, 0
      %vm2119 = vcmp.lt.s32.totalorder %v1983, 0
      %vm2120 = vcmp.lt.s32.totalorder %v1990, 0
      %vm2121 = vcmp.lt.s32.totalorder %v1997, 0
      %vm2122 = vcmp.lt.s32.totalorder %v2004, 0
      %vm2123 = vcmp.lt.s32.totalorder %v2011, 0
      %vm2124 = vcmp.lt.s32.totalorder %v2018, 0
      %vm2125 = vcmp.lt.s32.totalorder %v2025, 0
      %vm2126 = vcmp.lt.s32.totalorder %v2032, 0
      %vm2127 = vcmp.lt.s32.totalorder %v2039, 0
      %vm2128 = vcmp.lt.s32.totalorder %v2046, 0
      %vm2129 = vcmp.lt.s32.totalorder %v2053, 0
      %vm2130 = vcmp.lt.s32.totalorder %v2060, 0
      %vm2131 = vcmp.lt.s32.totalorder %v2067, 0
      %vm2132 = vmand %vm2100, %vm2068
      %vm2133 = vmand %vm2101, %vm2069
      %vm2134 = vmand %vm2102, %vm2070
      %vm2135 = vmand %vm2103, %vm2071
      %vm2136 = vmand %vm2104, %vm2072
      %vm2137 = vmand %vm2105, %vm2073
      %vm2138 = vmand %vm2106, %vm2074
      %vm2139 = vmand %vm2107, %vm2075
      %vm2140 = vmand %vm2108, %vm2076
      %vm2141 = vmand %vm2109, %vm2077
      %vm2142 = vmand %vm2110, %vm2078
      %vm2143 = vmand %vm2111, %vm2079
      %vm2144 = vmand %vm2112, %vm2080
      %vm2145 = vmand %vm2113, %vm2081
      %vm2146 = vmand %vm2114, %vm2082
      %vm2147 = vmand %vm2115, %vm2083
      %vm2148 = vmand %vm2116, %vm2084
      %vm2149 = vmand %vm2117, %vm2085
      %vm2150 = vmand %vm2118, %vm2086
      %vm2151 = vmand %vm2119, %vm2087
      %vm2152 = vmand %vm2120, %vm2088
      %vm2153 = vmand %vm2121, %vm2089
      %vm2154 = vmand %vm2122, %vm2090
      %vm2155 = vmand %vm2123, %vm2091
      %vm2156 = vmand %vm2124, %vm2092
      %vm2157 = vmand %vm2125, %vm2093
      %vm2158 = vmand %vm2126, %vm2094
      %vm2159 = vmand %vm2127, %vm2095
      %vm2160 = vmand %vm2128, %vm2096
      %vm2161 = vmand %vm2129, %vm2097
      %vm2162 = vmand %vm2130, %vm2098
      %vm2163 = vmand %vm2131, %vm2099
      %v2164 = vadd.s32 %v1850, 16
      %v2165 = vadd.s32 %v1857, 16
      %v2166 = vadd.s32 %v1864, 16
      %v2167 = vadd.s32 %v1871, 16
      %v2168 = vadd.s32 %v1878, 16
      %v2169 = vadd.s32 %v1885, 16
      %v2170 = vadd.s32 %v1892, 16
      %v2171 = vadd.s32 %v1899, 16
      %v2172 = vadd.s32 %v1906, 16
      %v2173 = vadd.s32 %v1913, 16
      %v2174 = vadd.s32 %v1920, 16
      %v2175 = vadd.s32 %v1927, 16
      %v2176 = vadd.s32 %v1934, 16
      %v2177 = vadd.s32 %v1941, 16
      %v2178 = vadd.s32 %v1948, 16
      %v2179 = vadd.s32 %v1955, 16
      %v2180 = vadd.s32 %v1962, 16
      %v2181 = vadd.s32 %v1969, 16
      %v2182 = vadd.s32 %v1976, 16
      %v2183 = vadd.s32 %v1983, 16
      %v2184 = vadd.s32 %v1990, 16
      %v2185 = vadd.s32 %v1997, 16
      %v2186 = vadd.s32 %v2004, 16
      %v2187 = vadd.s32 %v2011, 16
      %v2188 = vadd.s32 %v2018, 16
      %v2189 = vadd.s32 %v2025, 16
      %v2190 = vadd.s32 %v2032, 16
      %v2191 = vadd.s32 %v2039, 16
      %v2192 = vadd.s32 %v2046, 16
      %v2193 = vadd.s32 %v2053, 16
      %v2194 = vadd.s32 %v2060, 16
      %v2195 = vadd.s32 %v2067, 16
      %v2196 = vsel %vm2132, %v2164, %v1850
      %v2197 = vsel %vm2133, %v2165, %v1857
      %v2198 = vsel %vm2134, %v2166, %v1864
      %v2199 = vsel %vm2135, %v2167, %v1871
      %v2200 = vsel %vm2136, %v2168, %v1878
      %v2201 = vsel %vm2137, %v2169, %v1885
      %v2202 = vsel %vm2138, %v2170, %v1892
      %v2203 = vsel %vm2139, %v2171, %v1899
      %v2204 = vsel %vm2140, %v2172, %v1906
      %v2205 = vsel %vm2141, %v2173, %v1913
      %v2206 = vsel %vm2142, %v2174, %v1920
      %v2207 = vsel %vm2143, %v2175, %v1927
      %v2208 = vsel %vm2144, %v2176, %v1934
      %v2209 = vsel %vm2145, %v2177, %v1941
      %v2210 = vsel %vm2146, %v2178, %v1948
      %v2211 = vsel %vm2147, %v2179, %v1955
      %v2212 = vsel %vm2148, %v2180, %v1962
      %v2213 = vsel %vm2149, %v2181, %v1969
      %v2214 = vsel %vm2150, %v2182, %v1976
      %v2215 = vsel %vm2151, %v2183, %v1983
      %v2216 = vsel %vm2152, %v2184, %v1990
      %v2217 = vsel %vm2153, %v2185, %v1997
      %v2218 = vsel %vm2154, %v2186, %v2004
      %v2219 = vsel %vm2155, %v2187, %v2011
      %v2220 = vsel %vm2156, %v2188, %v2018
      %v2221 = vsel %vm2157, %v2189, %v2025
      %v2222 = vsel %vm2158, %v2190, %v2032
      %v2223 = vsel %vm2159, %v2191, %v2039
      %v2224 = vsel %vm2160, %v2192, %v2046
      %v2225 = vsel %vm2161, %v2193, %v2053
      %v2226 = vsel %vm2162, %v2194, %v2060
      %v2227 = vsel %vm2163, %v2195, %v2067
      %v2228 = vpack.c.bf16 %v1777, %v1776
      %v2229 = vpack.c.bf16 %v1779, %v1778
      %v2230 = vpack.c.bf16 %v1781, %v1780
      %v2231 = vpack.c.bf16 %v1783, %v1782
      %v2232 = vpack.c.bf16 %v1785, %v1784
      %v2233 = vpack.c.bf16 %v1787, %v1786
      %v2234 = vpack.c.bf16 %v1789, %v1788
      %v2235 = vpack.c.bf16 %v1791, %v1790
      %v2236 = vpack.c.bf16 %v1793, %v1792
      %v2237 = vpack.c.bf16 %v1795, %v1794
      %v2238 = vpack.c.bf16 %v1797, %v1796
      %v2239 = vpack.c.bf16 %v1799, %v1798
      %v2240 = vpack.c.bf16 %v1801, %v1800
      %v2241 = vpack.c.bf16 %v1803, %v1802
      %v2242 = vpack.c.bf16 %v1805, %v1804
      %v2243 = vpack.c.bf16 %v1807, %v1806
      %2260 = vrot.lane.b32.xlu0 %v2228, 32
      %v2261 = vpop.permute.xlu0 %2260
      %2262 = vrot.lane.b32.xlu0 %v2229, 32
      %v2263 = vpop.permute.xlu0 %2262
      %2264 = vrot.lane.b32.xlu0 %v2230, 32
      %v2265 = vpop.permute.xlu0 %2264
      %2266 = vrot.lane.b32.xlu0 %v2231, 32
      %v2267 = vpop.permute.xlu0 %2266
      %2268 = vrot.lane.b32.xlu0 %v2232, 32
      %v2269 = vpop.permute.xlu0 %2268
      %2270 = vrot.lane.b32.xlu0 %v2233, 32
      %v2271 = vpop.permute.xlu0 %2270
      %2272 = vrot.lane.b32.xlu0 %v2234, 32
      %v2273 = vpop.permute.xlu0 %2272
      %2274 = vrot.lane.b32.xlu0 %v2235, 32
      %v2275 = vpop.permute.xlu0 %2274
      %2276 = vrot.lane.b32.xlu0 %v2236, 32
      %v2277 = vpop.permute.xlu0 %2276
      %2278 = vrot.lane.b32.xlu0 %v2237, 32
      %v2279 = vpop.permute.xlu0 %2278
      %2280 = vrot.lane.b32.xlu0 %v2238, 32
      %v2281 = vpop.permute.xlu0 %2280
      %2282 = vrot.lane.b32.xlu0 %v2239, 32
      %v2283 = vpop.permute.xlu0 %2282
      %2284 = vrot.lane.b32.xlu0 %v2240, 32
      %v2285 = vpop.permute.xlu0 %2284
      %2286 = vrot.lane.b32.xlu0 %v2241, 32
      %v2287 = vpop.permute.xlu0 %2286
      %2288 = vrot.lane.b32.xlu0 %v2242, 32
      %v2289 = vpop.permute.xlu0 %2288
      %2290 = vrot.lane.b32.xlu0 %v2243, 32
      %v2291 = vpop.permute.xlu0 %2290
      %vm2308 = vcmask 523520
      %2309 = vst.msk [vmem:[#allocation2 + $0x8] sm:$0xff] %vm2308, %v2261
      %2310 = vst.msk [vmem:[#allocation2 + $0x10] sm:$0xff] %vm2308, %v2263
      %2311 = vst.msk [vmem:[#allocation2 + $0x18] sm:$0xff] %vm2308, %v2265
      %2312 = vst.msk [vmem:[#allocation2 + $0x20] sm:$0xff] %vm2308, %v2267
      %2313 = vst.msk [vmem:[#allocation2 + $0x28] sm:$0xff] %vm2308, %v2269
      %2314 = vst.msk [vmem:[#allocation2 + $0x30] sm:$0xff] %vm2308, %v2271
      %2315 = vst.msk [vmem:[#allocation2 + $0x38] sm:$0xff] %vm2308, %v2273
      %2316 = vst.msk [vmem:[#allocation2 + $0x40] sm:$0xff] %vm2308, %v2275
      %2317 = vst.msk [vmem:[#allocation2 + $0x48] sm:$0xff] %vm2308, %v2277
      %2318 = vst.msk [vmem:[#allocation2 + $0x50] sm:$0xff] %vm2308, %v2279
      %2319 = vst.msk [vmem:[#allocation2 + $0x58] sm:$0xff] %vm2308, %v2281
      %2320 = vst.msk [vmem:[#allocation2 + $0x60] sm:$0xff] %vm2308, %v2283
      %2321 = vst.msk [vmem:[#allocation2 + $0x68] sm:$0xff] %vm2308, %v2285
      %2322 = vst.msk [vmem:[#allocation2 + $0x70] sm:$0xff] %vm2308, %v2287
      %2323 = vst.msk [vmem:[#allocation2 + $0x78] sm:$0xff] %vm2308, %v2289
      %2324 = vst.msk [vmem:[#allocation2 + $0x80] sm:$0xff] %vm2308, %v2291
      %vm2325 = vcmp.eq.s32.totalorder %v2196, 15
      %vm2326 = vcmp.eq.s32.totalorder %v2197, 15
      %vm2327 = vcmp.eq.s32.totalorder %v2198, 15
      %vm2328 = vcmp.eq.s32.totalorder %v2199, 15
      %vm2329 = vcmp.eq.s32.totalorder %v2200, 15
      %vm2330 = vcmp.eq.s32.totalorder %v2201, 15
      %vm2331 = vcmp.eq.s32.totalorder %v2202, 15
      %vm2332 = vcmp.eq.s32.totalorder %v2203, 15
      %vm2333 = vcmp.eq.s32.totalorder %v2204, 15
      %vm2334 = vcmp.eq.s32.totalorder %v2205, 15
      %vm2335 = vcmp.eq.s32.totalorder %v2206, 15
      %vm2336 = vcmp.eq.s32.totalorder %v2207, 15
      %vm2337 = vcmp.eq.s32.totalorder %v2208, 15
      %vm2338 = vcmp.eq.s32.totalorder %v2209, 15
      %vm2339 = vcmp.eq.s32.totalorder %v2210, 15
      %vm2340 = vcmp.eq.s32.totalorder %v2211, 15
      %vm2341 = vcmp.eq.s32.totalorder %v2212, 15
      %vm2342 = vcmp.eq.s32.totalorder %v2213, 15
      %vm2343 = vcmp.eq.s32.totalorder %v2214, 15
      %vm2344 = vcmp.eq.s32.totalorder %v2215, 15
      %vm2345 = vcmp.eq.s32.totalorder %v2216, 15
      %vm2346 = vcmp.eq.s32.totalorder %v2217, 15
      %vm2347 = vcmp.eq.s32.totalorder %v2218, 15
      %vm2348 = vcmp.eq.s32.totalorder %v2219, 15
      %vm2349 = vcmp.eq.s32.totalorder %v2220, 15
      %vm2350 = vcmp.eq.s32.totalorder %v2221, 15
      %vm2351 = vcmp.eq.s32.totalorder %v2222, 15
      %vm2352 = vcmp.eq.s32.totalorder %v2223, 15
      %vm2353 = vcmp.eq.s32.totalorder %v2224, 15
      %vm2354 = vcmp.eq.s32.totalorder %v2225, 15
      %vm2355 = vcmp.eq.s32.totalorder %v2226, 15
      %vm2356 = vcmp.eq.s32.totalorder %v2227, 15
      %v2357 = vsel %vm2325, 1, 0
      %v2358 = vsel %vm2326, 1, 0
      %v2359 = vsel %vm2327, 1, 0
      %v2360 = vsel %vm2328, 1, 0
      %v2361 = vsel %vm2329, 1, 0
      %v2362 = vsel %vm2330, 1, 0
      %v2363 = vsel %vm2331, 1, 0
      %v2364 = vsel %vm2332, 1, 0
      %v2365 = vsel %vm2333, 1, 0
      %v2366 = vsel %vm2334, 1, 0
      %v2367 = vsel %vm2335, 1, 0
      %v2368 = vsel %vm2336, 1, 0
      %v2369 = vsel %vm2337, 1, 0
      %v2370 = vsel %vm2338, 1, 0
      %v2371 = vsel %vm2339, 1, 0
      %v2372 = vsel %vm2340, 1, 0
      %v2373 = vsel %vm2341, 1, 0
      %v2374 = vsel %vm2342, 1, 0
      %v2375 = vsel %vm2343, 1, 0
      %v2376 = vsel %vm2344, 1, 0
      %v2377 = vsel %vm2345, 1, 0
      %v2378 = vsel %vm2346, 1, 0
      %v2379 = vsel %vm2347, 1, 0
      %v2380 = vsel %vm2348, 1, 0
      %v2381 = vsel %vm2349, 1, 0
      %v2382 = vsel %vm2350, 1, 0
      %v2383 = vsel %vm2351, 1, 0
      %v2384 = vsel %vm2352, 1, 0
      %v2385 = vsel %vm2353, 1, 0
      %v2386 = vsel %vm2354, 1, 0
      %v2387 = vsel %vm2355, 1, 0
      %v2388 = vsel %vm2356, 1, 0
      %vm2389 = vcmp.eq.s32.totalorder %v2357, 1
      %vm2390 = vcmp.eq.s32.totalorder %v2358, 1
      %vm2391 = vcmp.eq.s32.totalorder %v2359, 1
      %vm2392 = vcmp.eq.s32.totalorder %v2360, 1
      %vm2393 = vcmp.eq.s32.totalorder %v2361, 1
      %vm2394 = vcmp.eq.s32.totalorder %v2362, 1
      %vm2395 = vcmp.eq.s32.totalorder %v2363, 1
      %vm2396 = vcmp.eq.s32.totalorder %v2364, 1
      %vm2397 = vcmp.eq.s32.totalorder %v2365, 1
      %vm2398 = vcmp.eq.s32.totalorder %v2366, 1
      %vm2399 = vcmp.eq.s32.totalorder %v2367, 1
      %vm2400 = vcmp.eq.s32.totalorder %v2368, 1
      %vm2401 = vcmp.eq.s32.totalorder %v2369, 1
      %vm2402 = vcmp.eq.s32.totalorder %v2370, 1
      %vm2403 = vcmp.eq.s32.totalorder %v2371, 1
      %vm2404 = vcmp.eq.s32.totalorder %v2372, 1
      %vm2405 = vcmp.eq.s32.totalorder %v2373, 1
      %vm2406 = vcmp.eq.s32.totalorder %v2374, 1
      %vm2407 = vcmp.eq.s32.totalorder %v2375, 1
      %vm2408 = vcmp.eq.s32.totalorder %v2376, 1
      %vm2409 = vcmp.eq.s32.totalorder %v2377, 1
      %vm2410 = vcmp.eq.s32.totalorder %v2378, 1
      %vm2411 = vcmp.eq.s32.totalorder %v2379, 1
      %vm2412 = vcmp.eq.s32.totalorder %v2380, 1
      %vm2413 = vcmp.eq.s32.totalorder %v2381, 1
      %vm2414 = vcmp.eq.s32.totalorder %v2382, 1
      %vm2415 = vcmp.eq.s32.totalorder %v2383, 1
      %vm2416 = vcmp.eq.s32.totalorder %v2384, 1
      %vm2417 = vcmp.eq.s32.totalorder %v2385, 1
      %vm2418 = vcmp.eq.s32.totalorder %v2386, 1
      %vm2419 = vcmp.eq.s32.totalorder %v2387, 1
      %vm2420 = vcmp.eq.s32.totalorder %v2388, 1
      %v2421 = vsel %vm2389, 0.0, %v1776
      %v2422 = vsel %vm2390, 0.0, %v1777
      %v2423 = vsel %vm2391, 0.0, %v1778
      %v2424 = vsel %vm2392, 0.0, %v1779
      %v2425 = vsel %vm2393, 0.0, %v1780
      %v2426 = vsel %vm2394, 0.0, %v1781
      %v2427 = vsel %vm2395, 0.0, %v1782
      %v2428 = vsel %vm2396, 0.0, %v1783
      %v2429 = vsel %vm2397, 0.0, %v1784
      %v2430 = vsel %vm2398, 0.0, %v1785
      %v2431 = vsel %vm2399, 0.0, %v1786
      %v2432 = vsel %vm2400, 0.0, %v1787
      %v2433 = vsel %vm2401, 0.0, %v1788
      %v2434 = vsel %vm2402, 0.0, %v1789
      %v2435 = vsel %vm2403, 0.0, %v1790
      %v2436 = vsel %vm2404, 0.0, %v1791
      %v2437 = vsel %vm2405, 0.0, %v1792
      %v2438 = vsel %vm2406, 0.0, %v1793
      %v2439 = vsel %vm2407, 0.0, %v1794
      %v2440 = vsel %vm2408, 0.0, %v1795
      %v2441 = vsel %vm2409, 0.0, %v1796
      %v2442 = vsel %vm2410, 0.0, %v1797
      %v2443 = vsel %vm2411, 0.0, %v1798
      %v2444 = vsel %vm2412, 0.0, %v1799
      %v2445 = vsel %vm2413, 0.0, %v1800
      %v2446 = vsel %vm2414, 0.0, %v1801
      %v2447 = vsel %vm2415, 0.0, %v1802
      %v2448 = vsel %vm2416, 0.0, %v1803
      %v2449 = vsel %vm2417, 0.0, %v1804
      %v2450 = vsel %vm2418, 0.0, %v1805
      %v2451 = vsel %vm2419, 0.0, %v1806
      %v2452 = vsel %vm2420, 0.0, %v1807
      %v2485 = vrot.slane %v2421, 7
      %v2486 = vrot.slane %v2422, 7
      %v2487 = vsel %vm814, %v2485, %v2486
      %v2488 = vrot.slane %v2423, 7
      %v2489 = vsel %vm814, %v2486, %v2488
      %v2490 = vrot.slane %v2424, 7
      %v2491 = vsel %vm814, %v2488, %v2490
      %v2492 = vrot.slane %v2425, 7
      %v2493 = vsel %vm814, %v2490, %v2492
      %v2494 = vrot.slane %v2426, 7
      %v2495 = vsel %vm814, %v2492, %v2494
      %v2496 = vrot.slane %v2427, 7
      %v2497 = vsel %vm814, %v2494, %v2496
      %v2498 = vrot.slane %v2428, 7
      %v2499 = vsel %vm814, %v2496, %v2498
      %v2500 = vrot.slane %v2429, 7
      %v2501 = vsel %vm814, %v2498, %v2500
      %v2502 = vrot.slane %v2430, 7
      %v2503 = vsel %vm814, %v2500, %v2502
      %v2504 = vrot.slane %v2431, 7
      %v2505 = vsel %vm814, %v2502, %v2504
      %v2506 = vrot.slane %v2432, 7
      %v2507 = vsel %vm814, %v2504, %v2506
      %v2508 = vrot.slane %v2433, 7
      %v2509 = vsel %vm814, %v2506, %v2508
      %v2510 = vrot.slane %v2434, 7
      %v2511 = vsel %vm814, %v2508, %v2510
      %v2512 = vrot.slane %v2435, 7
      %v2513 = vsel %vm814, %v2510, %v2512
      %v2514 = vrot.slane %v2436, 7
      %v2515 = vsel %vm814, %v2512, %v2514
      %v2516 = vrot.slane %v2437, 7
      %v2517 = vsel %vm814, %v2514, %v2516
      %v2518 = vrot.slane %v2438, 7
      %v2519 = vsel %vm814, %v2516, %v2518
      %v2520 = vrot.slane %v2439, 7
      %v2521 = vsel %vm814, %v2518, %v2520
      %v2522 = vrot.slane %v2440, 7
      %v2523 = vsel %vm814, %v2520, %v2522
      %v2524 = vrot.slane %v2441, 7
      %v2525 = vsel %vm814, %v2522, %v2524
      %v2526 = vrot.slane %v2442, 7
      %v2527 = vsel %vm814, %v2524, %v2526
      %v2528 = vrot.slane %v2443, 7
      %v2529 = vsel %vm814, %v2526, %v2528
      %v2530 = vrot.slane %v2444, 7
      %v2531 = vsel %vm814, %v2528, %v2530
      %v2532 = vrot.slane %v2445, 7
      %v2533 = vsel %vm814, %v2530, %v2532
      %v2534 = vrot.slane %v2446, 7
      %v2535 = vsel %vm814, %v2532, %v2534
      %v2536 = vrot.slane %v2447, 7
      %v2537 = vsel %vm814, %v2534, %v2536
      %v2538 = vrot.slane %v2448, 7
      %v2539 = vsel %vm814, %v2536, %v2538
      %v2540 = vrot.slane %v2449, 7
      %v2541 = vsel %vm814, %v2538, %v2540
      %v2542 = vrot.slane %v2450, 7
      %v2543 = vsel %vm814, %v2540, %v2542
      %v2544 = vrot.slane %v2451, 7
      %v2545 = vsel %vm814, %v2542, %v2544
      %v2546 = vrot.slane %v2452, 7
      %v2547 = vsel %vm814, %v2544, %v2546
      %v2580 = vsel %vm814, 0.0, %v2485
      %v2581 = vpack.c.bf16 %v2487, %v2580
      %v2582 = vpack.c.bf16 %v2491, %v2489
      %v2583 = vpack.c.bf16 %v2495, %v2493
      %v2584 = vpack.c.bf16 %v2499, %v2497
      %v2585 = vpack.c.bf16 %v2503, %v2501
      %v2586 = vpack.c.bf16 %v2507, %v2505
      %v2587 = vpack.c.bf16 %v2511, %v2509
      %v2588 = vpack.c.bf16 %v2515, %v2513
      %v2589 = vpack.c.bf16 %v2519, %v2517
      %v2590 = vpack.c.bf16 %v2523, %v2521
      %v2591 = vpack.c.bf16 %v2527, %v2525
      %v2592 = vpack.c.bf16 %v2531, %v2529
      %v2593 = vpack.c.bf16 %v2535, %v2533
      %v2594 = vpack.c.bf16 %v2539, %v2537
      %v2595 = vpack.c.bf16 %v2543, %v2541
      %v2596 = vpack.c.bf16 %v2547, %v2545
      %2597 = vst.msk [vmem:[#allocation2 + $0x8] sm:$0xff] %vm898, %v2581
      %2598 = vst.msk [vmem:[#allocation2 + $0x10] sm:$0xff] %vm898, %v2582
      %2599 = vst.msk [vmem:[#allocation2 + $0x18] sm:$0xff] %vm898, %v2583
      %2600 = vst.msk [vmem:[#allocation2 + $0x20] sm:$0xff] %vm898, %v2584
      %2601 = vst.msk [vmem:[#allocation2 + $0x28] sm:$0xff] %vm898, %v2585
      %2602 = vst.msk [vmem:[#allocation2 + $0x30] sm:$0xff] %vm898, %v2586
      %2603 = vst.msk [vmem:[#allocation2 + $0x38] sm:$0xff] %vm898, %v2587
      %2604 = vst.msk [vmem:[#allocation2 + $0x40] sm:$0xff] %vm898, %v2588
      %2605 = vst.msk [vmem:[#allocation2 + $0x48] sm:$0xff] %vm898, %v2589
      %2606 = vst.msk [vmem:[#allocation2 + $0x50] sm:$0xff] %vm898, %v2590
      %2607 = vst.msk [vmem:[#allocation2 + $0x58] sm:$0xff] %vm898, %v2591
      %2608 = vst.msk [vmem:[#allocation2 + $0x60] sm:$0xff] %vm898, %v2592
      %2609 = vst.msk [vmem:[#allocation2 + $0x68] sm:$0xff] %vm898, %v2593
      %2610 = vst.msk [vmem:[#allocation2 + $0x70] sm:$0xff] %vm898, %v2594
      %2611 = vst.msk [vmem:[#allocation2 + $0x78] sm:$0xff] %vm898, %v2595
      %2612 = vst.msk [vmem:[#allocation2 + $0x80] sm:$0xff] %vm898, %v2596
      %vm2613 = vcmp.eq.s32.totalorder %v2196, 0
      %vm2614 = vcmp.eq.s32.totalorder %v2197, 0
      %vm2615 = vcmp.eq.s32.totalorder %v2198, 0
      %vm2616 = vcmp.eq.s32.totalorder %v2199, 0
      %vm2617 = vcmp.eq.s32.totalorder %v2200, 0
      %vm2618 = vcmp.eq.s32.totalorder %v2201, 0
      %vm2619 = vcmp.eq.s32.totalorder %v2202, 0
      %vm2620 = vcmp.eq.s32.totalorder %v2203, 0
      %vm2621 = vcmp.eq.s32.totalorder %v2204, 0
      %vm2622 = vcmp.eq.s32.totalorder %v2205, 0
      %vm2623 = vcmp.eq.s32.totalorder %v2206, 0
      %vm2624 = vcmp.eq.s32.totalorder %v2207, 0
      %vm2625 = vcmp.eq.s32.totalorder %v2208, 0
      %vm2626 = vcmp.eq.s32.totalorder %v2209, 0
      %vm2627 = vcmp.eq.s32.totalorder %v2210, 0
      %vm2628 = vcmp.eq.s32.totalorder %v2211, 0
      %vm2629 = vcmp.eq.s32.totalorder %v2212, 0
      %vm2630 = vcmp.eq.s32.totalorder %v2213, 0
      %vm2631 = vcmp.eq.s32.totalorder %v2214, 0
      %vm2632 = vcmp.eq.s32.totalorder %v2215, 0
      %vm2633 = vcmp.eq.s32.totalorder %v2216, 0
      %vm2634 = vcmp.eq.s32.totalorder %v2217, 0
      %vm2635 = vcmp.eq.s32.totalorder %v2218, 0
      %vm2636 = vcmp.eq.s32.totalorder %v2219, 0
      %vm2637 = vcmp.eq.s32.totalorder %v2220, 0
      %vm2638 = vcmp.eq.s32.totalorder %v2221, 0
      %vm2639 = vcmp.eq.s32.totalorder %v2222, 0
      %vm2640 = vcmp.eq.s32.totalorder %v2223, 0
      %vm2641 = vcmp.eq.s32.totalorder %v2224, 0
      %vm2642 = vcmp.eq.s32.totalorder %v2225, 0
      %vm2643 = vcmp.eq.s32.totalorder %v2226, 0
      %vm2644 = vcmp.eq.s32.totalorder %v2227, 0
      %v2645 = vsel %vm2613, 1, 0
      %v2646 = vsel %vm2614, 1, 0
      %v2647 = vsel %vm2615, 1, 0
      %v2648 = vsel %vm2616, 1, 0
      %v2649 = vsel %vm2617, 1, 0
      %v2650 = vsel %vm2618, 1, 0
      %v2651 = vsel %vm2619, 1, 0
      %v2652 = vsel %vm2620, 1, 0
      %v2653 = vsel %vm2621, 1, 0
      %v2654 = vsel %vm2622, 1, 0
      %v2655 = vsel %vm2623, 1, 0
      %v2656 = vsel %vm2624, 1, 0
      %v2657 = vsel %vm2625, 1, 0
      %v2658 = vsel %vm2626, 1, 0
      %v2659 = vsel %vm2627, 1, 0
      %v2660 = vsel %vm2628, 1, 0
      %v2661 = vsel %vm2629, 1, 0
      %v2662 = vsel %vm2630, 1, 0
      %v2663 = vsel %vm2631, 1, 0
      %v2664 = vsel %vm2632, 1, 0
      %v2665 = vsel %vm2633, 1, 0
      %v2666 = vsel %vm2634, 1, 0
      %v2667 = vsel %vm2635, 1, 0
      %v2668 = vsel %vm2636, 1, 0
      %v2669 = vsel %vm2637, 1, 0
      %v2670 = vsel %vm2638, 1, 0
      %v2671 = vsel %vm2639, 1, 0
      %v2672 = vsel %vm2640, 1, 0
      %v2673 = vsel %vm2641, 1, 0
      %v2674 = vsel %vm2642, 1, 0
      %v2675 = vsel %vm2643, 1, 0
      %v2676 = vsel %vm2644, 1, 0
      %vm2677 = vcmp.eq.s32.totalorder %v2645, 1
      %vm2678 = vcmp.eq.s32.totalorder %v2646, 1
      %vm2679 = vcmp.eq.s32.totalorder %v2647, 1
      %vm2680 = vcmp.eq.s32.totalorder %v2648, 1
      %vm2681 = vcmp.eq.s32.totalorder %v2649, 1
      %vm2682 = vcmp.eq.s32.totalorder %v2650, 1
      %vm2683 = vcmp.eq.s32.totalorder %v2651, 1
      %vm2684 = vcmp.eq.s32.totalorder %v2652, 1
      %vm2685 = vcmp.eq.s32.totalorder %v2653, 1
      %vm2686 = vcmp.eq.s32.totalorder %v2654, 1
      %vm2687 = vcmp.eq.s32.totalorder %v2655, 1
      %vm2688 = vcmp.eq.s32.totalorder %v2656, 1
      %vm2689 = vcmp.eq.s32.totalorder %v2657, 1
      %vm2690 = vcmp.eq.s32.totalorder %v2658, 1
      %vm2691 = vcmp.eq.s32.totalorder %v2659, 1
      %vm2692 = vcmp.eq.s32.totalorder %v2660, 1
      %vm2693 = vcmp.eq.s32.totalorder %v2661, 1
      %vm2694 = vcmp.eq.s32.totalorder %v2662, 1
      %vm2695 = vcmp.eq.s32.totalorder %v2663, 1
      %vm2696 = vcmp.eq.s32.totalorder %v2664, 1
      %vm2697 = vcmp.eq.s32.totalorder %v2665, 1
      %vm2698 = vcmp.eq.s32.totalorder %v2666, 1
      %vm2699 = vcmp.eq.s32.totalorder %v2667, 1
      %vm2700 = vcmp.eq.s32.totalorder %v2668, 1
      %vm2701 = vcmp.eq.s32.totalorder %v2669, 1
      %vm2702 = vcmp.eq.s32.totalorder %v2670, 1
      %vm2703 = vcmp.eq.s32.totalorder %v2671, 1
      %vm2704 = vcmp.eq.s32.totalorder %v2672, 1
      %vm2705 = vcmp.eq.s32.totalorder %v2673, 1
      %vm2706 = vcmp.eq.s32.totalorder %v2674, 1
      %vm2707 = vcmp.eq.s32.totalorder %v2675, 1
      %vm2708 = vcmp.eq.s32.totalorder %v2676, 1
      %v2709 = vsel %vm2677, 0.0, %v1776
      %v2710 = vsel %vm2678, 0.0, %v1777
      %v2711 = vsel %vm2679, 0.0, %v1778
      %v2712 = vsel %vm2680, 0.0, %v1779
      %v2713 = vsel %vm2681, 0.0, %v1780
      %v2714 = vsel %vm2682, 0.0, %v1781
      %v2715 = vsel %vm2683, 0.0, %v1782
      %v2716 = vsel %vm2684, 0.0, %v1783
      %v2717 = vsel %vm2685, 0.0, %v1784
      %v2718 = vsel %vm2686, 0.0, %v1785
      %v2719 = vsel %vm2687, 0.0, %v1786
      %v2720 = vsel %vm2688, 0.0, %v1787
      %v2721 = vsel %vm2689, 0.0, %v1788
      %v2722 = vsel %vm2690, 0.0, %v1789
      %v2723 = vsel %vm2691, 0.0, %v1790
      %v2724 = vsel %vm2692, 0.0, %v1791
      %v2725 = vsel %vm2693, 0.0, %v1792
      %v2726 = vsel %vm2694, 0.0, %v1793
      %v2727 = vsel %vm2695, 0.0, %v1794
      %v2728 = vsel %vm2696, 0.0, %v1795
      %v2729 = vsel %vm2697, 0.0, %v1796
      %v2730 = vsel %vm2698, 0.0, %v1797
      %v2731 = vsel %vm2699, 0.0, %v1798
      %v2732 = vsel %vm2700, 0.0, %v1799
      %v2733 = vsel %vm2701, 0.0, %v1800
      %v2734 = vsel %vm2702, 0.0, %v1801
      %v2735 = vsel %vm2703, 0.0, %v1802
      %v2736 = vsel %vm2704, 0.0, %v1803
      %v2737 = vsel %vm2705, 0.0, %v1804
      %v2738 = vsel %vm2706, 0.0, %v1805
      %v2739 = vsel %vm2707, 0.0, %v1806
      %v2740 = vsel %vm2708, 0.0, %v1807
      %vm2773 = vcmask 1046528
      %v2774 = vrot.slane %v2709, 1
      %v2775 = vrot.slane %v2710, 1
      %v2776 = vsel %vm2773, %v2774, %v2775
      %v2777 = vrot.slane %v2711, 1
      %v2778 = vsel %vm2773, %v2775, %v2777
      %v2779 = vrot.slane %v2712, 1
      %v2780 = vsel %vm2773, %v2777, %v2779
      %v2781 = vrot.slane %v2713, 1
      %v2782 = vsel %vm2773, %v2779, %v2781
      %v2783 = vrot.slane %v2714, 1
      %v2784 = vsel %vm2773, %v2781, %v2783
      %v2785 = vrot.slane %v2715, 1
      %v2786 = vsel %vm2773, %v2783, %v2785
      %v2787 = vrot.slane %v2716, 1
      %v2788 = vsel %vm2773, %v2785, %v2787
      %v2789 = vrot.slane %v2717, 1
      %v2790 = vsel %vm2773, %v2787, %v2789
      %v2791 = vrot.slane %v2718, 1
      %v2792 = vsel %vm2773, %v2789, %v2791
      %v2793 = vrot.slane %v2719, 1
      %v2794 = vsel %vm2773, %v2791, %v2793
      %v2795 = vrot.slane %v2720, 1
      %v2796 = vsel %vm2773, %v2793, %v2795
      %v2797 = vrot.slane %v2721, 1
      %v2798 = vsel %vm2773, %v2795, %v2797
      %v2799 = vrot.slane %v2722, 1
      %v2800 = vsel %vm2773, %v2797, %v2799
      %v2801 = vrot.slane %v2723, 1
      %v2802 = vsel %vm2773, %v2799, %v2801
      %v2803 = vrot.slane %v2724, 1
      %v2804 = vsel %vm2773, %v2801, %v2803
      %v2805 = vrot.slane %v2725, 1
      %v2806 = vsel %vm2773, %v2803, %v2805
      %v2807 = vrot.slane %v2726, 1
      %v2808 = vsel %vm2773, %v2805, %v2807
      %v2809 = vrot.slane %v2727, 1
      %v2810 = vsel %vm2773, %v2807, %v2809
      %v2811 = vrot.slane %v2728, 1
      %v2812 = vsel %vm2773, %v2809, %v2811
      %v2813 = vrot.slane %v2729, 1
      %v2814 = vsel %vm2773, %v2811, %v2813
      %v2815 = vrot.slane %v2730, 1
      %v2816 = vsel %vm2773, %v2813, %v2815
      %v2817 = vrot.slane %v2731, 1
      %v2818 = vsel %vm2773, %v2815, %v2817
      %v2819 = vrot.slane %v2732, 1
      %v2820 = vsel %vm2773, %v2817, %v2819
      %v2821 = vrot.slane %v2733, 1
      %v2822 = vsel %vm2773, %v2819, %v2821
      %v2823 = vrot.slane %v2734, 1
      %v2824 = vsel %vm2773, %v2821, %v2823
      %v2825 = vrot.slane %v2735, 1
      %v2826 = vsel %vm2773, %v2823, %v2825
      %v2827 = vrot.slane %v2736, 1
      %v2828 = vsel %vm2773, %v2825, %v2827
      %v2829 = vrot.slane %v2737, 1
      %v2830 = vsel %vm2773, %v2827, %v2829
      %v2831 = vrot.slane %v2738, 1
      %v2832 = vsel %vm2773, %v2829, %v2831
      %v2833 = vrot.slane %v2739, 1
      %v2834 = vsel %vm2773, %v2831, %v2833
      %v2835 = vrot.slane %v2740, 1
      %v2836 = vsel %vm2773, %v2833, %v2835
      %v2869 = vsel %vm2773, %v2835, 0.0
      %v2870 = vpack.c.bf16 %v2778, %v2776
      %v2871 = vpack.c.bf16 %v2782, %v2780
      %v2872 = vpack.c.bf16 %v2786, %v2784
      %v2873 = vpack.c.bf16 %v2790, %v2788
      %v2874 = vpack.c.bf16 %v2794, %v2792
      %v2875 = vpack.c.bf16 %v2798, %v2796
      %v2876 = vpack.c.bf16 %v2802, %v2800
      %v2877 = vpack.c.bf16 %v2806, %v2804
      %v2878 = vpack.c.bf16 %v2810, %v2808
      %v2879 = vpack.c.bf16 %v2814, %v2812
      %v2880 = vpack.c.bf16 %v2818, %v2816
      %v2881 = vpack.c.bf16 %v2822, %v2820
      %v2882 = vpack.c.bf16 %v2826, %v2824
      %v2883 = vpack.c.bf16 %v2830, %v2828
      %v2884 = vpack.c.bf16 %v2834, %v2832
      %v2885 = vpack.c.bf16 %v2869, %v2836
      %2902 = vrot.lane.b32.xlu0 %v2870, 64
      %v2903 = vpop.permute.xlu0 %2902
      %2904 = vrot.lane.b32.xlu0 %v2871, 64
      %v2905 = vpop.permute.xlu0 %2904
      %2906 = vrot.lane.b32.xlu0 %v2872, 64
      %v2907 = vpop.permute.xlu0 %2906
      %2908 = vrot.lane.b32.xlu0 %v2873, 64
      %v2909 = vpop.permute.xlu0 %2908
      %2910 = vrot.lane.b32.xlu0 %v2874, 64
      %v2911 = vpop.permute.xlu0 %2910
      %2912 = vrot.lane.b32.xlu0 %v2875, 64
      %v2913 = vpop.permute.xlu0 %2912
      %2914 = vrot.lane.b32.xlu0 %v2876, 64
      %v2915 = vpop.permute.xlu0 %2914
      %2916 = vrot.lane.b32.xlu0 %v2877, 64
      %v2917 = vpop.permute.xlu0 %2916
      %2918 = vrot.lane.b32.xlu0 %v2878, 64
      %v2919 = vpop.permute.xlu0 %2918
      %2920 = vrot.lane.b32.xlu0 %v2879, 64
      %v2921 = vpop.permute.xlu0 %2920
      %2922 = vrot.lane.b32.xlu0 %v2880, 64
      %v2923 = vpop.permute.xlu0 %2922
      %2924 = vrot.lane.b32.xlu0 %v2881, 64
      %v2925 = vpop.permute.xlu0 %2924
      %2926 = vrot.lane.b32.xlu0 %v2882, 64
      %v2927 = vpop.permute.xlu0 %2926
      %2928 = vrot.lane.b32.xlu0 %v2883, 64
      %v2929 = vpop.permute.xlu0 %2928
      %2930 = vrot.lane.b32.xlu0 %v2884, 64
      %v2931 = vpop.permute.xlu0 %2930
      %2932 = vrot.lane.b32.xlu0 %v2885, 64
      %v2933 = vpop.permute.xlu0 %2932
      %vm2950 = vcmask 785920
      %2951 = vst.msk [vmem:[#allocation2 + $0x8] sm:$0xff] %vm2950, %v2903
      %2952 = vst.msk [vmem:[#allocation2 + $0x10] sm:$0xff] %vm2950, %v2905
      %2953 = vst.msk [vmem:[#allocation2 + $0x18] sm:$0xff] %vm2950, %v2907
      %2954 = vst.msk [vmem:[#allocation2 + $0x20] sm:$0xff] %vm2950, %v2909
      %2955 = vst.msk [vmem:[#allocation2 + $0x28] sm:$0xff] %vm2950, %v2911
      %2956 = vst.msk [vmem:[#allocation2 + $0x30] sm:$0xff] %vm2950, %v2913
      %2957 = vst.msk [vmem:[#allocation2 + $0x38] sm:$0xff] %vm2950, %v2915
      %2958 = vst.msk [vmem:[#allocation2 + $0x40] sm:$0xff] %vm2950, %v2917
      %2959 = vst.msk [vmem:[#allocation2 + $0x48] sm:$0xff] %vm2950, %v2919
      %2960 = vst.msk [vmem:[#allocation2 + $0x50] sm:$0xff] %vm2950, %v2921
      %2961 = vst.msk [vmem:[#allocation2 + $0x58] sm:$0xff] %vm2950, %v2923
      %2962 = vst.msk [vmem:[#allocation2 + $0x60] sm:$0xff] %vm2950, %v2925
      %2963 = vst.msk [vmem:[#allocation2 + $0x68] sm:$0xff] %vm2950, %v2927
      %2964 = vst.msk [vmem:[#allocation2 + $0x70] sm:$0xff] %vm2950, %v2929
      %2965 = vst.msk [vmem:[#allocation2 + $0x78] sm:$0xff] %vm2950, %v2931
      %2966 = vst.msk [vmem:[#allocation2 + $0x80] sm:$0xff] %vm2950, %v2933
      %v2967 = vld [vmem:[#allocation2] sm:$0xff]
      %v2968 = vld [vmem:[#allocation2 + $0x8] sm:$0xff]
      %v2969 = vld [vmem:[#allocation2 + $0x10] sm:$0xff]
      %v2970 = vld [vmem:[#allocation2 + $0x18] sm:$0xff]
      %v2971 = vld [vmem:[#allocation2 + $0x20] sm:$0xff]
      %v2972 = vld [vmem:[#allocation2 + $0x28] sm:$0xff]
      %v2973 = vld [vmem:[#allocation2 + $0x30] sm:$0xff]
      %v2974 = vld [vmem:[#allocation2 + $0x38] sm:$0xff]
      %v2975 = vld [vmem:[#allocation2 + $0x40] sm:$0xff]
      %v2976 = vld [vmem:[#allocation2 + $0x48] sm:$0xff]
      %v2977 = vld [vmem:[#allocation2 + $0x50] sm:$0xff]
      %v2978 = vld [vmem:[#allocation2 + $0x58] sm:$0xff]
      %v2979 = vld [vmem:[#allocation2 + $0x60] sm:$0xff]
      %v2980 = vld [vmem:[#allocation2 + $0x68] sm:$0xff]
      %v2981 = vld [vmem:[#allocation2 + $0x70] sm:$0xff]
      %v2982 = vld [vmem:[#allocation2 + $0x78] sm:$0xff]
      %v2983 = vld [vmem:[%s8] sm:$0xf]
      %v2984 = vld [vmem:[%s8 + $0x4] sm:$0xf]
      %v2985 = vld [vmem:[%s8 + $0x8] sm:$0xf]
      %v2986 = vld [vmem:[%s8 + $0xc] sm:$0xf]
      %v2987 = vld [vmem:[%s8 + $0x10] sm:$0xf]
      %v2988 = vld [vmem:[%s8 + $0x14] sm:$0xf]
      %v2989 = vld [vmem:[%s8 + $0x18] sm:$0xf]
      %v2990 = vld [vmem:[%s8 + $0x1c] sm:$0xf]
      %v2991 = vld [vmem:[%s8 + $0x20] sm:$0xf]
      %v2992 = vld [vmem:[%s8 + $0x24] sm:$0xf]
      %v2993 = vld [vmem:[%s8 + $0x28] sm:$0xf]
      %v2994 = vld [vmem:[%s8 + $0x2c] sm:$0xf]
      %v2995 = vld [vmem:[#allocation2 + $0x80] sm:$0xff]
      %s2996 = scalar_lea.vmem %s8, 48
      %v2997 = vld [vmem:[%s2996] sm:$0xf]
      %v2998 = vld [vmem:[%s2996 + $0x4] sm:$0xf]
      %v2999 = vld [vmem:[%s2996 + $0x8] sm:$0xf]
      %v3000 = vld [vmem:[%s2996 + $0xc] sm:$0xf]
      %v3001 = vld [vmem:[%s2996 + $0x10] sm:$0xf]
      %v3002 = vld [vmem:[%s2996 + $0x14] sm:$0xf]
      %v3003 = vld [vmem:[%s2996 + $0x18] sm:$0xf]
      %v3004 = vld [vmem:[%s2996 + $0x1c] sm:$0xf]
      %v3005 = vld [vmem:[%s2996 + $0x20] sm:$0xf]
      %v3006 = vld [vmem:[%s2996 + $0x24] sm:$0xf]
      %v3007 = vld [vmem:[%s2996 + $0x28] sm:$0xf]
      %v3008 = vld [vmem:[%s2996 + $0x2c] sm:$0xf]
      %v3021 = vunpack.c.l.b16 %v2997
      %v3022 = vunpack.c.l.b16 %v2998
      %v3023 = vunpack.c.l.b16 %v2999
      %v3024 = vunpack.c.l.b16 %v3000
      %v3025 = vunpack.c.l.b16 %v3001
      %v3026 = vunpack.c.l.b16 %v3002
      %v3027 = vunpack.c.l.b16 %v3003
      %v3028 = vunpack.c.l.b16 %v3004
      %v3029 = vunpack.c.l.b16 %v3005
      %v3030 = vunpack.c.l.b16 %v3006
      %v3031 = vunpack.c.l.b16 %v3007
      %v3032 = vunpack.c.l.b16 %v3008
      %v3033 = vpack.c.b16 %v3022, %v3021
      %v3034 = vpack.c.b16 %v3024, %v3023
      %v3035 = vpack.c.b16 %v3026, %v3025
      %v3036 = vpack.c.b16 %v3028, %v3027
      %v3037 = vpack.c.b16 %v3030, %v3029
      %v3038 = vpack.c.b16 %v3032, %v3031
      %v3046 = vsel %vm1808, %v2968, 0
      %v3049 = vsel %vm1808, %v2969, 0
      %v3052 = vsel %vm1808, %v2970, 0
      %v3055 = vsel %vm1808, %v2971, 0
      %v3058 = vsel %vm1808, %v2972, 0
      %v3061 = vsel %vm1808, %v2973, 0
      %v3064 = vsel %vm1808, %v2974, 0
      %v3067 = vsel %vm1808, %v2975, 0
      %v3070 = vsel %vm1808, %v2976, 0
      %v3073 = vsel %vm1808, %v2977, 0
      %v3076 = vsel %vm1808, %v2978, 0
      %v3079 = vsel %vm1808, %v2979, 0
      %v3082 = vsel %vm1808, %v2980, 0
      %v3085 = vsel %vm1808, %v2981, 0
      %v3088 = vsel %vm1808, %v2982, 0
      %v3091 = vsel %vm1808, %v2995, 0
      %3093 = vmatprep.subr.bf16.mxu0 0
      %3094 = vmatpush1.bf16.msra.mxu0 %v3033
      %3095 = vmatprep.subr.bf16.mxu0 0
      %3096 = vmatpush1.bf16.msra.mxu0 %v3034
      %3097 = vmatprep.subr.bf16.mxu0 0
      %3098 = vmatpush1.bf16.msra.mxu0 %v3035
      %3099 = vmatprep.subr.bf16.mxu0 0
      %3100 = vmatpush1.bf16.msra.mxu0 %v3036
      %3101 = vmatprep.subr.bf16.mxu0 0
      %3102 = vmatpush1.bf16.msra.mxu0 %v3037
      %3103 = vmatprep.subr.bf16.mxu0 0
      %3104 = vmatpush1.bf16.msra.mxu0 %v3038
      %3105 = vmatprep.subr.bf16.mxu0 0
      %3106 = vmatpush1.bf16.msra.mxu0 0
      %3107 = vmatprep.subr.bf16.mxu0 0
      %3108 = vmatpush1.bf16.msra.mxu0 0
      %3109 = vmatprep.subr.bf16.mxu0 0
      %3110 = vmatpush1.bf16.msra.mxu0 0
      %3111 = vmatprep.subr.bf16.mxu0 0
      %3112 = vmatpush1.bf16.msra.mxu0 0
      %3113 = vmatprep.subr.bf16.mxu0 0
      %3114 = vmatpush1.bf16.msra.mxu0 0
      %3115 = vmatprep.subr.bf16.mxu0 0
      %3116 = vmatpush1.bf16.msra.mxu0 0
      %3117 = vmatprep.subr.bf16.mxu0 0
      %3118 = vmatpush1.bf16.msra.mxu0 0
      %3119 = vmatprep.subr.bf16.mxu0 0
      %3120 = vmatpush1.bf16.msra.mxu0 0
      %3121 = vmatprep.subr.bf16.mxu0 0
      %3122 = vmatpush1.bf16.msra.mxu0 0
      %3123 = vmatprep.subr.bf16.mxu0 0
      %3124 = vmatpush1.bf16.msra.mxu0 0
      %3125 = vmatprep.mubr.bf16.mxu0 0
      %3126 = vmatmul.mubr.bf16.gmra.mrb[0].mxu0 %v3046
      %v3127 = vpop.f32.mrb[0].mxu0
      %v3128 = vadd.f32 0.0, %v3127
      %v3129 = vpop.f32.mrb[0].mxu0
      %v3130 = vpop.f32.mrb[0].mxu0
      %v3131 = vadd.f32 0.0, %v3130
      %v3132 = vpop.f32.mrb[0].mxu0
      %3133 = vmatprep.mubr.bf16.mxu0 0
      %3134 = vmatmul.mubr.bf16.gmra.mrb[0].mxu0 %v3049
      %v3135 = vpop.f32.mrb[0].mxu0
      %v3136 = vadd.f32 0.0, %v3135
      %v3137 = vpop.f32.mrb[0].mxu0
      %v3138 = vpop.f32.mrb[0].mxu0
      %v3139 = vadd.f32 0.0, %v3138
      %v3140 = vpop.f32.mrb[0].mxu0
      %3141 = vmatprep.mubr.bf16.mxu0 0
      %3142 = vmatmul.mubr.bf16.gmra.mrb[0].mxu0 %v3052
      %v3143 = vpop.f32.mrb[0].mxu0
      %v3144 = vadd.f32 0.0, %v3143
      %v3145 = vpop.f32.mrb[0].mxu0
      %v3146 = vpop.f32.mrb[0].mxu0
      %v3147 = vadd.f32 0.0, %v3146
      %v3148 = vpop.f32.mrb[0].mxu0
      %3149 = vmatprep.mubr.bf16.mxu0 0
      %3150 = vmatmul.mubr.bf16.gmra.mrb[0].mxu0 %v3055
      %v3151 = vpop.f32.mrb[0].mxu0
      %v3152 = vadd.f32 0.0, %v3151
      %v3153 = vpop.f32.mrb[0].mxu0
      %v3154 = vpop.f32.mrb[0].mxu0
      %v3155 = vadd.f32 0.0, %v3154
      %v3156 = vpop.f32.mrb[0].mxu0
      %3157 = vmatprep.mubr.bf16.mxu0 0
      %3158 = vmatmul.mubr.bf16.gmra.mrb[0].mxu0 %v3058
      %v3159 = vpop.f32.mrb[0].mxu0
      %v3160 = vadd.f32 0.0, %v3159
      %v3161 = vpop.f32.mrb[0].mxu0
      %v3162 = vpop.f32.mrb[0].mxu0
      %v3163 = vadd.f32 0.0, %v3162
      %v3164 = vpop.f32.mrb[0].mxu0
      %3165 = vmatprep.mubr.bf16.mxu0 0
      %3166 = vmatmul.mubr.bf16.gmra.mrb[0].mxu0 %v3061
      %v3167 = vpop.f32.mrb[0].mxu0
      %v3168 = vadd.f32 0.0, %v3167
      %v3169 = vpop.f32.mrb[0].mxu0
      %v3170 = vpop.f32.mrb[0].mxu0
      %v3171 = vadd.f32 0.0, %v3170
      %v3172 = vpop.f32.mrb[0].mxu0
      %3173 = vmatprep.mubr.bf16.mxu0 0
      %3174 = vmatmul.mubr.bf16.gmra.mrb[0].mxu0 %v3064
      %v3175 = vpop.f32.mrb[0].mxu0
      %v3176 = vadd.f32 0.0, %v3175
      %v3177 = vpop.f32.mrb[0].mxu0
      %v3178 = vpop.f32.mrb[0].mxu0
      %v3179 = vadd.f32 0.0, %v3178
      %v3180 = vpop.f32.mrb[0].mxu0
      %3181 = vmatprep.mubr.bf16.mxu0 0
      %3182 = vmatmul.mubr.bf16.gmra.mrb[0].mxu0 %v3067
      %v3183 = vpop.f32.mrb[0].mxu0
      %v3184 = vadd.f32 0.0, %v3183
      %v3185 = vpop.f32.mrb[0].mxu0
      %v3186 = vpop.f32.mrb[0].mxu0
      %v3187 = vadd.f32 0.0, %v3186
      %v3188 = vpop.f32.mrb[0].mxu0
      %3189 = vmatprep.mubr.bf16.mxu0 0
      %3190 = vmatmul.mubr.bf16.gmra.mrb[0].mxu0 %v3070
      %v3191 = vpop.f32.mrb[0].mxu0
      %v3192 = vadd.f32 0.0, %v3191
      %v3193 = vpop.f32.mrb[0].mxu0
      %v3194 = vpop.f32.mrb[0].mxu0
      %v3195 = vadd.f32 0.0, %v3194
      %v3196 = vpop.f32.mrb[0].mxu0
      %3197 = vmatprep.mubr.bf16.mxu0 0
      %3198 = vmatmul.mubr.bf16.gmra.mrb[0].mxu0 %v3073
      %v3199 = vpop.f32.mrb[0].mxu0
      %v3200 = vadd.f32 0.0, %v3199
      %v3201 = vpop.f32.mrb[0].mxu0
      %v3202 = vpop.f32.mrb[0].mxu0
      %v3203 = vadd.f32 0.0, %v3202
      %v3204 = vpop.f32.mrb[0].mxu0
      %3205 = vmatprep.mubr.bf16.mxu0 0
      %3206 = vmatmul.mubr.bf16.gmra.mrb[0].mxu0 %v3076
      %v3207 = vpop.f32.mrb[0].mxu0
      %v3208 = vadd.f32 0.0, %v3207
      %v3209 = vpop.f32.mrb[0].mxu0
      %v3210 = vpop.f32.mrb[0].mxu0
      %v3211 = vadd.f32 0.0, %v3210
      %v3212 = vpop.f32.mrb[0].mxu0
      %3213 = vmatprep.mubr.bf16.mxu0 0
      %3214 = vmatmul.mubr.bf16.gmra.mrb[0].mxu0 %v3079
      %v3215 = vpop.f32.mrb[0].mxu0
      %v3216 = vadd.f32 0.0, %v3215
      %v3217 = vpop.f32.mrb[0].mxu0
      %v3218 = vpop.f32.mrb[0].mxu0
      %v3219 = vadd.f32 0.0, %v3218
      %v3220 = vpop.f32.mrb[0].mxu0
      %3221 = vmatprep.mubr.bf16.mxu0 0
      %3222 = vmatmul.mubr.bf16.gmra.mrb[0].mxu0 %v3082
      %v3223 = vpop.f32.mrb[0].mxu0
      %v3224 = vadd.f32 0.0, %v3223
      %v3225 = vpop.f32.mrb[0].mxu0
      %v3226 = vpop.f32.mrb[0].mxu0
      %v3227 = vadd.f32 0.0, %v3226
      %v3228 = vpop.f32.mrb[0].mxu0
      %3229 = vmatprep.mubr.bf16.mxu0 0
      %3230 = vmatmul.mubr.bf16.gmra.mrb[0].mxu0 %v3085
      %v3231 = vpop.f32.mrb[0].mxu0
      %v3232 = vadd.f32 0.0, %v3231
      %v3233 = vpop.f32.mrb[0].mxu0
      %v3234 = vpop.f32.mrb[0].mxu0
      %v3235 = vadd.f32 0.0, %v3234
      %v3236 = vpop.f32.mrb[0].mxu0
      %3237 = vmatprep.mubr.bf16.mxu0 0
      %3238 = vmatmul.mubr.bf16.gmra.mrb[0].mxu0 %v3088
      %v3239 = vpop.f32.mrb[0].mxu0
      %v3240 = vadd.f32 0.0, %v3239
      %v3241 = vpop.f32.mrb[0].mxu0
      %v3242 = vpop.f32.mrb[0].mxu0
      %v3243 = vadd.f32 0.0, %v3242
      %v3244 = vpop.f32.mrb[0].mxu0
      %3245 = vmatprep.mubr.bf16.mxu0 0
      %3246 = vmatmul.mubr.bf16.gmra.mrb[0].mxu0 %v3091
      %v3247 = vpop.f32.mrb[0].mxu0
      %v3248 = vadd.f32 0.0, %v3247
      %v3249 = vpop.f32.mrb[0].mxu0
      %v3250 = vpop.f32.mrb[0].mxu0
      %v3251 = vadd.f32 0.0, %v3250
      %v3252 = vpop.f32.mrb[0].mxu0
      %3253 = vdwg.mxu0
      %v3266 = vunpack.c.l.b16 %v2983
      %v3267 = vunpack.c.l.b16 %v2984
      %v3268 = vunpack.c.l.b16 %v2985
      %v3269 = vunpack.c.l.b16 %v2986
      %v3270 = vunpack.c.l.b16 %v2987
      %v3271 = vunpack.c.l.b16 %v2988
      %v3272 = vunpack.c.l.b16 %v2989
      %v3273 = vunpack.c.l.b16 %v2990
      %v3274 = vunpack.c.l.b16 %v2991
      %v3275 = vunpack.c.l.b16 %v2992
      %v3276 = vunpack.c.l.b16 %v2993
      %v3277 = vunpack.c.l.b16 %v2994
      %v3278 = vpack.c.b16 %v3267, %v3266
      %v3279 = vpack.c.b16 %v3269, %v3268
      %v3280 = vpack.c.b16 %v3271, %v3270
      %v3281 = vpack.c.b16 %v3273, %v3272
      %v3282 = vpack.c.b16 %v3275, %v3274
      %v3283 = vpack.c.b16 %v3277, %v3276
      %v3291 = vsel %vm1808, %v2967, 0
      %3293 = vmatprep.subr.bf16.mxu0 0
      %3294 = vmatpush1.bf16.msra.mxu0 %v3278
      %3295 = vmatprep.subr.bf16.mxu0 0
      %3296 = vmatpush1.bf16.msra.mxu0 %v3279
      %3297 = vmatprep.subr.bf16.mxu0 0
      %3298 = vmatpush1.bf16.msra.mxu0 %v3280
      %3299 = vmatprep.subr.bf16.mxu0 0
      %3300 = vmatpush1.bf16.msra.mxu0 %v3281
      %3301 = vmatprep.subr.bf16.mxu0 0
      %3302 = vmatpush1.bf16.msra.mxu0 %v3282
      %3303 = vmatprep.subr.bf16.mxu0 0
      %3304 = vmatpush1.bf16.msra.mxu0 %v3283
      %3305 = vmatprep.subr.bf16.mxu0 0
      %3306 = vmatpush1.bf16.msra.mxu0 0
      %3307 = vmatprep.subr.bf16.mxu0 0
      %3308 = vmatpush1.bf16.msra.mxu0 0
      %3309 = vmatprep.subr.bf16.mxu0 0
      %3310 = vmatpush1.bf16.msra.mxu0 0
      %3311 = vmatprep.subr.bf16.mxu0 0
      %3312 = vmatpush1.bf16.msra.mxu0 0
      %3313 = vmatprep.subr.bf16.mxu0 0
      %3314 = vmatpush1.bf16.msra.mxu0 0
      %3315 = vmatprep.subr.bf16.mxu0 0
      %3316 = vmatpush1.bf16.msra.mxu0 0
      %3317 = vmatprep.subr.bf16.mxu0 0
      %3318 = vmatpush1.bf16.msra.mxu0 0
      %3319 = vmatprep.subr.bf16.mxu0 0
      %3320 = vmatpush1.bf16.msra.mxu0 0
      %3321 = vmatprep.subr.bf16.mxu0 0
      %3322 = vmatpush1.bf16.msra.mxu0 0
      %3323 = vmatprep.subr.bf16.mxu0 0
      %3324 = vmatpush1.bf16.msra.mxu0 0
      %3325 = vmatprep.mubr.bf16.mxu0 0
      %3326 = vmatmul.mubr.bf16.gmra.mrb[0].mxu0 %v3291
      %v3327 = vpop.f32.mrb[0].mxu0
      %v3328 = vadd.f32 %v3128, %v3327
      %v3329 = vpop.f32.mrb[0].mxu0
      %v3330 = vpop.f32.mrb[0].mxu0
      %v3331 = vadd.f32 %v3131, %v3330
      %v3332 = vpop.f32.mrb[0].mxu0
      %3333 = vmatprep.mubr.bf16.mxu0 0
      %3334 = vmatmul.mubr.bf16.gmra.mrb[0].mxu0 %v3046
      %v3335 = vpop.f32.mrb[0].mxu0
      %v3336 = vadd.f32 %v3136, %v3335
      %v3337 = vpop.f32.mrb[0].mxu0
      %v3338 = vpop.f32.mrb[0].mxu0
      %v3339 = vadd.f32 %v3139, %v3338
      %v3340 = vpop.f32.mrb[0].mxu0
      %3341 = vmatprep.mubr.bf16.mxu0 0
      %3342 = vmatmul.mubr.bf16.gmra.mrb[0].mxu0 %v3049
      %v3343 = vpop.f32.mrb[0].mxu0
      %v3344 = vadd.f32 %v3144, %v3343
      %v3345 = vpop.f32.mrb[0].mxu0
      %v3346 = vpop.f32.mrb[0].mxu0
      %v3347 = vadd.f32 %v3147, %v3346
      %v3348 = vpop.f32.mrb[0].mxu0
      %3349 = vmatprep.mubr.bf16.mxu0 0
      %3350 = vmatmul.mubr.bf16.gmra.mrb[0].mxu0 %v3052
      %v3351 = vpop.f32.mrb[0].mxu0
      %v3352 = vadd.f32 %v3152, %v3351
      %v3353 = vpop.f32.mrb[0].mxu0
      %v3354 = vpop.f32.mrb[0].mxu0
      %v3355 = vadd.f32 %v3155, %v3354
      %v3356 = vpop.f32.mrb[0].mxu0
      %3357 = vmatprep.mubr.bf16.mxu0 0
      %3358 = vmatmul.mubr.bf16.gmra.mrb[0].mxu0 %v3055
      %v3359 = vpop.f32.mrb[0].mxu0
      %v3360 = vadd.f32 %v3160, %v3359
      %v3361 = vpop.f32.mrb[0].mxu0
      %v3362 = vpop.f32.mrb[0].mxu0
      %v3363 = vadd.f32 %v3163, %v3362
      %v3364 = vpop.f32.mrb[0].mxu0
      %3365 = vmatprep.mubr.bf16.mxu0 0
      %3366 = vmatmul.mubr.bf16.gmra.mrb[0].mxu0 %v3058
      %v3367 = vpop.f32.mrb[0].mxu0
      %v3368 = vadd.f32 %v3168, %v3367
      %v3369 = vpop.f32.mrb[0].mxu0
      %v3370 = vpop.f32.mrb[0].mxu0
      %v3371 = vadd.f32 %v3171, %v3370
      %v3372 = vpop.f32.mrb[0].mxu0
      %3373 = vmatprep.mubr.bf16.mxu0 0
      %3374 = vmatmul.mubr.bf16.gmra.mrb[0].mxu0 %v3061
      %v3375 = vpop.f32.mrb[0].mxu0
      %v3376 = vadd.f32 %v3176, %v3375
      %v3377 = vpop.f32.mrb[0].mxu0
      %v3378 = vpop.f32.mrb[0].mxu0
      %v3379 = vadd.f32 %v3179, %v3378
      %v3380 = vpop.f32.mrb[0].mxu0
      %3381 = vmatprep.mubr.bf16.mxu0 0
      %3382 = vmatmul.mubr.bf16.gmra.mrb[0].mxu0 %v3064
      %v3383 = vpop.f32.mrb[0].mxu0
      %v3384 = vadd.f32 %v3184, %v3383
      %v3385 = vpop.f32.mrb[0].mxu0
      %v3386 = vpop.f32.mrb[0].mxu0
      %v3387 = vadd.f32 %v3187, %v3386
      %v3388 = vpop.f32.mrb[0].mxu0
      %3389 = vmatprep.mubr.bf16.mxu0 0
      %3390 = vmatmul.mubr.bf16.gmra.mrb[0].mxu0 %v3067
      %v3391 = vpop.f32.mrb[0].mxu0
      %v3392 = vadd.f32 %v3192, %v3391
      %v3393 = vpop.f32.mrb[0].mxu0
      %v3394 = vpop.f32.mrb[0].mxu0
      %v3395 = vadd.f32 %v3195, %v3394
      %v3396 = vpop.f32.mrb[0].mxu0
      %3397 = vmatprep.mubr.bf16.mxu0 0
      %3398 = vmatmul.mubr.bf16.gmra.mrb[0].mxu0 %v3070
      %v3399 = vpop.f32.mrb[0].mxu0
      %v3400 = vadd.f32 %v3200, %v3399
      %v3401 = vpop.f32.mrb[0].mxu0
      %v3402 = vpop.f32.mrb[0].mxu0
      %v3403 = vadd.f32 %v3203, %v3402
      %v3404 = vpop.f32.mrb[0].mxu0
      %3405 = vmatprep.mubr.bf16.mxu0 0
      %3406 = vmatmul.mubr.bf16.gmra.mrb[0].mxu0 %v3073
      %v3407 = vpop.f32.mrb[0].mxu0
      %v3408 = vadd.f32 %v3208, %v3407
      %v3409 = vpop.f32.mrb[0].mxu0
      %v3410 = vpop.f32.mrb[0].mxu0
      %v3411 = vadd.f32 %v3211, %v3410
      %v3412 = vpop.f32.mrb[0].mxu0
      %3413 = vmatprep.mubr.bf16.mxu0 0
      %3414 = vmatmul.mubr.bf16.gmra.mrb[0].mxu0 %v3076
      %v3415 = vpop.f32.mrb[0].mxu0
      %v3416 = vadd.f32 %v3216, %v3415
      %v3417 = vpop.f32.mrb[0].mxu0
      %v3418 = vpop.f32.mrb[0].mxu0
      %v3419 = vadd.f32 %v3219, %v3418
      %v3420 = vpop.f32.mrb[0].mxu0
      %3421 = vmatprep.mubr.bf16.mxu0 0
      %3422 = vmatmul.mubr.bf16.gmra.mrb[0].mxu0 %v3079
      %v3423 = vpop.f32.mrb[0].mxu0
      %v3424 = vadd.f32 %v3224, %v3423
      %v3425 = vpop.f32.mrb[0].mxu0
      %v3426 = vpop.f32.mrb[0].mxu0
      %v3427 = vadd.f32 %v3227, %v3426
      %v3428 = vpop.f32.mrb[0].mxu0
      %3429 = vmatprep.mubr.bf16.mxu0 0
      %3430 = vmatmul.mubr.bf16.gmra.mrb[0].mxu0 %v3082
      %v3431 = vpop.f32.mrb[0].mxu0
      %v3432 = vadd.f32 %v3232, %v3431
      %v3433 = vpop.f32.mrb[0].mxu0
      %v3434 = vpop.f32.mrb[0].mxu0
      %v3435 = vadd.f32 %v3235, %v3434
      %v3436 = vpop.f32.mrb[0].mxu0
      %3437 = vmatprep.mubr.bf16.mxu0 0
      %3438 = vmatmul.mubr.bf16.gmra.mrb[0].mxu0 %v3085
      %v3439 = vpop.f32.mrb[0].mxu0
      %v3440 = vadd.f32 %v3240, %v3439
      %v3441 = vpop.f32.mrb[0].mxu0
      %v3442 = vpop.f32.mrb[0].mxu0
      %v3443 = vadd.f32 %v3243, %v3442
      %v3444 = vpop.f32.mrb[0].mxu0
      %3445 = vmatprep.mubr.bf16.mxu0 0
      %3446 = vmatmul.mubr.bf16.gmra.mrb[0].mxu0 %v3088
      %v3447 = vpop.f32.mrb[0].mxu0
      %v3448 = vadd.f32 %v3248, %v3447
      %v3449 = vpop.f32.mrb[0].mxu0
      %v3450 = vpop.f32.mrb[0].mxu0
      %v3451 = vadd.f32 %v3251, %v3450
      %v3452 = vpop.f32.mrb[0].mxu0
      %3453 = vdwg.mxu0
      %v3454 = vld [vmem:[#allocation2 + $0x10] sm:$0xff]
      %v3455 = vld [vmem:[#allocation2 + $0x18] sm:$0xff]
      %v3456 = vld [vmem:[#allocation2 + $0x20] sm:$0xff]
      %v3457 = vld [vmem:[#allocation2 + $0x28] sm:$0xff]
      %v3458 = vld [vmem:[#allocation2 + $0x30] sm:$0xff]
      %v3459 = vld [vmem:[#allocation2 + $0x38] sm:$0xff]
      %v3460 = vld [vmem:[#allocation2 + $0x40] sm:$0xff]
      %v3461 = vld [vmem:[#allocation2 + $0x48] sm:$0xff]
      %v3462 = vld [vmem:[#allocation2 + $0x50] sm:$0xff]
      %v3463 = vld [vmem:[#allocation2 + $0x58] sm:$0xff]
      %v3464 = vld [vmem:[#allocation2 + $0x60] sm:$0xff]
      %v3465 = vld [vmem:[#allocation2 + $0x68] sm:$0xff]
      %v3466 = vld [vmem:[#allocation2 + $0x70] sm:$0xff]
      %v3467 = vld [vmem:[#allocation2 + $0x78] sm:$0xff]
      %v3468 = vld [vmem:[#allocation2 + $0x80] sm:$0xff]
      %v3469 = vld [vmem:[#allocation2 + $0x88] sm:$0xff]
      %s3470 = scalar_lea.vmem %s8, 96
      %v3471 = vld [vmem:[%s3470] sm:$0xf]
      %v3472 = vld [vmem:[%s3470 + $0x4] sm:$0xf]
      %v3473 = vld [vmem:[%s3470 + $0x8] sm:$0xf]
      %v3474 = vld [vmem:[%s3470 + $0xc] sm:$0xf]
      %v3475 = vld [vmem:[%s3470 + $0x10] sm:$0xf]
      %v3476 = vld [vmem:[%s3470 + $0x14] sm:$0xf]
      %v3477 = vld [vmem:[%s3470 + $0x18] sm:$0xf]
      %v3478 = vld [vmem:[%s3470 + $0x1c] sm:$0xf]
      %v3479 = vld [vmem:[%s3470 + $0x20] sm:$0xf]
      %v3480 = vld [vmem:[%s3470 + $0x24] sm:$0xf]
      %v3481 = vld [vmem:[%s3470 + $0x28] sm:$0xf]
      %v3482 = vld [vmem:[%s3470 + $0x2c] sm:$0xf]
      %v3495 = vunpack.c.l.b16 %v3471
      %v3496 = vunpack.c.l.b16 %v3472
      %v3497 = vunpack.c.l.b16 %v3473
      %v3498 = vunpack.c.l.b16 %v3474
      %v3499 = vunpack.c.l.b16 %v3475
      %v3500 = vunpack.c.l.b16 %v3476
      %v3501 = vunpack.c.l.b16 %v3477
      %v3502 = vunpack.c.l.b16 %v3478
      %v3503 = vunpack.c.l.b16 %v3479
      %v3504 = vunpack.c.l.b16 %v3480
      %v3505 = vunpack.c.l.b16 %v3481
      %v3506 = vunpack.c.l.b16 %v3482
      %v3507 = vpack.c.b16 %v3496, %v3495
      %v3508 = vpack.c.b16 %v3498, %v3497
      %v3509 = vpack.c.b16 %v3500, %v3499
      %v3510 = vpack.c.b16 %v3502, %v3501
      %v3511 = vpack.c.b16 %v3504, %v3503
      %v3512 = vpack.c.b16 %v3506, %v3505
      %v3520 = vsel %vm1808, %v3454, 0
      %v3523 = vsel %vm1808, %v3455, 0
      %v3526 = vsel %vm1808, %v3456, 0
      %v3529 = vsel %vm1808, %v3457, 0
      %v3532 = vsel %vm1808, %v3458, 0
      %v3535 = vsel %vm1808, %v3459, 0
      %v3538 = vsel %vm1808, %v3460, 0
      %v3541 = vsel %vm1808, %v3461, 0
      %v3544 = vsel %vm1808, %v3462, 0
      %v3547 = vsel %vm1808, %v3463, 0
      %v3550 = vsel %vm1808, %v3464, 0
      %v3553 = vsel %vm1808, %v3465, 0
      %v3556 = vsel %vm1808, %v3466, 0
      %v3559 = vsel %vm1808, %v3467, 0
      %v3562 = vsel %vm1808, %v3468, 0
      %v3565 = vsel %vm1808, %v3469, 0
      %3567 = vmatprep.subr.bf16.mxu0 0
      %3568 = vmatpush1.bf16.msra.mxu0 %v3507
      %3569 = vmatprep.subr.bf16.mxu0 0
      %3570 = vmatpush1.bf16.msra.mxu0 %v3508
      %3571 = vmatprep.subr.bf16.mxu0 0
      %3572 = vmatpush1.bf16.msra.mxu0 %v3509
      %3573 = vmatprep.subr.bf16.mxu0 0
      %3574 = vmatpush1.bf16.msra.mxu0 %v3510
      %3575 = vmatprep.subr.bf16.mxu0 0
      %3576 = vmatpush1.bf16.msra.mxu0 %v3511
      %3577 = vmatprep.subr.bf16.mxu0 0
      %3578 = vmatpush1.bf16.msra.mxu0 %v3512
      %3579 = vmatprep.subr.bf16.mxu0 0
      %3580 = vmatpush1.bf16.msra.mxu0 0
      %3581 = vmatprep.subr.bf16.mxu0 0
      %3582 = vmatpush1.bf16.msra.mxu0 0
      %3583 = vmatprep.subr.bf16.mxu0 0
      %3584 = vmatpush1.bf16.msra.mxu0 0
      %3585 = vmatprep.subr.bf16.mxu0 0
      %3586 = vmatpush1.bf16.msra.mxu0 0
      %3587 = vmatprep.subr.bf16.mxu0 0
      %3588 = vmatpush1.bf16.msra.mxu0 0
      %3589 = vmatprep.subr.bf16.mxu0 0
      %3590 = vmatpush1.bf16.msra.mxu0 0
      %3591 = vmatprep.subr.bf16.mxu0 0
      %3592 = vmatpush1.bf16.msra.mxu0 0
      %3593 = vmatprep.subr.bf16.mxu0 0
      %3594 = vmatpush1.bf16.msra.mxu0 0
      %3595 = vmatprep.subr.bf16.mxu0 0
      %3596 = vmatpush1.bf16.msra.mxu0 0
      %3597 = vmatprep.subr.bf16.mxu0 0
      %3598 = vmatpush1.bf16.msra.mxu0 0
      %3599 = vmatprep.mubr.bf16.mxu0 0
      %3600 = vmatmul.mubr.bf16.gmra.mrb[0].mxu0 %v3520
      %v3601 = vpop.f32.mrb[0].mxu0
      %v3602 = vadd.f32 0.0, %v3601
      %v3603 = vpop.f32.mrb[0].mxu0
      %v3604 = vpop.f32.mrb[0].mxu0
      %v3605 = vadd.f32 0.0, %v3604
      %v3606 = vpop.f32.mrb[0].mxu0
      %3607 = vmatprep.mubr.bf16.mxu0 0
      %3608 = vmatmul.mubr.bf16.gmra.mrb[0].mxu0 %v3523
      %v3609 = vpop.f32.mrb[0].mxu0
      %v3610 = vadd.f32 0.0, %v3609
      %v3611 = vpop.f32.mrb[0].mxu0
      %v3612 = vpop.f32.mrb[0].mxu0
      %v3613 = vadd.f32 0.0, %v3612
      %v3614 = vpop.f32.mrb[0].mxu0
      %3615 = vmatprep.mubr.bf16.mxu0 0
      %3616 = vmatmul.mubr.bf16.gmra.mrb[0].mxu0 %v3526
      %v3617 = vpop.f32.mrb[0].mxu0
      %v3618 = vadd.f32 0.0, %v3617
      %v3619 = vpop.f32.mrb[0].mxu0
      %v3620 = vpop.f32.mrb[0].mxu0
      %v3621 = vadd.f32 0.0, %v3620
      %v3622 = vpop.f32.mrb[0].mxu0
      %3623 = vmatprep.mubr.bf16.mxu0 0
      %3624 = vmatmul.mubr.bf16.gmra.mrb[0].mxu0 %v3529
      %v3625 = vpop.f32.mrb[0].mxu0
      %v3626 = vadd.f32 0.0, %v3625
      %v3627 = vpop.f32.mrb[0].mxu0
      %v3628 = vpop.f32.mrb[0].mxu0
      %v3629 = vadd.f32 0.0, %v3628
      %v3630 = vpop.f32.mrb[0].mxu0
      %3631 = vmatprep.mubr.bf16.mxu0 0
      %3632 = vmatmul.mubr.bf16.gmra.mrb[0].mxu0 %v3532
      %v3633 = vpop.f32.mrb[0].mxu0
      %v3634 = vadd.f32 0.0, %v3633
      %v3635 = vpop.f32.mrb[0].mxu0
      %v3636 = vpop.f32.mrb[0].mxu0
      %v3637 = vadd.f32 0.0, %v3636
      %v3638 = vpop.f32.mrb[0].mxu0
      %3639 = vmatprep.mubr.bf16.mxu0 0
      %3640 = vmatmul.mubr.bf16.gmra.mrb[0].mxu0 %v3535
      %v3641 = vpop.f32.mrb[0].mxu0
      %v3642 = vadd.f32 0.0, %v3641
      %v3643 = vpop.f32.mrb[0].mxu0
      %v3644 = vpop.f32.mrb[0].mxu0
      %v3645 = vadd.f32 0.0, %v3644
      %v3646 = vpop.f32.mrb[0].mxu0
      %3647 = vmatprep.mubr.bf16.mxu0 0
      %3648 = vmatmul.mubr.bf16.gmra.mrb[0].mxu0 %v3538
      %v3649 = vpop.f32.mrb[0].mxu0
      %v3650 = vadd.f32 0.0, %v3649
      %v3651 = vpop.f32.mrb[0].mxu0
      %v3652 = vpop.f32.mrb[0].mxu0
      %v3653 = vadd.f32 0.0, %v3652
      %v3654 = vpop.f32.mrb[0].mxu0
      %3655 = vmatprep.mubr.bf16.mxu0 0
      %3656 = vmatmul.mubr.bf16.gmra.mrb[0].mxu0 %v3541
      %v3657 = vpop.f32.mrb[0].mxu0
      %v3658 = vadd.f32 0.0, %v3657
      %v3659 = vpop.f32.mrb[0].mxu0
      %v3660 = vpop.f32.mrb[0].mxu0
      %v3661 = vadd.f32 0.0, %v3660
      %v3662 = vpop.f32.mrb[0].mxu0
      %3663 = vmatprep.mubr.bf16.mxu0 0
      %3664 = vmatmul.mubr.bf16.gmra.mrb[0].mxu0 %v3544
      %v3665 = vpop.f32.mrb[0].mxu0
      %v3666 = vadd.f32 0.0, %v3665
      %v3667 = vpop.f32.mrb[0].mxu0
      %v3668 = vpop.f32.mrb[0].mxu0
      %v3669 = vadd.f32 0.0, %v3668
      %v3670 = vpop.f32.mrb[0].mxu0
      %3671 = vmatprep.mubr.bf16.mxu0 0
      %3672 = vmatmul.mubr.bf16.gmra.mrb[0].mxu0 %v3547
      %v3673 = vpop.f32.mrb[0].mxu0
      %v3674 = vadd.f32 0.0, %v3673
      %v3675 = vpop.f32.mrb[0].mxu0
      %v3676 = vpop.f32.mrb[0].mxu0
      %v3677 = vadd.f32 0.0, %v3676
      %v3678 = vpop.f32.mrb[0].mxu0
      %3679 = vmatprep.mubr.bf16.mxu0 0
      %3680 = vmatmul.mubr.bf16.gmra.mrb[0].mxu0 %v3550
      %v3681 = vpop.f32.mrb[0].mxu0
      %v3682 = vadd.f32 0.0, %v3681
      %v3683 = vpop.f32.mrb[0].mxu0
      %v3684 = vpop.f32.mrb[0].mxu0
      %v3685 = vadd.f32 0.0, %v3684
      %v3686 = vpop.f32.mrb[0].mxu0
      %3687 = vmatprep.mubr.bf16.mxu0 0
      %3688 = vmatmul.mubr.bf16.gmra.mrb[0].mxu0 %v3553
      %v3689 = vpop.f32.mrb[0].mxu0
      %v3690 = vadd.f32 0.0, %v3689
      %v3691 = vpop.f32.mrb[0].mxu0
      %v3692 = vpop.f32.mrb[0].mxu0
      %v3693 = vadd.f32 0.0, %v3692
      %v3694 = vpop.f32.mrb[0].mxu0
      %3695 = vmatprep.mubr.bf16.mxu0 0
      %3696 = vmatmul.mubr.bf16.gmra.mrb[0].mxu0 %v3556
      %v3697 = vpop.f32.mrb[0].mxu0
      %v3698 = vadd.f32 0.0, %v3697
      %v3699 = vpop.f32.mrb[0].mxu0
      %v3700 = vpop.f32.mrb[0].mxu0
      %v3701 = vadd.f32 0.0, %v3700
      %v3702 = vpop.f32.mrb[0].mxu0
      %3703 = vmatprep.mubr.bf16.mxu0 0
      %3704 = vmatmul.mubr.bf16.gmra.mrb[0].mxu0 %v3559
      %v3705 = vpop.f32.mrb[0].mxu0
      %v3706 = vadd.f32 0.0, %v3705
      %v3707 = vpop.f32.mrb[0].mxu0
      %v3708 = vpop.f32.mrb[0].mxu0
      %v3709 = vadd.f32 0.0, %v3708
      %v3710 = vpop.f32.mrb[0].mxu0
      %3711 = vmatprep.mubr.bf16.mxu0 0
      %3712 = vmatmul.mubr.bf16.gmra.mrb[0].mxu0 %v3562
      %v3713 = vpop.f32.mrb[0].mxu0
      %v3714 = vadd.f32 0.0, %v3713
      %v3715 = vpop.f32.mrb[0].mxu0
      %v3716 = vpop.f32.mrb[0].mxu0
      %v3717 = vadd.f32 0.0, %v3716
      %v3718 = vpop.f32.mrb[0].mxu0
      %3719 = vmatprep.mubr.bf16.mxu0 0
      %3720 = vmatmul.mubr.bf16.gmra.mrb[0].mxu0 %v3565
      %v3721 = vpop.f32.mrb[0].mxu0
      %v3722 = vadd.f32 0.0, %v3721
      %v3723 = vpop.f32.mrb[0].mxu0
      %v3724 = vpop.f32.mrb[0].mxu0
      %v3725 = vadd.f32 0.0, %v3724
      %v3726 = vpop.f32.mrb[0].mxu0
      %3727 = vdwg.mxu0
      %v3728 = vadd.f32 %v3328, %v3602
      %v3729 = vadd.f32 %v3331, %v3605
      %v3730 = vadd.f32 %v3336, %v3610
      %v3731 = vadd.f32 %v3339, %v3613
      %v3732 = vadd.f32 %v3344, %v3618
      %v3733 = vadd.f32 %v3347, %v3621
      %v3734 = vadd.f32 %v3352, %v3626
      %v3735 = vadd.f32 %v3355, %v3629
      %v3736 = vadd.f32 %v3360, %v3634
      %v3737 = vadd.f32 %v3363, %v3637
      %v3738 = vadd.f32 %v3368, %v3642
      %v3739 = vadd.f32 %v3371, %v3645
      %v3740 = vadd.f32 %v3376, %v3650
      %v3741 = vadd.f32 %v3379, %v3653
      %v3742 = vadd.f32 %v3384, %v3658
      %v3743 = vadd.f32 %v3387, %v3661
      %v3744 = vadd.f32 %v3392, %v3666
      %v3745 = vadd.f32 %v3395, %v3669
      %v3746 = vadd.f32 %v3400, %v3674
      %v3747 = vadd.f32 %v3403, %v3677
      %v3748 = vadd.f32 %v3408, %v3682
      %v3749 = vadd.f32 %v3411, %v3685
      %v3750 = vadd.f32 %v3416, %v3690
      %v3751 = vadd.f32 %v3419, %v3693
      %v3752 = vadd.f32 %v3424, %v3698
      %v3753 = vadd.f32 %v3427, %v3701
      %v3754 = vadd.f32 %v3432, %v3706
      %v3755 = vadd.f32 %v3435, %v3709
      %v3756 = vadd.f32 %v3440, %v3714
      %v3757 = vadd.f32 %v3443, %v3717
      %v3758 = vadd.f32 %v3448, %v3722
      %v3759 = vadd.f32 %v3451, %v3725
      %v3760 = vld [vmem:[%s9] sm:$0x1]
      %v3762 = vlaneseq
      %v3763 = vshrl.u32 %v3762, 7
      %v3764 = vsub.s32 0, %v3763
      %v3765 = vrot.slane %v3760, %v3764
      %v3767 = vadd.f32 %v3728, %v3765
      %v3768 = vadd.f32 %v3729, %v3765
      %v3769 = vadd.f32 %v3730, %v3765
      %v3770 = vadd.f32 %v3731, %v3765
      %v3771 = vadd.f32 %v3732, %v3765
      %v3772 = vadd.f32 %v3733, %v3765
      %v3773 = vadd.f32 %v3734, %v3765
      %v3774 = vadd.f32 %v3735, %v3765
      %v3775 = vadd.f32 %v3736, %v3765
      %v3776 = vadd.f32 %v3737, %v3765
      %v3777 = vadd.f32 %v3738, %v3765
      %v3778 = vadd.f32 %v3739, %v3765
      %v3779 = vadd.f32 %v3740, %v3765
      %v3780 = vadd.f32 %v3741, %v3765
      %v3781 = vadd.f32 %v3742, %v3765
      %v3782 = vadd.f32 %v3743, %v3765
      %v3783 = vadd.f32 %v3744, %v3765
      %v3784 = vadd.f32 %v3745, %v3765
      %v3785 = vadd.f32 %v3746, %v3765
      %v3786 = vadd.f32 %v3747, %v3765
      %v3787 = vadd.f32 %v3748, %v3765
      %v3788 = vadd.f32 %v3749, %v3765
      %v3789 = vadd.f32 %v3750, %v3765
      %v3790 = vadd.f32 %v3751, %v3765
      %v3791 = vadd.f32 %v3752, %v3765
      %v3792 = vadd.f32 %v3753, %v3765
      %v3793 = vadd.f32 %v3754, %v3765
      %v3794 = vadd.f32 %v3755, %v3765
      %v3795 = vadd.f32 %v3756, %v3765
      %v3796 = vadd.f32 %v3757, %v3765
      %v3797 = vadd.f32 %v3758, %v3765
      %v3798 = vadd.f32 %v3759, %v3765
      %v3799 = vld [vmem:[%s16] sm:$0xff]
      %v3800 = vld [vmem:[%s16 + $0x8] sm:$0xff]
      %v3801 = vld [vmem:[%s16 + $0x10] sm:$0xff]
      %v3802 = vld [vmem:[%s16 + $0x18] sm:$0xff]
      %v3803 = vld [vmem:[%s17] sm:$0xff]
      %v3804 = vld [vmem:[%s17 + $0x8] sm:$0xff]
      %v3805 = vld [vmem:[%s17 + $0x10] sm:$0xff]
      %v3806 = vld [vmem:[%s17 + $0x18] sm:$0xff]
      %v3807 = vld [vmem:[%s10] sm:$0x1]
      %v3808 = vld [vmem:[%s11] sm:$0x1]
      %v3809 = vsel %vm898, %v3767, 0.0
      %v3810 = vsel %vm898, %v3768, 0.0
      %v3811 = vadd.f32 %v3809, %v3810
      %v3812 = vsel %vm898, %v3769, 0.0
      %v3813 = vadd.f32 %v3811, %v3812
      %v3814 = vsel %vm898, %v3770, 0.0
      %v3815 = vadd.f32 %v3813, %v3814
      %v3816 = vsel %vm898, %v3771, 0.0
      %v3817 = vadd.f32 %v3815, %v3816
      %v3818 = vsel %vm898, %v3772, 0.0
      %v3819 = vadd.f32 %v3817, %v3818
      %v3820 = vsel %vm898, %v3773, 0.0
      %v3821 = vadd.f32 %v3819, %v3820
      %v3822 = vsel %vm898, %v3774, 0.0
      %v3823 = vadd.f32 %v3821, %v3822
      %v3824 = vsel %vm898, %v3775, 0.0
      %v3825 = vadd.f32 %v3823, %v3824
      %v3826 = vsel %vm898, %v3776, 0.0
      %v3827 = vadd.f32 %v3825, %v3826
      %v3828 = vsel %vm898, %v3777, 0.0
      %v3829 = vadd.f32 %v3827, %v3828
      %v3830 = vsel %vm898, %v3778, 0.0
      %v3831 = vadd.f32 %v3829, %v3830
      %v3832 = vsel %vm898, %v3779, 0.0
      %v3833 = vadd.f32 %v3831, %v3832
      %v3834 = vsel %vm898, %v3780, 0.0
      %v3835 = vadd.f32 %v3833, %v3834
      %v3836 = vsel %vm898, %v3781, 0.0
      %v3837 = vadd.f32 %v3835, %v3836
      %v3838 = vsel %vm898, %v3782, 0.0
      %v3839 = vadd.f32 %v3837, %v3838
      %v3840 = vsel %vm898, %v3783, 0.0
      %v3841 = vadd.f32 %v3839, %v3840
      %v3842 = vsel %vm898, %v3784, 0.0
      %v3843 = vadd.f32 %v3841, %v3842
      %v3844 = vsel %vm898, %v3785, 0.0
      %v3845 = vadd.f32 %v3843, %v3844
      %v3846 = vsel %vm898, %v3786, 0.0
      %v3847 = vadd.f32 %v3845, %v3846
      %v3848 = vsel %vm898, %v3787, 0.0
      %v3849 = vadd.f32 %v3847, %v3848
      %v3850 = vsel %vm898, %v3788, 0.0
      %v3851 = vadd.f32 %v3849, %v3850
      %v3852 = vsel %vm898, %v3789, 0.0
      %v3853 = vadd.f32 %v3851, %v3852
      %v3854 = vsel %vm898, %v3790, 0.0
      %v3855 = vadd.f32 %v3853, %v3854
      %v3856 = vsel %vm898, %v3791, 0.0
      %v3857 = vadd.f32 %v3855, %v3856
      %v3858 = vsel %vm898, %v3792, 0.0
      %v3859 = vadd.f32 %v3857, %v3858
      %v3860 = vsel %vm898, %v3793, 0.0
      %v3861 = vadd.f32 %v3859, %v3860
      %v3862 = vsel %vm898, %v3794, 0.0
      %v3863 = vadd.f32 %v3861, %v3862
      %v3864 = vsel %vm898, %v3795, 0.0
      %v3865 = vadd.f32 %v3863, %v3864
      %v3866 = vsel %vm898, %v3796, 0.0
      %v3867 = vadd.f32 %v3865, %v3866
      %v3868 = vsel %vm898, %v3797, 0.0
      %v3869 = vadd.f32 %v3867, %v3868
      %v3870 = vsel %vm898, %v3798, 0.0
      %v3871 = vadd.f32 %v3869, %v3870
      %v3872 = vrot.slane %v3871, 4
      %v3873 = vadd.f32 %v3871, %v3872
      %v3874 = vrot.slane %v3873, 2
      %v3875 = vadd.f32 %v3873, %v3874
      %v3876 = vrot.slane %v3875, 1
      %v3877 = vadd.f32 %v3875, %v3876
      %v3878 = vmul.f32 %v3767, %v3767
      %v3879 = vmul.f32 %v3768, %v3768
      %v3880 = vmul.f32 %v3769, %v3769
      %v3881 = vmul.f32 %v3770, %v3770
      %v3882 = vmul.f32 %v3771, %v3771
      %v3883 = vmul.f32 %v3772, %v3772
      %v3884 = vmul.f32 %v3773, %v3773
      %v3885 = vmul.f32 %v3774, %v3774
      %v3886 = vmul.f32 %v3775, %v3775
      %v3887 = vmul.f32 %v3776, %v3776
      %v3888 = vmul.f32 %v3777, %v3777
      %v3889 = vmul.f32 %v3778, %v3778
      %v3890 = vmul.f32 %v3779, %v3779
      %v3891 = vmul.f32 %v3780, %v3780
      %v3892 = vmul.f32 %v3781, %v3781
      %v3893 = vmul.f32 %v3782, %v3782
      %v3894 = vmul.f32 %v3783, %v3783
      %v3895 = vmul.f32 %v3784, %v3784
      %v3896 = vmul.f32 %v3785, %v3785
      %v3897 = vmul.f32 %v3786, %v3786
      %v3898 = vmul.f32 %v3787, %v3787
      %v3899 = vmul.f32 %v3788, %v3788
      %v3900 = vmul.f32 %v3789, %v3789
      %v3901 = vmul.f32 %v3790, %v3790
      %v3902 = vmul.f32 %v3791, %v3791
      %v3903 = vmul.f32 %v3792, %v3792
      %v3904 = vmul.f32 %v3793, %v3793
      %v3905 = vmul.f32 %v3794, %v3794
      %v3906 = vmul.f32 %v3795, %v3795
      %v3907 = vmul.f32 %v3796, %v3796
      %v3908 = vmul.f32 %v3797, %v3797
      %v3909 = vmul.f32 %v3798, %v3798
      %v3910 = vsel %vm898, %v3878, 0.0
      %v3911 = vsel %vm898, %v3879, 0.0
      %v3912 = vadd.f32 %v3910, %v3911
      %v3913 = vsel %vm898, %v3880, 0.0
      %v3914 = vadd.f32 %v3912, %v3913
      %v3915 = vsel %vm898, %v3881, 0.0
      %v3916 = vadd.f32 %v3914, %v3915
      %v3917 = vsel %vm898, %v3882, 0.0
      %v3918 = vadd.f32 %v3916, %v3917
      %v3919 = vsel %vm898, %v3883, 0.0
      %v3920 = vadd.f32 %v3918, %v3919
      %v3921 = vsel %vm898, %v3884, 0.0
      %v3922 = vadd.f32 %v3920, %v3921
      %v3923 = vsel %vm898, %v3885, 0.0
      %v3924 = vadd.f32 %v3922, %v3923
      %v3925 = vsel %vm898, %v3886, 0.0
      %v3926 = vadd.f32 %v3924, %v3925
      %v3927 = vsel %vm898, %v3887, 0.0
      %v3928 = vadd.f32 %v3926, %v3927
      %v3929 = vsel %vm898, %v3888, 0.0
      %v3930 = vadd.f32 %v3928, %v3929
      %v3931 = vsel %vm898, %v3889, 0.0
      %v3932 = vadd.f32 %v3930, %v3931
      %v3933 = vsel %vm898, %v3890, 0.0
      %v3934 = vadd.f32 %v3932, %v3933
      %v3935 = vsel %vm898, %v3891, 0.0
      %v3936 = vadd.f32 %v3934, %v3935
      %v3937 = vsel %vm898, %v3892, 0.0
      %v3938 = vadd.f32 %v3936, %v3937
      %v3939 = vsel %vm898, %v3893, 0.0
      %v3940 = vadd.f32 %v3938, %v3939
      %v3941 = vsel %vm898, %v3894, 0.0
      %v3942 = vadd.f32 %v3940, %v3941
      %v3943 = vsel %vm898, %v3895, 0.0
      %v3944 = vadd.f32 %v3942, %v3943
      %v3945 = vsel %vm898, %v3896, 0.0
      %v3946 = vadd.f32 %v3944, %v3945
      %v3947 = vsel %vm898, %v3897, 0.0
      %v3948 = vadd.f32 %v3946, %v3947
      %v3949 = vsel %vm898, %v3898, 0.0
      %v3950 = vadd.f32 %v3948, %v3949
      %v3951 = vsel %vm898, %v3899, 0.0
      %v3952 = vadd.f32 %v3950, %v3951
      %v3953 = vsel %vm898, %v3900, 0.0
      %v3954 = vadd.f32 %v3952, %v3953
      %v3955 = vsel %vm898, %v3901, 0.0
      %v3956 = vadd.f32 %v3954, %v3955
      %v3957 = vsel %vm898, %v3902, 0.0
      %v3958 = vadd.f32 %v3956, %v3957
      %v3959 = vsel %vm898, %v3903, 0.0
      %v3960 = vadd.f32 %v3958, %v3959
      %v3961 = vsel %vm898, %v3904, 0.0
      %v3962 = vadd.f32 %v3960, %v3961
      %v3963 = vsel %vm898, %v3905, 0.0
      %v3964 = vadd.f32 %v3962, %v3963
      %v3965 = vsel %vm898, %v3906, 0.0
      %v3966 = vadd.f32 %v3964, %v3965
      %v3967 = vsel %vm898, %v3907, 0.0
      %v3968 = vadd.f32 %v3966, %v3967
      %v3969 = vsel %vm898, %v3908, 0.0
      %v3970 = vadd.f32 %v3968, %v3969
      %v3971 = vsel %vm898, %v3909, 0.0
      %v3972 = vadd.f32 %v3970, %v3971
      %v3973 = vrot.slane %v3972, 4
      %v3974 = vadd.f32 %v3972, %v3973
      %v3975 = vrot.slane %v3974, 2
      %v3976 = vadd.f32 %v3974, %v3975
      %v3977 = vrot.slane %v3976, 1
      %v3978 = vadd.f32 %v3976, %v3977
      %v3979 = vsel %vm814, %v3877, %v3978
      %v3981 = vsel %vm898, %v3979, 0
      %3983 = vmatprep.subr.mxu0 0.0
      %3984 = vmatpush1.msra.mxu0 %v3799
      %3985 = vmatprep.subr.mxu0 0.0
      %3986 = vmatpush1.msra.mxu0 %v3800
      %3987 = vmatprep.subr.mxu0 0.0
      %3988 = vmatpush1.msra.mxu0 %v3801
      %3989 = vmatprep.subr.mxu0 0.0
      %3990 = vmatpush1.msra.mxu0 %v3802
      %3991 = vmatprep.subr.mxu0 0.0
      %3992 = vmatpush1.msra.mxu0 0.0
      %3993 = vmatprep.subr.mxu0 0.0
      %3994 = vmatpush1.msra.mxu0 0.0
      %3995 = vmatprep.subr.mxu0 0.0
      %3996 = vmatpush1.msra.mxu0 0.0
      %3997 = vmatprep.subr.mxu0 0.0
      %3998 = vmatpush1.msra.mxu0 0.0
      %3999 = vmatprep.subr.mxu0 0.0
      %4000 = vmatpush1.msra.mxu0 0.0
      %4001 = vmatprep.subr.mxu0 0.0
      %4002 = vmatpush1.msra.mxu0 0.0
      %4003 = vmatprep.subr.mxu0 0.0
      %4004 = vmatpush1.msra.mxu0 0.0
      %4005 = vmatprep.subr.mxu0 0.0
      %4006 = vmatpush1.msra.mxu0 0.0
      %4007 = vmatprep.subr.mxu0 0.0
      %4008 = vmatpush1.msra.mxu0 0.0
      %4009 = vmatprep.subr.mxu0 0.0
      %4010 = vmatpush1.msra.mxu0 0.0
      %4011 = vmatprep.subr.mxu0 0.0
      %4012 = vmatpush1.msra.mxu0 0.0
      %4013 = vmatprep.subr.mxu0 0.0
      %4014 = vmatpush1.msra.mxu0 0.0
      %4015 = vmatprep.subr.mxu0 0.0
      %4016 = vmatpush1.msra.mxu0 0.0
      %4017 = vmatprep.subr.mxu0 0.0
      %4018 = vmatpush1.msra.mxu0 0.0
      %4019 = vmatprep.subr.mxu0 0.0
      %4020 = vmatpush1.msra.mxu0 0.0
      %4021 = vmatprep.subr.mxu0 0.0
      %4022 = vmatpush1.msra.mxu0 0.0
      %4023 = vmatprep.subr.mxu0 0.0
      %4024 = vmatpush1.msra.mxu0 0.0
      %4025 = vmatprep.subr.mxu0 0.0
      %4026 = vmatpush1.msra.mxu0 0.0
      %4027 = vmatprep.subr.mxu0 0.0
      %4028 = vmatpush1.msra.mxu0 0.0
      %4029 = vmatprep.subr.mxu0 0.0
      %4030 = vmatpush1.msra.mxu0 0.0
      %4031 = vmatprep.subr.mxu0 0.0
      %4032 = vmatpush1.msra.mxu0 0.0
      %4033 = vmatprep.subr.mxu0 0.0
      %4034 = vmatpush1.msra.mxu0 0.0
      %4035 = vmatprep.subr.mxu0 0.0
      %4036 = vmatpush1.msra.mxu0 0.0
      %4037 = vmatprep.subr.mxu0 0.0
      %4038 = vmatpush1.msra.mxu0 0.0
      %4039 = vmatprep.subr.mxu0 0.0
      %4040 = vmatpush1.msra.mxu0 0.0
      %4041 = vmatprep.subr.mxu0 0.0
      %4042 = vmatpush1.msra.mxu0 0.0
      %4043 = vmatprep.subr.mxu0 0.0
      %4044 = vmatpush1.msra.mxu0 0.0
      %4045 = vmatprep.subr.mxu0 0.0
      %4046 = vmatpush1.msra.mxu0 0.0
      %4047 = vmatprep.mubr.f32.mxu0 0.0
      %4048 = vmatmul.mubr.f32.gmra.mrb[0].mxu0 %v3981
      %v4049 = vpop.f32.mrb[0].mxu0
      %v4050 = vadd.f32 0.0, %v4049
      %v4051 = vpop.f32.mrb[0].mxu0
      %4052 = vdwg.mxu0
      %v4053 = vmul.f32 %v4050, 0.00390625
      %v4054 = vmul.f32 %v4053, %v4053
      %v4056 = vrot.slane %v4054, 7
      %v4058 = vsub.f32 %v4053, %v4056
      %v4059 = vadd.f32 %v4058, 1e-05
      %v4060 = vrsqrt.pop %v4059
      %v4061 = vsel %vm814, %v4053, %v4060
      %v4063 = vsel %vm898, %v4061, 0
      %4065 = vmatprep.subr.mxu0 0.0
      %4066 = vmatpush1.msra.mxu0 %v3803
      %4067 = vmatprep.subr.mxu0 0.0
      %4068 = vmatpush1.msra.mxu0 %v3804
      %4069 = vmatprep.subr.mxu0 0.0
      %4070 = vmatpush1.msra.mxu0 %v3805
      %4071 = vmatprep.subr.mxu0 0.0
      %4072 = vmatpush1.msra.mxu0 %v3806
      %4073 = vmatprep.subr.mxu0 0.0
      %4074 = vmatpush1.msra.mxu0 0.0
      %4075 = vmatprep.subr.mxu0 0.0
      %4076 = vmatpush1.msra.mxu0 0.0
      %4077 = vmatprep.subr.mxu0 0.0
      %4078 = vmatpush1.msra.mxu0 0.0
      %4079 = vmatprep.subr.mxu0 0.0
      %4080 = vmatpush1.msra.mxu0 0.0
      %4081 = vmatprep.subr.mxu0 0.0
      %4082 = vmatpush1.msra.mxu0 0.0
      %4083 = vmatprep.subr.mxu0 0.0
      %4084 = vmatpush1.msra.mxu0 0.0
      %4085 = vmatprep.subr.mxu0 0.0
      %4086 = vmatpush1.msra.mxu0 0.0
      %4087 = vmatprep.subr.mxu0 0.0
      %4088 = vmatpush1.msra.mxu0 0.0
      %4089 = vmatprep.subr.mxu0 0.0
      %4090 = vmatpush1.msra.mxu0 0.0
      %4091 = vmatprep.subr.mxu0 0.0
      %4092 = vmatpush1.msra.mxu0 0.0
      %4093 = vmatprep.subr.mxu0 0.0
      %4094 = vmatpush1.msra.mxu0 0.0
      %4095 = vmatprep.subr.mxu0 0.0
      %4096 = vmatpush1.msra.mxu0 0.0
      %4097 = vmatprep.subr.mxu0 0.0
      %4098 = vmatpush1.msra.mxu0 0.0
      %4099 = vmatprep.subr.mxu0 0.0
      %4100 = vmatpush1.msra.mxu0 0.0
      %4101 = vmatprep.subr.mxu0 0.0
      %4102 = vmatpush1.msra.mxu0 0.0
      %4103 = vmatprep.subr.mxu0 0.0
      %4104 = vmatpush1.msra.mxu0 0.0
      %4105 = vmatprep.subr.mxu0 0.0
      %4106 = vmatpush1.msra.mxu0 0.0
      %4107 = vmatprep.subr.mxu0 0.0
      %4108 = vmatpush1.msra.mxu0 0.0
      %4109 = vmatprep.subr.mxu0 0.0
      %4110 = vmatpush1.msra.mxu0 0.0
      %4111 = vmatprep.subr.mxu0 0.0
      %4112 = vmatpush1.msra.mxu0 0.0
      %4113 = vmatprep.subr.mxu0 0.0
      %4114 = vmatpush1.msra.mxu0 0.0
      %4115 = vmatprep.subr.mxu0 0.0
      %4116 = vmatpush1.msra.mxu0 0.0
      %4117 = vmatprep.subr.mxu0 0.0
      %4118 = vmatpush1.msra.mxu0 0.0
      %4119 = vmatprep.subr.mxu0 0.0
      %4120 = vmatpush1.msra.mxu0 0.0
      %4121 = vmatprep.subr.mxu0 0.0
      %4122 = vmatpush1.msra.mxu0 0.0
      %4123 = vmatprep.subr.mxu0 0.0
      %4124 = vmatpush1.msra.mxu0 0.0
      %4125 = vmatprep.subr.mxu0 0.0
      %4126 = vmatpush1.msra.mxu0 0.0
      %4127 = vmatprep.subr.mxu0 0.0
      %4128 = vmatpush1.msra.mxu0 0.0
      %4129 = vmatprep.mubr.f32.mxu0 0.0
      %4130 = vmatmul.mubr.f32.gmra.mrb[0].mxu0 %v4063
      %v4131 = vpop.f32.mrb[0].mxu0
      %v4132 = vadd.f32 0.0, %v4131
      %v4133 = vpop.f32.mrb[0].mxu0
      %4134 = vdwg.mxu0
      %v4136 = vlaneseq
      %v4137 = vshrl.u32 %v4136, 7
      %v4138 = vsub.s32 0, %v4137
      %v4139 = vrot.slane %v3807, %v4138
      %v4141 = vmul.f32 %v4132, %v4139
      %v4143 = vrot.slane %v4141, 1
      %v4145 = vmul.f32 %v4132, %v4143
      %v4146 = vsub.f32 %v3808, %v4145
      %v4147 = vlaneseq
      %v4148 = vshrl.u32 %v4147, 7
      %v4149 = vsub.s32 1, %v4148
      %v4150 = vrot.slane %v4141, %v4149
      %v4151 = vmul.f32 %v3767, %v4150
      %v4152 = vmul.f32 %v3768, %v4150
      %v4153 = vmul.f32 %v3769, %v4150
      %v4154 = vmul.f32 %v3770, %v4150
      %v4155 = vmul.f32 %v3771, %v4150
      %v4156 = vmul.f32 %v3772, %v4150
      %v4157 = vmul.f32 %v3773, %v4150
      %v4158 = vmul.f32 %v3774, %v4150
      %v4159 = vmul.f32 %v3775, %v4150
      %v4160 = vmul.f32 %v3776, %v4150
      %v4161 = vmul.f32 %v3777, %v4150
      %v4162 = vmul.f32 %v3778, %v4150
      %v4163 = vmul.f32 %v3779, %v4150
      %v4164 = vmul.f32 %v3780, %v4150
      %v4165 = vmul.f32 %v3781, %v4150
      %v4166 = vmul.f32 %v3782, %v4150
      %v4167 = vmul.f32 %v3783, %v4150
      %v4168 = vmul.f32 %v3784, %v4150
      %v4169 = vmul.f32 %v3785, %v4150
      %v4170 = vmul.f32 %v3786, %v4150
      %v4171 = vmul.f32 %v3787, %v4150
      %v4172 = vmul.f32 %v3788, %v4150
      %v4173 = vmul.f32 %v3789, %v4150
      %v4174 = vmul.f32 %v3790, %v4150
      %v4175 = vmul.f32 %v3791, %v4150
      %v4176 = vmul.f32 %v3792, %v4150
      %v4177 = vmul.f32 %v3793, %v4150
      %v4178 = vmul.f32 %v3794, %v4150
      %v4179 = vmul.f32 %v3795, %v4150
      %v4180 = vmul.f32 %v3796, %v4150
      %v4181 = vmul.f32 %v3797, %v4150
      %v4182 = vmul.f32 %v3798, %v4150
      %v4184 = vlaneseq
      %v4185 = vshrl.u32 %v4184, 7
      %v4186 = vsub.s32 0, %v4185
      %v4187 = vrot.slane %v4146, %v4186
      %v4189 = vadd.f32 %v4151, %v4187
      %v4190 = vadd.f32 %v4152, %v4187
      %v4191 = vadd.f32 %v4153, %v4187
      %v4192 = vadd.f32 %v4154, %v4187
      %v4193 = vadd.f32 %v4155, %v4187
      %v4194 = vadd.f32 %v4156, %v4187
      %v4195 = vadd.f32 %v4157, %v4187
      %v4196 = vadd.f32 %v4158, %v4187
      %v4197 = vadd.f32 %v4159, %v4187
      %v4198 = vadd.f32 %v4160, %v4187
      %v4199 = vadd.f32 %v4161, %v4187
      %v4200 = vadd.f32 %v4162, %v4187
      %v4201 = vadd.f32 %v4163, %v4187
      %v4202 = vadd.f32 %v4164, %v4187
      %v4203 = vadd.f32 %v4165, %v4187
      %v4204 = vadd.f32 %v4166, %v4187
      %v4205 = vadd.f32 %v4167, %v4187
      %v4206 = vadd.f32 %v4168, %v4187
      %v4207 = vadd.f32 %v4169, %v4187
      %v4208 = vadd.f32 %v4170, %v4187
      %v4209 = vadd.f32 %v4171, %v4187
      %v4210 = vadd.f32 %v4172, %v4187
      %v4211 = vadd.f32 %v4173, %v4187
      %v4212 = vadd.f32 %v4174, %v4187
      %v4213 = vadd.f32 %v4175, %v4187
      %v4214 = vadd.f32 %v4176, %v4187
      %v4215 = vadd.f32 %v4177, %v4187
      %v4216 = vadd.f32 %v4178, %v4187
      %v4217 = vadd.f32 %v4179, %v4187
      %v4218 = vadd.f32 %v4180, %v4187
      %v4219 = vadd.f32 %v4181, %v4187
      %v4220 = vadd.f32 %v4182, %v4187
      %v4221 = vmax.f32 %v4189, 0.0
      %v4222 = vmax.f32 %v4190, 0.0
      %v4223 = vmax.f32 %v4191, 0.0
      %v4224 = vmax.f32 %v4192, 0.0
      %v4225 = vmax.f32 %v4193, 0.0
      %v4226 = vmax.f32 %v4194, 0.0
      %v4227 = vmax.f32 %v4195, 0.0
      %v4228 = vmax.f32 %v4196, 0.0
      %v4229 = vmax.f32 %v4197, 0.0
      %v4230 = vmax.f32 %v4198, 0.0
      %v4231 = vmax.f32 %v4199, 0.0
      %v4232 = vmax.f32 %v4200, 0.0
      %v4233 = vmax.f32 %v4201, 0.0
      %v4234 = vmax.f32 %v4202, 0.0
      %v4235 = vmax.f32 %v4203, 0.0
      %v4236 = vmax.f32 %v4204, 0.0
      %v4237 = vmax.f32 %v4205, 0.0
      %v4238 = vmax.f32 %v4206, 0.0
      %v4239 = vmax.f32 %v4207, 0.0
      %v4240 = vmax.f32 %v4208, 0.0
      %v4241 = vmax.f32 %v4209, 0.0
      %v4242 = vmax.f32 %v4210, 0.0
      %v4243 = vmax.f32 %v4211, 0.0
      %v4244 = vmax.f32 %v4212, 0.0
      %v4245 = vmax.f32 %v4213, 0.0
      %v4246 = vmax.f32 %v4214, 0.0
      %v4247 = vmax.f32 %v4215, 0.0
      %v4248 = vmax.f32 %v4216, 0.0
      %v4249 = vmax.f32 %v4217, 0.0
      %v4250 = vmax.f32 %v4218, 0.0
      %v4251 = vmax.f32 %v4219, 0.0
      %v4252 = vmax.f32 %v4220, 0.0
      %4253 = vxpose.xlu0.b32.start [1/16] %v4221, 128
      %4254 = vxpose.xlu0.b32.cont [2/16] %v4222, 128
      %4255 = vxpose.xlu0.b32.cont [3/16] %v4223, 128
      %4256 = vxpose.xlu0.b32.cont [4/16] %v4224, 128
      %4257 = vxpose.xlu0.b32.cont [5/16] %v4225, 128
      %4258 = vxpose.xlu0.b32.cont [6/16] %v4226, 128
      %4259 = vxpose.xlu0.b32.cont [7/16] %v4227, 128
      %4260 = vxpose.xlu0.b32.cont [8/16] %v4228, 128
      %4261 = vxpose.xlu0.b32.cont [9/16] %v4229, 128
      %4262 = vxpose.xlu0.b32.cont [10/16] %v4230, 128
      %4263 = vxpose.xlu0.b32.cont [11/16] %v4231, 128
      %4264 = vxpose.xlu0.b32.cont [12/16] %v4232, 128
      %4265 = vxpose.xlu0.b32.cont [13/16] %v4233, 128
      %4266 = vxpose.xlu0.b32.cont [14/16] %v4234, 128
      %4267 = vxpose.xlu0.b32.cont [15/16] %v4235, 128
      %4268 = vxpose.xlu0.b32.end [16/16] %v4236, 128
      %v4269 = vpop.trf.xlu0
      %v4270 = vpop.trf.xlu0
      %v4271 = vpop.trf.xlu0
      %v4272 = vpop.trf.xlu0
      %v4273 = vpop.trf.xlu0
      %v4274 = vpop.trf.xlu0
      %v4275 = vpop.trf.xlu0
      %v4276 = vpop.trf.xlu0
      %v4277 = vpop.trf.xlu0
      %v4278 = vpop.trf.xlu0
      %v4279 = vpop.trf.xlu0
      %v4280 = vpop.trf.xlu0
      %v4281 = vpop.trf.xlu0
      %v4282 = vpop.trf.xlu0
      %v4283 = vpop.trf.xlu0
      %v4284 = vpop.trf.xlu0
      %4285 = vxpose.xlu0.b32.start [1/16] %v4237, 128
      %4286 = vxpose.xlu0.b32.cont [2/16] %v4238, 128
      %4287 = vxpose.xlu0.b32.cont [3/16] %v4239, 128
      %4288 = vxpose.xlu0.b32.cont [4/16] %v4240, 128
      %4289 = vxpose.xlu0.b32.cont [5/16] %v4241, 128
      %4290 = vxpose.xlu0.b32.cont [6/16] %v4242, 128
      %4291 = vxpose.xlu0.b32.cont [7/16] %v4243, 128
      %4292 = vxpose.xlu0.b32.cont [8/16] %v4244, 128
      %4293 = vxpose.xlu0.b32.cont [9/16] %v4245, 128
      %4294 = vxpose.xlu0.b32.cont [10/16] %v4246, 128
      %4295 = vxpose.xlu0.b32.cont [11/16] %v4247, 128
      %4296 = vxpose.xlu0.b32.cont [12/16] %v4248, 128
      %4297 = vxpose.xlu0.b32.cont [13/16] %v4249, 128
      %4298 = vxpose.xlu0.b32.cont [14/16] %v4250, 128
      %4299 = vxpose.xlu0.b32.cont [15/16] %v4251, 128
      %4300 = vxpose.xlu0.b32.end [16/16] %v4252, 128
      %v4301 = vpop.trf.xlu0
      %v4302 = vpop.trf.xlu0
      %v4303 = vpop.trf.xlu0
      %v4304 = vpop.trf.xlu0
      %v4305 = vpop.trf.xlu0
      %v4306 = vpop.trf.xlu0
      %v4307 = vpop.trf.xlu0
      %v4308 = vpop.trf.xlu0
      %v4309 = vpop.trf.xlu0
      %v4310 = vpop.trf.xlu0
      %v4311 = vpop.trf.xlu0
      %v4312 = vpop.trf.xlu0
      %v4313 = vpop.trf.xlu0
      %v4314 = vpop.trf.xlu0
      %v4315 = vpop.trf.xlu0
      %v4316 = vpop.trf.xlu0
      %v4317 = vpack.c.bf16 %v4270, %v4269
      %v4318 = vpack.c.bf16 %v4302, %v4301
      %v4319 = vpack.c.bf16 %v4272, %v4271
      %v4320 = vpack.c.bf16 %v4304, %v4303
      %v4321 = vld [vmem:[%s12] sm:$0xf]
      %v4322 = vld [vmem:[%s12 + $0x4] sm:$0xf]
      %v4323 = vld [vmem:[%s12 + $0x8] sm:$0xf]
      %v4324 = vld [vmem:[%s12 + $0xc] sm:$0xf]
      %v4325 = vld [vmem:[%s12 + $0x10] sm:$0xf]
      %v4326 = vld [vmem:[%s12 + $0x14] sm:$0xf]
      %v4327 = vld [vmem:[%s12 + $0x18] sm:$0xf]
      %v4328 = vld [vmem:[%s12 + $0x1c] sm:$0xf]
      %v4329 = vld [vmem:[%s13] sm:$0xff]
      %v4330 = vld [vmem:[%s13 + $0x8] sm:$0xff]
      %v4331 = vld [vmem:[%s13 + $0x10] sm:$0xff]
      %v4332 = vld [vmem:[%s13 + $0x18] sm:$0xff]
      %v4333 = vld [vmem:[%s13 + $0x20] sm:$0xff]
      %v4334 = vld [vmem:[%s13 + $0x28] sm:$0xff]
      %v4335 = vld [vmem:[%s13 + $0x30] sm:$0xff]
      %v4336 = vld [vmem:[%s13 + $0x38] sm:$0xff]
      %4338 = vset.pattern.permute.xlu0 0
      %4339 = vperm.xlu0 %4338, %v4329
      %v4340 = vpop.permute.xlu0 %4339
      %4343 = vset.pattern.permute.xlu0 0
      %4344 = vperm.xlu0 %4343, %v4330
      %v4345 = vpop.permute.xlu0 %4344
      %4348 = vset.pattern.permute.xlu0 0
      %4349 = vperm.xlu0 %4348, %v4331
      %v4350 = vpop.permute.xlu0 %4349
      %4353 = vset.pattern.permute.xlu0 0
      %4354 = vperm.xlu0 %4353, %v4332
      %v4355 = vpop.permute.xlu0 %4354
      %4358 = vset.pattern.permute.xlu0 0
      %4359 = vperm.xlu0 %4358, %v4333
      %v4360 = vpop.permute.xlu0 %4359
      %4363 = vset.pattern.permute.xlu0 0
      %4364 = vperm.xlu0 %4363, %v4334
      %v4365 = vpop.permute.xlu0 %4364
      %4368 = vset.pattern.permute.xlu0 0
      %4369 = vperm.xlu0 %4368, %v4335
      %v4370 = vpop.permute.xlu0 %4369
      %4373 = vset.pattern.permute.xlu0 0
      %4374 = vperm.xlu0 %4373, %v4336
      %v4375 = vpop.permute.xlu0 %4374
      %v4385 = vunpack.c.l.b16 %v4321
      %v4386 = vunpack.c.l.b16 %v4322
      %v4387 = vunpack.c.l.b16 %v4323
      %v4388 = vunpack.c.l.b16 %v4324
      %v4389 = vunpack.c.l.b16 %v4325
      %v4390 = vunpack.c.l.b16 %v4326
      %v4391 = vunpack.c.l.b16 %v4327
      %v4392 = vunpack.c.l.b16 %v4328
      %v4393 = vpack.c.b16 %v4386, %v4385
      %v4394 = vpack.c.b16 %v4388, %v4387
      %v4395 = vpack.c.b16 %v4390, %v4389
      %v4396 = vpack.c.b16 %v4392, %v4391
      %v4398 = vsel %vm898, %v4393, 0
      %v4401 = vsel %vm898, %v4394, 0
      %v4404 = vsel %vm898, %v4395, 0
      %v4407 = vsel %vm898, %v4396, 0
      %4409 = vmatprep.subr.bf16.mxu0 %v4318
      %4410 = vmatpush1.bf16.msra.mxu0 %v4317
      %4411 = vmatprep.subr.bf16.mxu0 %v4320
      %4412 = vmatpush1.bf16.msra.mxu0 %v4319
      %4413 = vmatprep.subr.bf16.mxu0 0
      %4414 = vmatpush1.bf16.msra.mxu0 0
      %4415 = vmatprep.subr.bf16.mxu0 0
      %4416 = vmatpush1.bf16.msra.mxu0 0
      %4417 = vmatprep.subr.bf16.mxu0 0
      %4418 = vmatpush1.bf16.msra.mxu0 0
      %4419 = vmatprep.subr.bf16.mxu0 0
      %4420 = vmatpush1.bf16.msra.mxu0 0
      %4421 = vmatprep.subr.bf16.mxu0 0
      %4422 = vmatpush1.bf16.msra.mxu0 0
      %4423 = vmatprep.subr.bf16.mxu0 0
      %4424 = vmatpush1.bf16.msra.mxu0 0
      %4425 = vmatprep.subr.bf16.mxu0 0
      %4426 = vmatpush1.bf16.msra.mxu0 0
      %4427 = vmatprep.subr.bf16.mxu0 0
      %4428 = vmatpush1.bf16.msra.mxu0 0
      %4429 = vmatprep.subr.bf16.mxu0 0
      %4430 = vmatpush1.bf16.msra.mxu0 0
      %4431 = vmatprep.subr.bf16.mxu0 0
      %4432 = vmatpush1.bf16.msra.mxu0 0
      %4433 = vmatprep.subr.bf16.mxu0 0
      %4434 = vmatpush1.bf16.msra.mxu0 0
      %4435 = vmatprep.subr.bf16.mxu0 0
      %4436 = vmatpush1.bf16.msra.mxu0 0
      %4437 = vmatprep.subr.bf16.mxu0 0
      %4438 = vmatpush1.bf16.msra.mxu0 0
      %4439 = vmatprep.subr.bf16.mxu0 0
      %4440 = vmatpush1.bf16.msra.mxu0 0
      %4441 = vmatprep.mubr.bf16.mxu0 0
      %4442 = vmatmul.mubr.bf16.gmra.mrb[0].mxu0 %v4398
      %v4443 = vpop.f32.mrb[0].mxu0
      %v4444 = vadd.f32 %v4340, %v4443
      %v4445 = vpop.f32.mrb[0].mxu0
      %v4446 = vadd.f32 %v4340, %v4445
      %v4447 = vpop.f32.mrb[0].mxu0
      %v4448 = vadd.f32 %v4345, %v4447
      %v4449 = vpop.f32.mrb[0].mxu0
      %v4450 = vadd.f32 %v4345, %v4449
      %4451 = vmatprep.mubr.bf16.mxu0 0
      %4452 = vmatmul.mubr.bf16.gmra.mrb[0].mxu0 %v4401
      %v4453 = vpop.f32.mrb[0].mxu0
      %v4454 = vadd.f32 %v4350, %v4453
      %v4455 = vpop.f32.mrb[0].mxu0
      %v4456 = vadd.f32 %v4350, %v4455
      %v4457 = vpop.f32.mrb[0].mxu0
      %v4458 = vadd.f32 %v4355, %v4457
      %v4459 = vpop.f32.mrb[0].mxu0
      %v4460 = vadd.f32 %v4355, %v4459
      %4461 = vmatprep.mubr.bf16.mxu0 0
      %4462 = vmatmul.mubr.bf16.gmra.mrb[0].mxu0 %v4404
      %v4463 = vpop.f32.mrb[0].mxu0
      %v4464 = vadd.f32 %v4360, %v4463
      %v4465 = vpop.f32.mrb[0].mxu0
      %v4466 = vadd.f32 %v4360, %v4465
      %v4467 = vpop.f32.mrb[0].mxu0
      %v4468 = vadd.f32 %v4365, %v4467
      %v4469 = vpop.f32.mrb[0].mxu0
      %v4470 = vadd.f32 %v4365, %v4469
      %4471 = vmatprep.mubr.bf16.mxu0 0
      %4472 = vmatmul.mubr.bf16.gmra.mrb[0].mxu0 %v4407
      %v4473 = vpop.f32.mrb[0].mxu0
      %v4474 = vadd.f32 %v4370, %v4473
      %v4475 = vpop.f32.mrb[0].mxu0
      %v4476 = vadd.f32 %v4370, %v4475
      %v4477 = vpop.f32.mrb[0].mxu0
      %v4478 = vadd.f32 %v4375, %v4477
      %v4479 = vpop.f32.mrb[0].mxu0
      %v4480 = vadd.f32 %v4375, %v4479
      %4481 = vdwg.mxu0
      %v4482 = vld [vmem:[%s590] sm:$0xff]
      %v4483 = vld [vmem:[%s590 + $0x8] sm:$0xff]
      %v4484 = vld [vmem:[%s590 + $0x10] sm:$0xff]
      %v4485 = vld [vmem:[%s590 + $0x18] sm:$0xff]
      %v4486 = vld [vmem:[%s590 + $0x20] sm:$0xff]
      %v4487 = vld [vmem:[%s590 + $0x28] sm:$0xff]
      %v4488 = vld [vmem:[%s590 + $0x30] sm:$0xff]
      %v4489 = vld [vmem:[%s590 + $0x38] sm:$0xff]
      %v4490 = vld [vmem:[%s590 + $0x40] sm:$0xff]
      %v4491 = vld [vmem:[%s590 + $0x48] sm:$0xff]
      %v4492 = vld [vmem:[%s590 + $0x50] sm:$0xff]
      %v4493 = vld [vmem:[%s590 + $0x58] sm:$0xff]
      %v4494 = vld [vmem:[%s590 + $0x60] sm:$0xff]
      %v4495 = vld [vmem:[%s590 + $0x68] sm:$0xff]
      %v4496 = vld [vmem:[%s590 + $0x70] sm:$0xff]
      %v4497 = vld [vmem:[%s590 + $0x78] sm:$0xff]
      %v4498 = vadd.f32 %v4444, %v4482
      %v4499 = vadd.f32 %v4446, %v4483
      %v4500 = vadd.f32 %v4448, %v4484
      %v4501 = vadd.f32 %v4450, %v4485
      %v4502 = vadd.f32 %v4454, %v4486
      %v4503 = vadd.f32 %v4456, %v4487
      %v4504 = vadd.f32 %v4458, %v4488
      %v4505 = vadd.f32 %v4460, %v4489
      %v4506 = vadd.f32 %v4464, %v4490
      %v4507 = vadd.f32 %v4466, %v4491
      %v4508 = vadd.f32 %v4468, %v4492
      %v4509 = vadd.f32 %v4470, %v4493
      %v4510 = vadd.f32 %v4474, %v4494
      %v4511 = vadd.f32 %v4476, %v4495
      %v4512 = vadd.f32 %v4478, %v4496
      %v4513 = vadd.f32 %v4480, %v4497
      %4514 = vst [vmem:[%s595] sm:$0xff] %v4498
      %4515 = vst [vmem:[%s595 + $0x8] sm:$0xff] %v4499
      %4516 = vst [vmem:[%s595 + $0x10] sm:$0xff] %v4500
      %4517 = vst [vmem:[%s595 + $0x18] sm:$0xff] %v4501
      %4518 = vst [vmem:[%s595 + $0x20] sm:$0xff] %v4502
      %4519 = vst [vmem:[%s595 + $0x28] sm:$0xff] %v4503
      %4520 = vst [vmem:[%s595 + $0x30] sm:$0xff] %v4504
      %4521 = vst [vmem:[%s595 + $0x38] sm:$0xff] %v4505
      %4522 = vst [vmem:[%s595 + $0x40] sm:$0xff] %v4506
      %4523 = vst [vmem:[%s595 + $0x48] sm:$0xff] %v4507
      %4524 = vst [vmem:[%s595 + $0x50] sm:$0xff] %v4508
      %4525 = vst [vmem:[%s595 + $0x58] sm:$0xff] %v4509
      %4526 = vst [vmem:[%s595 + $0x60] sm:$0xff] %v4510
      %4527 = vst [vmem:[%s595 + $0x68] sm:$0xff] %v4511
      %4528 = vst [vmem:[%s595 + $0x70] sm:$0xff] %v4512
      %4529 = vst [vmem:[%s595 + $0x78] sm:$0xff] %v4513
      %p4530 = scmp.lt.s32.totalorder %s29, 1
      %s4531 = scalar_select %p4530, %s29, 1
      %s4532 = smul.addr %s4531, 16
      %s4533 = smul.addr %s4532, 8
      %s4534 = scalar_lea.vmem %s18, %s4533
      // Predicated region
      $region93: #{bottleneck_pallas.1} parent=91 // pred_check
        %p4535 = pneg %p435
      $region94: #{bottleneck_pallas.1} parent=91 // pred_check_branch
        %4537 = sbr.rel (%p4535) target = $region96
      $region95: #{bottleneck_pallas.1} parent=91 // pred_region
        _
      $region96: #{bottleneck_pallas.1} parent=91 // pred_fallthru
        _
    $region92: #{bottleneck_pallas.1} parent=5 // pred_fallthru
      _
    %p4538 = scmp.le.s32.totalorder 2, %s24
    // Predicated region
    $region97: #{bottleneck_pallas.1} parent=5 // pred_check
      %p4539 = pneg %p4538
    $region98: #{bottleneck_pallas.1} parent=5 // pred_check_branch
      %4541 = sbr.rel (%p4539) target = $region100
    $region99: #{bottleneck_pallas.1} parent=5 // pred_region
      %s4542 = ssub.s32 %s24, 2
      // Predicated region
      $region101: #{bottleneck_pallas.1} parent=99 // pred_check
        %p4543 = pneg %p441
      $region102: #{bottleneck_pallas.1} parent=99 // pred_check_branch
        %4545 = sbr.rel (%p4543) target = $region104
      $region103: #{bottleneck_pallas.1} parent=99 // pred_region
        %p4546 = scmp.lt.s32.totalorder %s30, 1
        %s4547 = scalar_select %p4546, %s30, 1
        %s4548 = smul.addr %s4547, 16
        %s4549 = smul.addr %s4548, 8
        %s4550 = scalar_lea.vmem %s18, %s4549
      $region104: #{bottleneck_pallas.1} parent=99 // pred_fallthru
        _
    $region100: #{bottleneck_pallas.1} parent=5 // pred_fallthru
      _
  $region6: #{bottleneck_pallas.1} parent=0 // loop_footer
    %s28 = sadd.s32 1, %s24
  $region7: #{bottleneck_pallas.1} parent=0 // loop_footer_branch
    %23 = sbr.rel target = $region3
  $region8: #{bottleneck_pallas.1} parent=0 // loop_exit
    _

</llo_original>
